<compile_context>
chip_gen: v7x
topology: tpu7x:2x2x1
jax: 0.10.0
libtpu: 0.0.40
codegen_flags: <defaults>
</compile_context>

<pallas_src>
import jax
import jax.numpy as jnp
from jax.experimental import pallas as pl
from jax.experimental.pallas import tpu as pltpu

INPUT_SIZE = 784
HIDDEN_SIZE = 256
OUTPUT_DIM = 10

IN_PAD = 896     # 7 * 128, lane-aligned K for the first (largest) matmul
OUT_PAD = 128    # lane-dense output stores (sliced back to 10 outside)
MAX_TM = 2048    # safe for v7x (64 MiB VMEM); also fine on v5e/v6e


def _round_up(x, m):
    return (x + m - 1) // m * m


def _sigmoid_f32(x):
    # exp on the EUP; reciprocal also on the EUP (approx) -> VALU slots stay
    # free for the bias adds.
    return pl.reciprocal(1.0 + jnp.exp(-x), approx=True)


def ffn_kernel(x_ref,
               w1_ref, b1_ref,
               w2_ref, b2_ref,
               w3_ref, b3_ref,
               w4_ref, b4_ref,
               o_ref):
    # x / weights are bf16 (MXU-native); accumulate in f32; elementwise in f32.
    h = jnp.dot(x_ref[...], w1_ref[...],
                preferred_element_type=jnp.float32) + b1_ref[...]
    h = _sigmoid_f32(h)

    h = jnp.dot(h.astype(jnp.bfloat16), w2_ref[...],
                preferred_element_type=jnp.float32) + b2_ref[...]
    h = _sigmoid_f32(h)

    h = jnp.dot(h.astype(jnp.bfloat16), w3_ref[...],
                preferred_element_type=jnp.float32) + b3_ref[...]
    h = _sigmoid_f32(h)

    out = jnp.dot(h.astype(jnp.bfloat16), w4_ref[...],
                  preferred_element_type=jnp.float32) + b4_ref[...]
    o_ref[...] = out.astype(o_ref.dtype)


def feed_forward_net(x, params):
    """x: [B, INPUT_SIZE] f32 -> [B, OUTPUT_DIM] f32."""
    (w1, b1), (w2, b2), (w3, b3), (w4, b4) = params
    B = x.shape[0]

    # Batch tile: multiple of 256 (MXU rows), capped for v7x VMEM.
    TM = min(MAX_TM, max(256, _round_up(B, 256)))
    B_pad = _round_up(B, TM)

    # --- pad / cast inputs and parameters (layout plumbing, outside kernel) ---
    x_p = jnp.zeros((B_pad, IN_PAD), jnp.float32)
    x_p = x_p.at[:B, :INPUT_SIZE].set(x).astype(jnp.bfloat16)

    w1_p = jnp.zeros((IN_PAD, HIDDEN_SIZE), jnp.float32)
    w1_p = w1_p.at[:INPUT_SIZE, :].set(w1).astype(jnp.bfloat16)

    w2_p = w2.astype(jnp.bfloat16)
    w3_p = w3.astype(jnp.bfloat16)

    w4_p = jnp.zeros((HIDDEN_SIZE, OUT_PAD), jnp.float32)
    w4_p = w4_p.at[:, :OUTPUT_DIM].set(w4).astype(jnp.bfloat16)

    b4_p = jnp.zeros((1, OUT_PAD), jnp.float32)
    b4_p = b4_p.at[:, :OUTPUT_DIM].set(b4)

    # Biases stay f32 (added after the f32 accumulation).
    b1_p, b2_p, b3_p = b1, b2, b3

    const = lambda i: (0, 0)   # weights / biases: resident, DMA'd once

    grid_spec = pltpu.PrefetchScalarGridSpec(
        num_scalar_prefetch=0,
        grid=(B_pad // TM,),
        in_specs=[
            pl.BlockSpec((TM, IN_PAD), lambda i: (i, 0)),        # x tile
            pl.BlockSpec((IN_PAD, HIDDEN_SIZE), const),          # w1
            pl.BlockSpec((1, HIDDEN_SIZE), const),               # b1
            pl.BlockSpec((HIDDEN_SIZE, HIDDEN_SIZE), const),     # w2
            pl.BlockSpec((1, HIDDEN_SIZE), const),               # b2
            pl.BlockSpec((HIDDEN_SIZE, HIDDEN_SIZE), const),     # w3
            pl.BlockSpec((1, HIDDEN_SIZE), const),               # b3
            pl.BlockSpec((HIDDEN_SIZE, OUT_PAD), const),         # w4
            pl.BlockSpec((1, OUT_PAD), const),                   # b4
        ],
        out_specs=pl.BlockSpec((TM, OUT_PAD), lambda i: (i, 0)),
    )

    out_padded = pl.pallas_call(
        ffn_kernel,
        out_shape=jax.ShapeDtypeStruct((B_pad, OUT_PAD), jnp.float32),
        grid_spec=grid_spec,
        compiler_params=pltpu.CompilerParams(
            dimension_semantics=("parallel",),       # v7x: shard over both TCs
            vmem_limit_bytes=64 * 1024 * 1024,       # within v7x physical VMEM
        ),
    )(x_p, w1_p, b1_p, w2_p, b2_p, w3_p, b3_p, w4_p, b4_p)

    return out_padded[:B, :OUTPUT_DIM]


def init_linear(key, fan_in, fan_out):
    """Deterministic init mimicking nn.Linear default (U[-1/sqrt(fan_in), ...]).

    Weight stored as [fan_in, fan_out] (transposed vs. PyTorch); bias as [1, out]."""
    kw, kb = jax.random.split(key)
    bound = 1.0 / jnp.sqrt(float(fan_in))
    w = jax.random.uniform(kw, (fan_in, fan_out), jnp.float32, -bound, bound)
    b = jax.random.uniform(kb, (1, fan_out), jnp.float32, -bound, bound)
    return w, b


def reference_forward(x, params):
    h = x
    for i, (w, b) in enumerate(params):
        h = h @ w + b
        if i < len(params) - 1:
            h = jax.nn.sigmoid(h)
    return h


if __name__ == "__main__":
    key = jax.random.PRNGKey(0)
    k_x, k1, k2, k3, k4 = jax.random.split(key, 5)

    batch = 8
    x = jax.random.normal(k_x, (batch, INPUT_SIZE), jnp.float32)

    params = [
        init_linear(k1, INPUT_SIZE, HIDDEN_SIZE),
        init_linear(k2, HIDDEN_SIZE, HIDDEN_SIZE),
        init_linear(k3, HIDDEN_SIZE, HIDDEN_SIZE),
        init_linear(k4, HIDDEN_SIZE, OUTPUT_DIM),
    ]

    out = feed_forward_net(x, params)
    out = jax.block_until_ready(out)

    ref = reference_forward(x, params)
    assert out.shape == (batch, OUTPUT_DIM)
    # bf16 MXU inputs + approx-EUP reciprocal -> loosened tolerance vs f32 ref.
    assert jnp.allclose(out, ref, atol=5e-2, rtol=5e-2), (
        float(jnp.max(jnp.abs(out - ref))))

    print("KERNEL_OK")
</pallas_src>

<mosaic_0001>
module attributes {stable_mosaic.version = 11 : i64} {
  func.func @ffn_kernel(%arg0: i32, %arg1: memref<256x896xbf16, #tpu.memory_space<vmem>>, %arg2: memref<896x256xbf16, #tpu.memory_space<vmem>>, %arg3: memref<1x256xf32, #tpu.memory_space<vmem>>, %arg4: memref<256x256xbf16, #tpu.memory_space<vmem>>, %arg5: memref<1x256xf32, #tpu.memory_space<vmem>>, %arg6: memref<256x256xbf16, #tpu.memory_space<vmem>>, %arg7: memref<1x256xf32, #tpu.memory_space<vmem>>, %arg8: memref<256x128xbf16, #tpu.memory_space<vmem>>, %arg9: memref<1x128xf32, #tpu.memory_space<vmem>>, %arg10: memref<256x128xf32, #tpu.memory_space<vmem>>) attributes {dimension_semantics = [#tpu.dimension_semantics<parallel>], iteration_bounds = array<i64: 1>, scalar_prefetch = 0 : i64, scratch_operands = 0 : i64, tpu.core_type = #tpu.core_type<tc>, window_params = [{transform_indices = @transform_0, window_bounds = array<i64: 256, 896>}, {pipeline_mode = #tpu.pipeline_mode<synchronous>, transform_indices = @transform_1, window_bounds = array<i64: 896, 256>}, {pipeline_mode = #tpu.pipeline_mode<synchronous>, transform_indices = @transform_2, window_bounds = array<i64: 1, 256>}, {pipeline_mode = #tpu.pipeline_mode<synchronous>, transform_indices = @transform_3, window_bounds = array<i64: 256, 256>}, {pipeline_mode = #tpu.pipeline_mode<synchronous>, transform_indices = @transform_4, window_bounds = array<i64: 1, 256>}, {pipeline_mode = #tpu.pipeline_mode<synchronous>, transform_indices = @transform_5, window_bounds = array<i64: 256, 256>}, {pipeline_mode = #tpu.pipeline_mode<synchronous>, transform_indices = @transform_6, window_bounds = array<i64: 1, 256>}, {pipeline_mode = #tpu.pipeline_mode<synchronous>, transform_indices = @transform_7, window_bounds = array<i64: 256, 128>}, {pipeline_mode = #tpu.pipeline_mode<synchronous>, transform_indices = @transform_8, window_bounds = array<i64: 1, 128>}, {transform_indices = @transform_9, window_bounds = array<i64: 256, 128>}]} {
    %c0 = arith.constant 0 : index
    %c0_0 = arith.constant 0 : index
    %0 = vector.load %arg1[%c0, %c0_0] : memref<256x896xbf16, #tpu.memory_space<vmem>>, vector<256x896xbf16>
    %c0_1 = arith.constant 0 : index
    %c0_2 = arith.constant 0 : index
    %1 = vector.load %arg2[%c0_1, %c0_2] : memref<896x256xbf16, #tpu.memory_space<vmem>>, vector<896x256xbf16>
    %cst = arith.constant dense<0.000000e+00> : vector<256x256xf32>
    %2 = tpu.matmul %0, %1, %cst {dimension_numbers = #tpu.dot_dimension_numbers<[1], [0], [0], [1], [0, 0, 1, 1], [], []>} : vector<256x896xbf16>, vector<896x256xbf16>, vector<256x256xf32> -> vector<256x256xf32>
    %c0_3 = arith.constant 0 : index
    %c0_4 = arith.constant 0 : index
    %3 = vector.load %arg3[%c0_3, %c0_4] : memref<1x256xf32, #tpu.memory_space<vmem>>, vector<1x256xf32>
    %4 = vector.broadcast %3 : vector<1x256xf32> to vector<256x256xf32>
    %5 = arith.addf %2, %4 : vector<256x256xf32>
    %cst_5 = arith.constant 0.000000e+00 : f32
    %6 = vector.broadcast %cst_5 : f32 to vector<256x256xf32>
    %7 = arith.subf %6, %5 : vector<256x256xf32>
    %8 = math.exp %7 : vector<256x256xf32>
    %cst_6 = arith.constant 1.000000e+00 : f32
    %9 = vector.broadcast %cst_6 : f32 to vector<256x256xf32>
    %10 = arith.addf %9, %8 : vector<256x256xf32>
    %11 = tpu.reciprocal %10 {approx = true} : vector<256x256xf32> -> vector<256x256xf32>
    %12 = arith.truncf %11 : vector<256x256xf32> to vector<256x256xbf16>
    %c0_7 = arith.constant 0 : index
    %c0_8 = arith.constant 0 : index
    %13 = vector.load %arg4[%c0_7, %c0_8] : memref<256x256xbf16, #tpu.memory_space<vmem>>, vector<256x256xbf16>
    %cst_9 = arith.constant dense<0.000000e+00> : vector<256x256xf32>
    %14 = tpu.matmul %12, %13, %cst_9 {dimension_numbers = #tpu.dot_dimension_numbers<[1], [0], [0], [1], [0, 0, 1, 1], [], []>} : vector<256x256xbf16>, vector<256x256xbf16>, vector<256x256xf32> -> vector<256x256xf32>
    %c0_10 = arith.constant 0 : index
    %c0_11 = arith.constant 0 : index
    %15 = vector.load %arg5[%c0_10, %c0_11] : memref<1x256xf32, #tpu.memory_space<vmem>>, vector<1x256xf32>
    %16 = vector.broadcast %15 : vector<1x256xf32> to vector<256x256xf32>
    %17 = arith.addf %14, %16 : vector<256x256xf32>
    %cst_12 = arith.constant 0.000000e+00 : f32
    %18 = vector.broadcast %cst_12 : f32 to vector<256x256xf32>
    %19 = arith.subf %18, %17 : vector<256x256xf32>
    %20 = math.exp %19 : vector<256x256xf32>
    %cst_13 = arith.constant 1.000000e+00 : f32
    %21 = vector.broadcast %cst_13 : f32 to vector<256x256xf32>
    %22 = arith.addf %21, %20 : vector<256x256xf32>
    %23 = tpu.reciprocal %22 {approx = true} : vector<256x256xf32> -> vector<256x256xf32>
    %24 = arith.truncf %23 : vector<256x256xf32> to vector<256x256xbf16>
    %c0_14 = arith.constant 0 : index
    %c0_15 = arith.constant 0 : index
    %25 = vector.load %arg6[%c0_14, %c0_15] : memref<256x256xbf16, #tpu.memory_space<vmem>>, vector<256x256xbf16>
    %cst_16 = arith.constant dense<0.000000e+00> : vector<256x256xf32>
    %26 = tpu.matmul %24, %25, %cst_16 {dimension_numbers = #tpu.dot_dimension_numbers<[1], [0], [0], [1], [0, 0, 1, 1], [], []>} : vector<256x256xbf16>, vector<256x256xbf16>, vector<256x256xf32> -> vector<256x256xf32>
    %c0_17 = arith.constant 0 : index
    %c0_18 = arith.constant 0 : index
    %27 = vector.load %arg7[%c0_17, %c0_18] : memref<1x256xf32, #tpu.memory_space<vmem>>, vector<1x256xf32>
    %28 = vector.broadcast %27 : vector<1x256xf32> to vector<256x256xf32>
    %29 = arith.addf %26, %28 : vector<256x256xf32>
    %cst_19 = arith.constant 0.000000e+00 : f32
    %30 = vector.broadcast %cst_19 : f32 to vector<256x256xf32>
    %31 = arith.subf %30, %29 : vector<256x256xf32>
    %32 = math.exp %31 : vector<256x256xf32>
    %cst_20 = arith.constant 1.000000e+00 : f32
    %33 = vector.broadcast %cst_20 : f32 to vector<256x256xf32>
    %34 = arith.addf %33, %32 : vector<256x256xf32>
    %35 = tpu.reciprocal %34 {approx = true} : vector<256x256xf32> -> vector<256x256xf32>
    %36 = arith.truncf %35 : vector<256x256xf32> to vector<256x256xbf16>
    %c0_21 = arith.constant 0 : index
    %c0_22 = arith.constant 0 : index
    %37 = vector.load %arg8[%c0_21, %c0_22] : memref<256x128xbf16, #tpu.memory_space<vmem>>, vector<256x128xbf16>
    %cst_23 = arith.constant dense<0.000000e+00> : vector<256x128xf32>
    %38 = tpu.matmul %36, %37, %cst_23 {dimension_numbers = #tpu.dot_dimension_numbers<[1], [0], [0], [1], [0, 0, 1, 1], [], []>} : vector<256x256xbf16>, vector<256x128xbf16>, vector<256x128xf32> -> vector<256x128xf32>
    %c0_24 = arith.constant 0 : index
    %c0_25 = arith.constant 0 : index
    %39 = vector.load %arg9[%c0_24, %c0_25] : memref<1x128xf32, #tpu.memory_space<vmem>>, vector<1x128xf32>
    %40 = vector.broadcast %39 : vector<1x128xf32> to vector<256x128xf32>
    %41 = arith.addf %38, %40 : vector<256x128xf32>
    %c0_26 = arith.constant 0 : index
    %c0_27 = arith.constant 0 : index
    %42 = vector.load %arg10[%c0_26, %c0_27] : memref<256x128xf32, #tpu.memory_space<vmem>>, vector<256x128xf32>
    tpu.vector_store %arg10[%c0_26, %c0_27], %41 {strides = array<i32>} : memref<256x128xf32, #tpu.memory_space<vmem>>, vector<256x128xf32>,
    return
  }
  func.func @transform_0(%arg0: i32) -> (i32, i32) {
    %c0_i32 = arith.constant 0 : i32
    %c0_i32_0 = arith.constant 0 : i32
    return %arg0, %c0_i32 : i32, i32
  }
  func.func @transform_1(%arg0: i32) -> (i32, i32) {
    %c0_i32 = arith.constant 0 : i32
    %c0_i32_0 = arith.constant 0 : i32
    %c0_i32_1 = arith.constant 0 : i32
    return %c0_i32, %c0_i32_0 : i32, i32
  }
  func.func @transform_2(%arg0: i32) -> (i32, i32) {
    %c0_i32 = arith.constant 0 : i32
    %c0_i32_0 = arith.constant 0 : i32
    %c0_i32_1 = arith.constant 0 : i32
    return %c0_i32, %c0_i32_0 : i32, i32
  }
  func.func @transform_3(%arg0: i32) -> (i32, i32) {
    %c0_i32 = arith.constant 0 : i32
    %c0_i32_0 = arith.constant 0 : i32
    %c0_i32_1 = arith.constant 0 : i32
    return %c0_i32, %c0_i32_0 : i32, i32
  }
  func.func @transform_4(%arg0: i32) -> (i32, i32) {
    %c0_i32 = arith.constant 0 : i32
    %c0_i32_0 = arith.constant 0 : i32
    %c0_i32_1 = arith.constant 0 : i32
    return %c0_i32, %c0_i32_0 : i32, i32
  }
  func.func @transform_5(%arg0: i32) -> (i32, i32) {
    %c0_i32 = arith.constant 0 : i32
    %c0_i32_0 = arith.constant 0 : i32
    %c0_i32_1 = arith.constant 0 : i32
    return %c0_i32, %c0_i32_0 : i32, i32
  }
  func.func @transform_6(%arg0: i32) -> (i32, i32) {
    %c0_i32 = arith.constant 0 : i32
    %c0_i32_0 = arith.constant 0 : i32
    %c0_i32_1 = arith.constant 0 : i32
    return %c0_i32, %c0_i32_0 : i32, i32
  }
  func.func @transform_7(%arg0: i32) -> (i32, i32) {
    %c0_i32 = arith.constant 0 : i32
    %c0_i32_0 = arith.constant 0 : i32
    %c0_i32_1 = arith.constant 0 : i32
    return %c0_i32, %c0_i32_0 : i32, i32
  }
  func.func @transform_8(%arg0: i32) -> (i32, i32) {
    %c0_i32 = arith.constant 0 : i32
    %c0_i32_0 = arith.constant 0 : i32
    %c0_i32_1 = arith.constant 0 : i32
    return %c0_i32, %c0_i32_0 : i32, i32
  }
  func.func @transform_9(%arg0: i32) -> (i32, i32) {
    %c0_i32 = arith.constant 0 : i32
    %c0_i32_0 = arith.constant 0 : i32
    return %arg0, %c0_i32 : i32, i32
  }
}

</mosaic_0001>

<llo_original>
// kernel: tpu_custom_call.1
$region0: #{tpu_custom_call.1}
  #allocation0 [shape = 'u32[]', space=smem, size = 0x4, offset = 0x4, fixed_abs, tag = 'smem constant byte address 0x4 - core index']
  #allocation1 [shape = 'u32[144,128]{1,0:T(1,128)}', space=vmem, size = 0x12000, scoped, tag = 'internal scratch']
  %s0 = inlined_call_operand.hbm [shape: bf16[256,896], index: 0, kind: input, shape index: {}]
  %s1 = inlined_call_operand.hbm [shape: bf16[896,256], index: 1, kind: input, shape index: {}]
  %s2 = inlined_call_operand.hbm [shape: f32[1,256], index: 2, kind: input, shape index: {}]
  %s3 = inlined_call_operand.hbm [shape: bf16[256,256], index: 3, kind: input, shape index: {}]
  %s4 = inlined_call_operand.hbm [shape: f32[1,256], index: 4, kind: input, shape index: {}]
  %s5 = inlined_call_operand.hbm [shape: bf16[256,256], index: 5, kind: input, shape index: {}]
  %s6 = inlined_call_operand.hbm [shape: f32[1,256], index: 6, kind: input, shape index: {}]
  %s7 = inlined_call_operand.hbm [shape: bf16[256,128], index: 7, kind: input, shape index: {}]
  %s8 = inlined_call_operand.hbm [shape: f32[1,128], index: 8, kind: input, shape index: {}]
  %s9 = inlined_call_operand.hbm [shape: f32[256,128], index: 9, kind: output, shape index: {}]
  %s10 = sld [smem:[#allocation0]]
  $region82: #{tpu_custom_call.1} parent=0
    _
  %s12 = ssub.s32 1, %s10
  %s13 = scalar_select 0, %s12, %s10
  $region1: #{tpu_custom_call.1} parent=0
    #allocation2 [shape = 'u8[458752]{0}', space=vmem, size = 0x70000, scoped, tag = 'input window, operand 0, single buffered']
    #allocation3 [shape = 's32[1]{0}', space=sflag, size = 0x4, scoped, tag = 'scoped memory for tpu_custom_call.1']
    #allocation4 [shape = 's32[1]{0}', space=sflag, size = 0x4, scoped, tag = 'scoped memory for tpu_custom_call.1']
    #allocation5 [shape = 'u8[458752]{0}', space=vmem, size = 0x70000, scoped, tag = 'input window, operand 1, single buffered']
    #allocation6 [shape = 's32[1]{0}', space=sflag, size = 0x4, scoped, tag = 'scoped memory for tpu_custom_call.1']
    #allocation7 [shape = 'u8[1024]{0}', space=vmem, size = 0x400, scoped, tag = 'input window, operand 2, single buffered']
    #allocation8 [shape = 'u8[131072]{0}', space=vmem, size = 0x20000, scoped, tag = 'input window, operand 3, single buffered']
    #allocation9 [shape = 's32[1]{0}', space=sflag, size = 0x4, scoped, tag = 'scoped memory for tpu_custom_call.1']
    #allocation10 [shape = 'u8[1024]{0}', space=vmem, size = 0x400, scoped, tag = 'input window, operand 4, single buffered']
    #allocation11 [shape = 'u8[131072]{0}', space=vmem, size = 0x20000, scoped, tag = 'input window, operand 5, single buffered']
    #allocation12 [shape = 's32[1]{0}', space=sflag, size = 0x4, scoped, tag = 'scoped memory for tpu_custom_call.1']
    #allocation13 [shape = 'u8[1024]{0}', space=vmem, size = 0x400, scoped, tag = 'input window, operand 6, single buffered']
    #allocation14 [shape = 'u8[65536]{0}', space=vmem, size = 0x10000, scoped, tag = 'input window, operand 7, single buffered']
    #allocation15 [shape = 's32[1]{0}', space=sflag, size = 0x4, scoped, tag = 'scoped memory for tpu_custom_call.1']
    #allocation16 [shape = 'u8[512]{0}', space=vmem, size = 0x400, scoped, tag = 'input window, operand 8, single buffered']
    #allocation17 [shape = 'u8[131072]{0}', space=vmem, size = 0x20000, scoped, tag = 'output window, operand 0, single buffered']
    %14 = vsyncpa [#allocation3], 0
    %15 = vsyncpa [#allocation6], 0
    %16 = vsyncpa [#allocation9], 0
    %17 = vsyncpa [#allocation12], 0
    %18 = vsyncpa [#allocation15], 0
    %19 = vsyncpa [#allocation4], 0
    // Predicated region
    $region2: #{tpu_custom_call.1} parent=1 // pred_check
      _
    $region3: #{tpu_custom_call.1} parent=1 // pred_check_branch
      %21 = sbr.rel (0) target = $region5
    $region4: #{tpu_custom_call.1} parent=1 // pred_region
      %s23 = ssub.s32 14336, 14336
      %24 = vsyncadd [#allocation3], %s23
      %s25 = sshll.u32 [#allocation2], 4
      %s26 = int_to_ptr.vmem [resolvable:$true] %s25
      %31 = dma.hbm_to_vmem [thread:$0]  %s0, 14336, %s26, [#allocation3], 448, 448, 28
    $region5: #{tpu_custom_call.1} parent=1 // pred_fallthru
      _
    // Predicated region
    $region6: #{tpu_custom_call.1} parent=1 // pred_check
      _
    $region7: #{tpu_custom_call.1} parent=1 // pred_check_branch
      %33 = sbr.rel (0) target = $region9
    $region8: #{tpu_custom_call.1} parent=1 // pred_region
      %s35 = ssub.s32 14336, 14336
      %36 = vsyncadd [#allocation6], %s35
      %s37 = sshll.u32 [#allocation5], 4
      %s38 = int_to_ptr.vmem [resolvable:$true] %s37
      %43 = dma.hbm_to_vmem [thread:$0]  %s1, 14336, %s38, [#allocation6], 128, 128, 8
    $region9: #{tpu_custom_call.1} parent=1 // pred_fallthru
      _
    // Predicated region
    $region10: #{tpu_custom_call.1} parent=1 // pred_check
      _
    $region11: #{tpu_custom_call.1} parent=1 // pred_check_branch
      %45 = sbr.rel (0) target = $region13
    $region12: #{tpu_custom_call.1} parent=1 // pred_region
      %s47 = ssub.s32 32, 32
      %48 = vsyncadd [#allocation6], %s47
      %s50 = sshll.u32 [#allocation7], 4
      %s51 = int_to_ptr.vmem [resolvable:$true] %s50
      %53 = dma.hbm_to_vmem [thread:$0]  %s2, 32, %s51, [#allocation6]
    $region13: #{tpu_custom_call.1} parent=1 // pred_fallthru
      _
    // Predicated region
    $region14: #{tpu_custom_call.1} parent=1 // pred_check
      _
    $region15: #{tpu_custom_call.1} parent=1 // pred_check_branch
      %55 = sbr.rel (0) target = $region17
    $region16: #{tpu_custom_call.1} parent=1 // pred_region
      %s57 = ssub.s32 4096, 4096
      %58 = vsyncadd [#allocation9], %s57
      %s59 = sshll.u32 [#allocation8], 4
      %s60 = int_to_ptr.vmem [resolvable:$true] %s59
      %65 = dma.hbm_to_vmem [thread:$0]  %s3, 4096, %s60, [#allocation9], 128, 128, 8
    $region17: #{tpu_custom_call.1} parent=1 // pred_fallthru
      _
    // Predicated region
    $region18: #{tpu_custom_call.1} parent=1 // pred_check
      _
    $region19: #{tpu_custom_call.1} parent=1 // pred_check_branch
      %67 = sbr.rel (0) target = $region21
    $region20: #{tpu_custom_call.1} parent=1 // pred_region
      %s69 = ssub.s32 32, 32
      %70 = vsyncadd [#allocation9], %s69
      %s72 = sshll.u32 [#allocation10], 4
      %s73 = int_to_ptr.vmem [resolvable:$true] %s72
      %75 = dma.hbm_to_vmem [thread:$0]  %s4, 32, %s73, [#allocation9]
    $region21: #{tpu_custom_call.1} parent=1 // pred_fallthru
      _
    // Predicated region
    $region22: #{tpu_custom_call.1} parent=1 // pred_check
      _
    $region23: #{tpu_custom_call.1} parent=1 // pred_check_branch
      %77 = sbr.rel (0) target = $region25
    $region24: #{tpu_custom_call.1} parent=1 // pred_region
      %s79 = ssub.s32 4096, 4096
      %80 = vsyncadd [#allocation12], %s79
      %s81 = sshll.u32 [#allocation11], 4
      %s82 = int_to_ptr.vmem [resolvable:$true] %s81
      %87 = dma.hbm_to_vmem [thread:$0]  %s5, 4096, %s82, [#allocation12], 128, 128, 8
    $region25: #{tpu_custom_call.1} parent=1 // pred_fallthru
      _
    // Predicated region
    $region26: #{tpu_custom_call.1} parent=1 // pred_check
      _
    $region27: #{tpu_custom_call.1} parent=1 // pred_check_branch
      %89 = sbr.rel (0) target = $region29
    $region28: #{tpu_custom_call.1} parent=1 // pred_region
      %s91 = ssub.s32 32, 32
      %92 = vsyncadd [#allocation12], %s91
      %s94 = sshll.u32 [#allocation13], 4
      %s95 = int_to_ptr.vmem [resolvable:$true] %s94
      %97 = dma.hbm_to_vmem [thread:$0]  %s6, 32, %s95, [#allocation12]
    $region29: #{tpu_custom_call.1} parent=1 // pred_fallthru
      _
    // Predicated region
    $region30: #{tpu_custom_call.1} parent=1 // pred_check
      _
    $region31: #{tpu_custom_call.1} parent=1 // pred_check_branch
      %99 = sbr.rel (0) target = $region33
    $region32: #{tpu_custom_call.1} parent=1 // pred_region
      %s101 = ssub.s32 2048, 2048
      %102 = vsyncadd [#allocation15], %s101
      %s103 = sshll.u32 [#allocation14], 4
      %s104 = int_to_ptr.vmem [resolvable:$true] %s103
      %109 = dma.hbm_to_vmem [thread:$0]  %s7, 2048, %s104, [#allocation15], 64, 64, 4
    $region33: #{tpu_custom_call.1} parent=1 // pred_fallthru
      _
    // Predicated region
    $region34: #{tpu_custom_call.1} parent=1 // pred_check
      _
    $region35: #{tpu_custom_call.1} parent=1 // pred_check_branch
      %111 = sbr.rel (0) target = $region37
    $region36: #{tpu_custom_call.1} parent=1 // pred_region
      %s113 = ssub.s32 16, 16
      %114 = vsyncadd [#allocation15], %s113
      %s116 = sshll.u32 [#allocation16], 4
      %s117 = int_to_ptr.vmem [resolvable:$true] %s116
      %119 = dma.hbm_to_vmem [thread:$0]  %s8, 16, %s117, [#allocation15]
    $region37: #{tpu_custom_call.1} parent=1 // pred_fallthru
      _
    // Predicated region
    $region38: #{tpu_custom_call.1} parent=1 // pred_check
      _
    $region39: #{tpu_custom_call.1} parent=1 // pred_check_branch
      %121 = sbr.rel (0) target = $region41
    $region40: #{tpu_custom_call.1} parent=1 // pred_region
      %122 = dma.done [#allocation3], 14336
    $region41: #{tpu_custom_call.1} parent=1 // pred_fallthru
      _
    // Predicated region
    $region42: #{tpu_custom_call.1} parent=1 // pred_check
      _
    $region43: #{tpu_custom_call.1} parent=1 // pred_check_branch
      %124 = sbr.rel (0) target = $region45
    $region44: #{tpu_custom_call.1} parent=1 // pred_region
      %125 = dma.done [#allocation6], 14336
    $region45: #{tpu_custom_call.1} parent=1 // pred_fallthru
      _
    // Predicated region
    $region46: #{tpu_custom_call.1} parent=1 // pred_check
      _
    $region47: #{tpu_custom_call.1} parent=1 // pred_check_branch
      %127 = sbr.rel (0) target = $region49
    $region48: #{tpu_custom_call.1} parent=1 // pred_region
      %128 = dma.done [#allocation6], 32
    $region49: #{tpu_custom_call.1} parent=1 // pred_fallthru
      _
    // Predicated region
    $region50: #{tpu_custom_call.1} parent=1 // pred_check
      _
    $region51: #{tpu_custom_call.1} parent=1 // pred_check_branch
      %130 = sbr.rel (0) target = $region53
    $region52: #{tpu_custom_call.1} parent=1 // pred_region
      %131 = dma.done [#allocation9], 4096
    $region53: #{tpu_custom_call.1} parent=1 // pred_fallthru
      _
    // Predicated region
    $region54: #{tpu_custom_call.1} parent=1 // pred_check
      _
    $region55: #{tpu_custom_call.1} parent=1 // pred_check_branch
      %133 = sbr.rel (0) target = $region57
    $region56: #{tpu_custom_call.1} parent=1 // pred_region
      %134 = dma.done [#allocation9], 32
    $region57: #{tpu_custom_call.1} parent=1 // pred_fallthru
      _
    // Predicated region
    $region58: #{tpu_custom_call.1} parent=1 // pred_check
      _
    $region59: #{tpu_custom_call.1} parent=1 // pred_check_branch
      %136 = sbr.rel (0) target = $region61
    $region60: #{tpu_custom_call.1} parent=1 // pred_region
      %137 = dma.done [#allocation12], 4096
    $region61: #{tpu_custom_call.1} parent=1 // pred_fallthru
      _
    // Predicated region
    $region62: #{tpu_custom_call.1} parent=1 // pred_check
      _
    $region63: #{tpu_custom_call.1} parent=1 // pred_check_branch
      %139 = sbr.rel (0) target = $region65
    $region64: #{tpu_custom_call.1} parent=1 // pred_region
      %140 = dma.done [#allocation12], 32
    $region65: #{tpu_custom_call.1} parent=1 // pred_fallthru
      _
    // Predicated region
    $region66: #{tpu_custom_call.1} parent=1 // pred_check
      _
    $region67: #{tpu_custom_call.1} parent=1 // pred_check_branch
      %142 = sbr.rel (0) target = $region69
    $region68: #{tpu_custom_call.1} parent=1 // pred_region
      %143 = dma.done [#allocation15], 2048
    $region69: #{tpu_custom_call.1} parent=1 // pred_fallthru
      _
    // Predicated region
    $region70: #{tpu_custom_call.1} parent=1 // pred_check
      _
    $region71: #{tpu_custom_call.1} parent=1 // pred_check_branch
      %145 = sbr.rel (0) target = $region73
    $region72: #{tpu_custom_call.1} parent=1 // pred_region
      %146 = dma.done [#allocation15], 16
    $region73: #{tpu_custom_call.1} parent=1 // pred_fallthru
      _
    %v148 = vld [vmem:[#allocation2] sm:$0xff]
    %v149 = vld [vmem:[#allocation2 + $0x8] sm:$0xff]
    %v150 = vld [vmem:[#allocation2 + $0x10] sm:$0xff]
    %v151 = vld [vmem:[#allocation2 + $0x18] sm:$0xf]
    %v152 = vld [vmem:[#allocation2 + $0x1c] sm:$0xff]
    %v153 = vld [vmem:[#allocation2 + $0x24] sm:$0xff]
    %v154 = vld [vmem:[#allocation2 + $0x2c] sm:$0xff]
    %v155 = vld [vmem:[#allocation2 + $0x34] sm:$0xf]
    %v156 = vld [vmem:[#allocation2 + $0x38] sm:$0xff]
    %v157 = vld [vmem:[#allocation2 + $0x40] sm:$0xff]
    %v158 = vld [vmem:[#allocation2 + $0x48] sm:$0xff]
    %v159 = vld [vmem:[#allocation2 + $0x50] sm:$0xf]
    %v160 = vld [vmem:[#allocation2 + $0x54] sm:$0xff]
    %v161 = vld [vmem:[#allocation2 + $0x5c] sm:$0xff]
    %v162 = vld [vmem:[#allocation2 + $0x64] sm:$0xff]
    %v163 = vld [vmem:[#allocation2 + $0x6c] sm:$0xf]
    %v164 = vld [vmem:[#allocation2 + $0x70] sm:$0xff]
    %v165 = vld [vmem:[#allocation2 + $0x78] sm:$0xff]
    %v166 = vld [vmem:[#allocation2 + $0x80] sm:$0xff]
    %v167 = vld [vmem:[#allocation2 + $0x88] sm:$0xf]
    %v168 = vld [vmem:[#allocation2 + $0x8c] sm:$0xff]
    %v169 = vld [vmem:[#allocation2 + $0x94] sm:$0xff]
    %v170 = vld [vmem:[#allocation2 + $0x9c] sm:$0xff]
    %v171 = vld [vmem:[#allocation2 + $0xa4] sm:$0xf]
    %v172 = vld [vmem:[#allocation2 + $0xa8] sm:$0xff]
    %v173 = vld [vmem:[#allocation2 + $0xb0] sm:$0xff]
    %v174 = vld [vmem:[#allocation2 + $0xb8] sm:$0xff]
    %v175 = vld [vmem:[#allocation2 + $0xc0] sm:$0xf]
    %v176 = vld [vmem:[#allocation2 + $0xc4] sm:$0xff]
    %v177 = vld [vmem:[#allocation2 + $0xcc] sm:$0xff]
    %v178 = vld [vmem:[#allocation2 + $0xd4] sm:$0xff]
    %v179 = vld [vmem:[#allocation2 + $0xdc] sm:$0xf]
    %v180 = vld [vmem:[#allocation2 + $0xe0] sm:$0xff]
    %v181 = vld [vmem:[#allocation2 + $0xe8] sm:$0xff]
    %v182 = vld [vmem:[#allocation2 + $0xf0] sm:$0xff]
    %v183 = vld [vmem:[#allocation2 + $0xf8] sm:$0xf]
    %v184 = vld [vmem:[#allocation2 + $0xfc] sm:$0xff]
    %v185 = vld [vmem:[#allocation2 + $0x104] sm:$0xff]
    %v186 = vld [vmem:[#allocation2 + $0x10c] sm:$0xff]
    %v187 = vld [vmem:[#allocation2 + $0x114] sm:$0xf]
    %v188 = vld [vmem:[#allocation2 + $0x118] sm:$0xff]
    %v189 = vld [vmem:[#allocation2 + $0x120] sm:$0xff]
    %v190 = vld [vmem:[#allocation2 + $0x128] sm:$0xff]
    %v191 = vld [vmem:[#allocation2 + $0x130] sm:$0xf]
    %v192 = vld [vmem:[#allocation2 + $0x134] sm:$0xff]
    %v193 = vld [vmem:[#allocation2 + $0x13c] sm:$0xff]
    %v194 = vld [vmem:[#allocation2 + $0x144] sm:$0xff]
    %v195 = vld [vmem:[#allocation2 + $0x14c] sm:$0xf]
    %v196 = vld [vmem:[#allocation2 + $0x150] sm:$0xff]
    %v197 = vld [vmem:[#allocation2 + $0x158] sm:$0xff]
    %v198 = vld [vmem:[#allocation2 + $0x160] sm:$0xff]
    %v199 = vld [vmem:[#allocation2 + $0x168] sm:$0xf]
    %v200 = vld [vmem:[#allocation2 + $0x16c] sm:$0xff]
    %v201 = vld [vmem:[#allocation2 + $0x174] sm:$0xff]
    %v202 = vld [vmem:[#allocation2 + $0x17c] sm:$0xff]
    %v203 = vld [vmem:[#allocation2 + $0x184] sm:$0xf]
    %v204 = vld [vmem:[#allocation2 + $0x188] sm:$0xff]
    %v205 = vld [vmem:[#allocation2 + $0x190] sm:$0xff]
    %v206 = vld [vmem:[#allocation2 + $0x198] sm:$0xff]
    %v207 = vld [vmem:[#allocation2 + $0x1a0] sm:$0xf]
    %v208 = vld [vmem:[#allocation2 + $0x1a4] sm:$0xff]
    %v209 = vld [vmem:[#allocation2 + $0x1ac] sm:$0xff]
    %v210 = vld [vmem:[#allocation2 + $0x1b4] sm:$0xff]
    %v211 = vld [vmem:[#allocation2 + $0x1bc] sm:$0xf]
    %v212 = vld [vmem:[#allocation2 + $0x1c0] sm:$0xff]
    %v213 = vld [vmem:[#allocation2 + $0x1c8] sm:$0xff]
    %v214 = vld [vmem:[#allocation2 + $0x1d0] sm:$0xff]
    %v215 = vld [vmem:[#allocation2 + $0x1d8] sm:$0xf]
    %v216 = vld [vmem:[#allocation2 + $0x1dc] sm:$0xff]
    %v217 = vld [vmem:[#allocation2 + $0x1e4] sm:$0xff]
    %v218 = vld [vmem:[#allocation2 + $0x1ec] sm:$0xff]
    %v219 = vld [vmem:[#allocation2 + $0x1f4] sm:$0xf]
    %v220 = vld [vmem:[#allocation2 + $0x1f8] sm:$0xff]
    %v221 = vld [vmem:[#allocation2 + $0x200] sm:$0xff]
    %v222 = vld [vmem:[#allocation2 + $0x208] sm:$0xff]
    %v223 = vld [vmem:[#allocation2 + $0x210] sm:$0xf]
    %v224 = vld [vmem:[#allocation2 + $0x214] sm:$0xff]
    %v225 = vld [vmem:[#allocation2 + $0x21c] sm:$0xff]
    %v226 = vld [vmem:[#allocation2 + $0x224] sm:$0xff]
    %v227 = vld [vmem:[#allocation2 + $0x22c] sm:$0xf]
    %v228 = vld [vmem:[#allocation2 + $0x230] sm:$0xff]
    %v229 = vld [vmem:[#allocation2 + $0x238] sm:$0xff]
    %v230 = vld [vmem:[#allocation2 + $0x240] sm:$0xff]
    %v231 = vld [vmem:[#allocation2 + $0x248] sm:$0xf]
    %v232 = vld [vmem:[#allocation2 + $0x24c] sm:$0xff]
    %v233 = vld [vmem:[#allocation2 + $0x254] sm:$0xff]
    %v234 = vld [vmem:[#allocation2 + $0x25c] sm:$0xff]
    %v235 = vld [vmem:[#allocation2 + $0x264] sm:$0xf]
    %v236 = vld [vmem:[#allocation2 + $0x268] sm:$0xff]
    %v237 = vld [vmem:[#allocation2 + $0x270] sm:$0xff]
    %v238 = vld [vmem:[#allocation2 + $0x278] sm:$0xff]
    %v239 = vld [vmem:[#allocation2 + $0x280] sm:$0xf]
    %v240 = vld [vmem:[#allocation2 + $0x284] sm:$0xff]
    %v241 = vld [vmem:[#allocation2 + $0x28c] sm:$0xff]
    %v242 = vld [vmem:[#allocation2 + $0x294] sm:$0xff]
    %v243 = vld [vmem:[#allocation2 + $0x29c] sm:$0xf]
    %v244 = vld [vmem:[#allocation2 + $0x2a0] sm:$0xff]
    %v245 = vld [vmem:[#allocation2 + $0x2a8] sm:$0xff]
    %v246 = vld [vmem:[#allocation2 + $0x2b0] sm:$0xff]
    %v247 = vld [vmem:[#allocation2 + $0x2b8] sm:$0xf]
    %v248 = vld [vmem:[#allocation2 + $0x2bc] sm:$0xff]
    %v249 = vld [vmem:[#allocation2 + $0x2c4] sm:$0xff]
    %v250 = vld [vmem:[#allocation2 + $0x2cc] sm:$0xff]
    %v251 = vld [vmem:[#allocation2 + $0x2d4] sm:$0xf]
    %v252 = vld [vmem:[#allocation2 + $0x2d8] sm:$0xff]
    %v253 = vld [vmem:[#allocation2 + $0x2e0] sm:$0xff]
    %v254 = vld [vmem:[#allocation2 + $0x2e8] sm:$0xff]
    %v255 = vld [vmem:[#allocation2 + $0x2f0] sm:$0xf]
    %v256 = vld [vmem:[#allocation2 + $0x2f4] sm:$0xff]
    %v257 = vld [vmem:[#allocation2 + $0x2fc] sm:$0xff]
    %v258 = vld [vmem:[#allocation2 + $0x304] sm:$0xff]
    %v259 = vld [vmem:[#allocation2 + $0x30c] sm:$0xf]
    %v260 = vld [vmem:[#allocation2 + $0x310] sm:$0xff]
    %v261 = vld [vmem:[#allocation2 + $0x318] sm:$0xff]
    %v262 = vld [vmem:[#allocation2 + $0x320] sm:$0xff]
    %v263 = vld [vmem:[#allocation2 + $0x328] sm:$0xf]
    %v264 = vld [vmem:[#allocation2 + $0x32c] sm:$0xff]
    %v265 = vld [vmem:[#allocation2 + $0x334] sm:$0xff]
    %v266 = vld [vmem:[#allocation2 + $0x33c] sm:$0xff]
    %v267 = vld [vmem:[#allocation2 + $0x344] sm:$0xf]
    %v268 = vld [vmem:[#allocation2 + $0x348] sm:$0xff]
    %v269 = vld [vmem:[#allocation2 + $0x350] sm:$0xff]
    %v270 = vld [vmem:[#allocation2 + $0x358] sm:$0xff]
    %v271 = vld [vmem:[#allocation2 + $0x360] sm:$0xf]
    %v272 = vld [vmem:[#allocation2 + $0x364] sm:$0xff]
    %v273 = vld [vmem:[#allocation2 + $0x36c] sm:$0xff]
    %v274 = vld [vmem:[#allocation2 + $0x374] sm:$0xff]
    %v275 = vld [vmem:[#allocation2 + $0x37c] sm:$0xf]
    %v276 = vld [vmem:[#allocation5] sm:$0xff]
    %v277 = vld [vmem:[#allocation5 + $0x8] sm:$0xff]
    %v278 = vld [vmem:[#allocation5 + $0x10] sm:$0xff]
    %v279 = vld [vmem:[#allocation5 + $0x18] sm:$0xff]
    %v280 = vld [vmem:[#allocation5 + $0x20] sm:$0xff]
    %v281 = vld [vmem:[#allocation5 + $0x28] sm:$0xff]
    %v282 = vld [vmem:[#allocation5 + $0x30] sm:$0xff]
    %v283 = vld [vmem:[#allocation5 + $0x38] sm:$0xff]
    %v284 = vld [vmem:[#allocation5 + $0x40] sm:$0xff]
    %v285 = vld [vmem:[#allocation5 + $0x48] sm:$0xff]
    %v286 = vld [vmem:[#allocation5 + $0x50] sm:$0xff]
    %v287 = vld [vmem:[#allocation5 + $0x58] sm:$0xff]
    %v288 = vld [vmem:[#allocation5 + $0x60] sm:$0xff]
    %v289 = vld [vmem:[#allocation5 + $0x68] sm:$0xff]
    %v290 = vld [vmem:[#allocation5 + $0x70] sm:$0xff]
    %v291 = vld [vmem:[#allocation5 + $0x78] sm:$0xff]
    %v292 = vld [vmem:[#allocation5 + $0x80] sm:$0xff]
    %v293 = vld [vmem:[#allocation5 + $0x88] sm:$0xff]
    %v294 = vld [vmem:[#allocation5 + $0x90] sm:$0xff]
    %v295 = vld [vmem:[#allocation5 + $0x98] sm:$0xff]
    %v296 = vld [vmem:[#allocation5 + $0xa0] sm:$0xff]
    %v297 = vld [vmem:[#allocation5 + $0xa8] sm:$0xff]
    %v298 = vld [vmem:[#allocation5 + $0xb0] sm:$0xff]
    %v299 = vld [vmem:[#allocation5 + $0xb8] sm:$0xff]
    %v300 = vld [vmem:[#allocation5 + $0xc0] sm:$0xff]
    %v301 = vld [vmem:[#allocation5 + $0xc8] sm:$0xff]
    %v302 = vld [vmem:[#allocation5 + $0xd0] sm:$0xff]
    %v303 = vld [vmem:[#allocation5 + $0xd8] sm:$0xff]
    %v304 = vld [vmem:[#allocation5 + $0xe0] sm:$0xff]
    %v305 = vld [vmem:[#allocation5 + $0xe8] sm:$0xff]
    %v306 = vld [vmem:[#allocation5 + $0xf0] sm:$0xff]
    %v307 = vld [vmem:[#allocation5 + $0xf8] sm:$0xff]
    %v308 = vld [vmem:[#allocation5 + $0x100] sm:$0xff]
    %v309 = vld [vmem:[#allocation5 + $0x108] sm:$0xff]
    %v310 = vld [vmem:[#allocation5 + $0x110] sm:$0xff]
    %v311 = vld [vmem:[#allocation5 + $0x118] sm:$0xff]
    %v312 = vld [vmem:[#allocation5 + $0x120] sm:$0xff]
    %v313 = vld [vmem:[#allocation5 + $0x128] sm:$0xff]
    %v314 = vld [vmem:[#allocation5 + $0x130] sm:$0xff]
    %v315 = vld [vmem:[#allocation5 + $0x138] sm:$0xff]
    %v316 = vld [vmem:[#allocation5 + $0x140] sm:$0xff]
    %v317 = vld [vmem:[#allocation5 + $0x148] sm:$0xff]
    %v318 = vld [vmem:[#allocation5 + $0x150] sm:$0xff]
    %v319 = vld [vmem:[#allocation5 + $0x158] sm:$0xff]
    %v320 = vld [vmem:[#allocation5 + $0x160] sm:$0xff]
    %v321 = vld [vmem:[#allocation5 + $0x168] sm:$0xff]
    %v322 = vld [vmem:[#allocation5 + $0x170] sm:$0xff]
    %v323 = vld [vmem:[#allocation5 + $0x178] sm:$0xff]
    %v324 = vld [vmem:[#allocation5 + $0x180] sm:$0xff]
    %v325 = vld [vmem:[#allocation5 + $0x188] sm:$0xff]
    %v326 = vld [vmem:[#allocation5 + $0x190] sm:$0xff]
    %v327 = vld [vmem:[#allocation5 + $0x198] sm:$0xff]
    %v328 = vld [vmem:[#allocation5 + $0x1a0] sm:$0xff]
    %v329 = vld [vmem:[#allocation5 + $0x1a8] sm:$0xff]
    %v330 = vld [vmem:[#allocation5 + $0x1b0] sm:$0xff]
    %v331 = vld [vmem:[#allocation5 + $0x1b8] sm:$0xff]
    %v332 = vld [vmem:[#allocation5 + $0x1c0] sm:$0xff]
    %v333 = vld [vmem:[#allocation5 + $0x1c8] sm:$0xff]
    %v334 = vld [vmem:[#allocation5 + $0x1d0] sm:$0xff]
    %v335 = vld [vmem:[#allocation5 + $0x1d8] sm:$0xff]
    %v336 = vld [vmem:[#allocation5 + $0x1e0] sm:$0xff]
    %v337 = vld [vmem:[#allocation5 + $0x1e8] sm:$0xff]
    %v338 = vld [vmem:[#allocation5 + $0x1f0] sm:$0xff]
    %v339 = vld [vmem:[#allocation5 + $0x1f8] sm:$0xff]
    %v340 = vld [vmem:[#allocation5 + $0x200] sm:$0xff]
    %v341 = vld [vmem:[#allocation5 + $0x208] sm:$0xff]
    %v342 = vld [vmem:[#allocation5 + $0x210] sm:$0xff]
    %v343 = vld [vmem:[#allocation5 + $0x218] sm:$0xff]
    %v344 = vld [vmem:[#allocation5 + $0x220] sm:$0xff]
    %v345 = vld [vmem:[#allocation5 + $0x228] sm:$0xff]
    %v346 = vld [vmem:[#allocation5 + $0x230] sm:$0xff]
    %v347 = vld [vmem:[#allocation5 + $0x238] sm:$0xff]
    %v348 = vld [vmem:[#allocation5 + $0x240] sm:$0xff]
    %v349 = vld [vmem:[#allocation5 + $0x248] sm:$0xff]
    %v350 = vld [vmem:[#allocation5 + $0x250] sm:$0xff]
    %v351 = vld [vmem:[#allocation5 + $0x258] sm:$0xff]
    %v352 = vld [vmem:[#allocation5 + $0x260] sm:$0xff]
    %v353 = vld [vmem:[#allocation5 + $0x268] sm:$0xff]
    %v354 = vld [vmem:[#allocation5 + $0x270] sm:$0xff]
    %v355 = vld [vmem:[#allocation5 + $0x278] sm:$0xff]
    %v356 = vld [vmem:[#allocation5 + $0x280] sm:$0xff]
    %v357 = vld [vmem:[#allocation5 + $0x288] sm:$0xff]
    %v358 = vld [vmem:[#allocation5 + $0x290] sm:$0xff]
    %v359 = vld [vmem:[#allocation5 + $0x298] sm:$0xff]
    %v360 = vld [vmem:[#allocation5 + $0x2a0] sm:$0xff]
    %v361 = vld [vmem:[#allocation5 + $0x2a8] sm:$0xff]
    %v362 = vld [vmem:[#allocation5 + $0x2b0] sm:$0xff]
    %v363 = vld [vmem:[#allocation5 + $0x2b8] sm:$0xff]
    %v364 = vld [vmem:[#allocation5 + $0x2c0] sm:$0xff]
    %v365 = vld [vmem:[#allocation5 + $0x2c8] sm:$0xff]
    %v366 = vld [vmem:[#allocation5 + $0x2d0] sm:$0xff]
    %v367 = vld [vmem:[#allocation5 + $0x2d8] sm:$0xff]
    %v368 = vld [vmem:[#allocation5 + $0x2e0] sm:$0xff]
    %v369 = vld [vmem:[#allocation5 + $0x2e8] sm:$0xff]
    %v370 = vld [vmem:[#allocation5 + $0x2f0] sm:$0xff]
    %v371 = vld [vmem:[#allocation5 + $0x2f8] sm:$0xff]
    %v372 = vld [vmem:[#allocation5 + $0x300] sm:$0xff]
    %v373 = vld [vmem:[#allocation5 + $0x308] sm:$0xff]
    %v374 = vld [vmem:[#allocation5 + $0x310] sm:$0xff]
    %v375 = vld [vmem:[#allocation5 + $0x318] sm:$0xff]
    %v376 = vld [vmem:[#allocation5 + $0x320] sm:$0xff]
    %v377 = vld [vmem:[#allocation5 + $0x328] sm:$0xff]
    %v378 = vld [vmem:[#allocation5 + $0x330] sm:$0xff]
    %v379 = vld [vmem:[#allocation5 + $0x338] sm:$0xff]
    %v380 = vld [vmem:[#allocation5 + $0x340] sm:$0xff]
    %v381 = vld [vmem:[#allocation5 + $0x348] sm:$0xff]
    %v382 = vld [vmem:[#allocation5 + $0x350] sm:$0xff]
    %v383 = vld [vmem:[#allocation5 + $0x358] sm:$0xff]
    %v384 = vld [vmem:[#allocation5 + $0x360] sm:$0xff]
    %v385 = vld [vmem:[#allocation5 + $0x368] sm:$0xff]
    %v386 = vld [vmem:[#allocation5 + $0x370] sm:$0xff]
    %v387 = vld [vmem:[#allocation5 + $0x378] sm:$0xff]
    %v388 = vld [vmem:[#allocation7] sm:$0x3]
    %v390 = vlaneseq
    %v391 = vshrl.u32 %v390, 7
    %v392 = vsub.s32 0, %v391
    %v393 = vrot.slane %v388, %v392
    %v394 = vlaneseq
    %v395 = vshrl.u32 %v394, 7
    %v396 = vsub.s32 1, %v395
    %v397 = vrot.slane %v388, %v396
    %v528 = vunpack.c.l.b16 %v148
    %v529 = vunpack.c.h.b16 %v148
    %v530 = vunpack.c.l.b16 %v149
    %v531 = vunpack.c.h.b16 %v149
    %v532 = vunpack.c.l.b16 %v150
    %v533 = vunpack.c.h.b16 %v150
    %v534 = vunpack.c.l.b16 %v151
    %v535 = vunpack.c.l.b16 %v152
    %v536 = vunpack.c.h.b16 %v152
    %v537 = vunpack.c.l.b16 %v153
    %v538 = vunpack.c.h.b16 %v153
    %v539 = vunpack.c.l.b16 %v154
    %v540 = vunpack.c.h.b16 %v154
    %v541 = vunpack.c.l.b16 %v155
    %v542 = vunpack.c.l.b16 %v156
    %v543 = vunpack.c.h.b16 %v156
    %v544 = vunpack.c.l.b16 %v157
    %v545 = vunpack.c.h.b16 %v157
    %v546 = vunpack.c.l.b16 %v158
    %v547 = vunpack.c.h.b16 %v158
    %v548 = vunpack.c.l.b16 %v159
    %v549 = vunpack.c.l.b16 %v160
    %v550 = vunpack.c.h.b16 %v160
    %v551 = vunpack.c.l.b16 %v161
    %v552 = vunpack.c.h.b16 %v161
    %v553 = vunpack.c.l.b16 %v162
    %v554 = vunpack.c.h.b16 %v162
    %v555 = vunpack.c.l.b16 %v163
    %v556 = vunpack.c.l.b16 %v164
    %v557 = vunpack.c.h.b16 %v164
    %v558 = vunpack.c.l.b16 %v165
    %v559 = vunpack.c.h.b16 %v165
    %v560 = vunpack.c.l.b16 %v166
    %v561 = vunpack.c.h.b16 %v166
    %v562 = vunpack.c.l.b16 %v167
    %v563 = vunpack.c.l.b16 %v168
    %v564 = vunpack.c.h.b16 %v168
    %v565 = vunpack.c.l.b16 %v169
    %v566 = vunpack.c.h.b16 %v169
    %v567 = vunpack.c.l.b16 %v170
    %v568 = vunpack.c.h.b16 %v170
    %v569 = vunpack.c.l.b16 %v171
    %v570 = vunpack.c.l.b16 %v172
    %v571 = vunpack.c.h.b16 %v172
    %v572 = vunpack.c.l.b16 %v173
    %v573 = vunpack.c.h.b16 %v173
    %v574 = vunpack.c.l.b16 %v174
    %v575 = vunpack.c.h.b16 %v174
    %v576 = vunpack.c.l.b16 %v175
    %v577 = vunpack.c.l.b16 %v176
    %v578 = vunpack.c.h.b16 %v176
    %v579 = vunpack.c.l.b16 %v177
    %v580 = vunpack.c.h.b16 %v177
    %v581 = vunpack.c.l.b16 %v178
    %v582 = vunpack.c.h.b16 %v178
    %v583 = vunpack.c.l.b16 %v179
    %v584 = vunpack.c.l.b16 %v180
    %v585 = vunpack.c.h.b16 %v180
    %v586 = vunpack.c.l.b16 %v181
    %v587 = vunpack.c.h.b16 %v181
    %v588 = vunpack.c.l.b16 %v182
    %v589 = vunpack.c.h.b16 %v182
    %v590 = vunpack.c.l.b16 %v183
    %v591 = vunpack.c.l.b16 %v184
    %v592 = vunpack.c.h.b16 %v184
    %v593 = vunpack.c.l.b16 %v185
    %v594 = vunpack.c.h.b16 %v185
    %v595 = vunpack.c.l.b16 %v186
    %v596 = vunpack.c.h.b16 %v186
    %v597 = vunpack.c.l.b16 %v187
    %v598 = vunpack.c.l.b16 %v188
    %v599 = vunpack.c.h.b16 %v188
    %v600 = vunpack.c.l.b16 %v189
    %v601 = vunpack.c.h.b16 %v189
    %v602 = vunpack.c.l.b16 %v190
    %v603 = vunpack.c.h.b16 %v190
    %v604 = vunpack.c.l.b16 %v191
    %v605 = vunpack.c.l.b16 %v192
    %v606 = vunpack.c.h.b16 %v192
    %v607 = vunpack.c.l.b16 %v193
    %v608 = vunpack.c.h.b16 %v193
    %v609 = vunpack.c.l.b16 %v194
    %v610 = vunpack.c.h.b16 %v194
    %v611 = vunpack.c.l.b16 %v195
    %v612 = vunpack.c.l.b16 %v196
    %v613 = vunpack.c.h.b16 %v196
    %v614 = vunpack.c.l.b16 %v197
    %v615 = vunpack.c.h.b16 %v197
    %v616 = vunpack.c.l.b16 %v198
    %v617 = vunpack.c.h.b16 %v198
    %v618 = vunpack.c.l.b16 %v199
    %v619 = vunpack.c.l.b16 %v200
    %v620 = vunpack.c.h.b16 %v200
    %v621 = vunpack.c.l.b16 %v201
    %v622 = vunpack.c.h.b16 %v201
    %v623 = vunpack.c.l.b16 %v202
    %v624 = vunpack.c.h.b16 %v202
    %v625 = vunpack.c.l.b16 %v203
    %v626 = vunpack.c.l.b16 %v204
    %v627 = vunpack.c.h.b16 %v204
    %v628 = vunpack.c.l.b16 %v205
    %v629 = vunpack.c.h.b16 %v205
    %v630 = vunpack.c.l.b16 %v206
    %v631 = vunpack.c.h.b16 %v206
    %v632 = vunpack.c.l.b16 %v207
    %v633 = vunpack.c.l.b16 %v208
    %v634 = vunpack.c.h.b16 %v208
    %v635 = vunpack.c.l.b16 %v209
    %v636 = vunpack.c.h.b16 %v209
    %v637 = vunpack.c.l.b16 %v210
    %v638 = vunpack.c.h.b16 %v210
    %v639 = vunpack.c.l.b16 %v211
    %v640 = vunpack.c.l.b16 %v212
    %v641 = vunpack.c.h.b16 %v212
    %v642 = vunpack.c.l.b16 %v213
    %v643 = vunpack.c.h.b16 %v213
    %v644 = vunpack.c.l.b16 %v214
    %v645 = vunpack.c.h.b16 %v214
    %v646 = vunpack.c.l.b16 %v215
    %v647 = vunpack.c.l.b16 %v216
    %v648 = vunpack.c.h.b16 %v216
    %v649 = vunpack.c.l.b16 %v217
    %v650 = vunpack.c.h.b16 %v217
    %v651 = vunpack.c.l.b16 %v218
    %v652 = vunpack.c.h.b16 %v218
    %v653 = vunpack.c.l.b16 %v219
    %v654 = vunpack.c.l.b16 %v220
    %v655 = vunpack.c.h.b16 %v220
    %v656 = vunpack.c.l.b16 %v221
    %v657 = vunpack.c.h.b16 %v221
    %v658 = vunpack.c.l.b16 %v222
    %v659 = vunpack.c.h.b16 %v222
    %v660 = vunpack.c.l.b16 %v223
    %v661 = vunpack.c.l.b16 %v224
    %v662 = vunpack.c.h.b16 %v224
    %v663 = vunpack.c.l.b16 %v225
    %v664 = vunpack.c.h.b16 %v225
    %v665 = vunpack.c.l.b16 %v226
    %v666 = vunpack.c.h.b16 %v226
    %v667 = vunpack.c.l.b16 %v227
    %v668 = vunpack.c.l.b16 %v228
    %v669 = vunpack.c.h.b16 %v228
    %v670 = vunpack.c.l.b16 %v229
    %v671 = vunpack.c.h.b16 %v229
    %v672 = vunpack.c.l.b16 %v230
    %v673 = vunpack.c.h.b16 %v230
    %v674 = vunpack.c.l.b16 %v231
    %v675 = vunpack.c.l.b16 %v232
    %v676 = vunpack.c.h.b16 %v232
    %v677 = vunpack.c.l.b16 %v233
    %v678 = vunpack.c.h.b16 %v233
    %v679 = vunpack.c.l.b16 %v234
    %v680 = vunpack.c.h.b16 %v234
    %v681 = vunpack.c.l.b16 %v235
    %v682 = vunpack.c.l.b16 %v236
    %v683 = vunpack.c.h.b16 %v236
    %v684 = vunpack.c.l.b16 %v237
    %v685 = vunpack.c.h.b16 %v237
    %v686 = vunpack.c.l.b16 %v238
    %v687 = vunpack.c.h.b16 %v238
    %v688 = vunpack.c.l.b16 %v239
    %v689 = vunpack.c.l.b16 %v240
    %v690 = vunpack.c.h.b16 %v240
    %v691 = vunpack.c.l.b16 %v241
    %v692 = vunpack.c.h.b16 %v241
    %v693 = vunpack.c.l.b16 %v242
    %v694 = vunpack.c.h.b16 %v242
    %v695 = vunpack.c.l.b16 %v243
    %v696 = vunpack.c.l.b16 %v244
    %v697 = vunpack.c.h.b16 %v244
    %v698 = vunpack.c.l.b16 %v245
    %v699 = vunpack.c.h.b16 %v245
    %v700 = vunpack.c.l.b16 %v246
    %v701 = vunpack.c.h.b16 %v246
    %v702 = vunpack.c.l.b16 %v247
    %v703 = vunpack.c.l.b16 %v248
    %v704 = vunpack.c.h.b16 %v248
    %v705 = vunpack.c.l.b16 %v249
    %v706 = vunpack.c.h.b16 %v249
    %v707 = vunpack.c.l.b16 %v250
    %v708 = vunpack.c.h.b16 %v250
    %v709 = vunpack.c.l.b16 %v251
    %v710 = vunpack.c.l.b16 %v252
    %v711 = vunpack.c.h.b16 %v252
    %v712 = vunpack.c.l.b16 %v253
    %v713 = vunpack.c.h.b16 %v253
    %v714 = vunpack.c.l.b16 %v254
    %v715 = vunpack.c.h.b16 %v254
    %v716 = vunpack.c.l.b16 %v255
    %v717 = vunpack.c.l.b16 %v256
    %v718 = vunpack.c.h.b16 %v256
    %v719 = vunpack.c.l.b16 %v257
    %v720 = vunpack.c.h.b16 %v257
    %v721 = vunpack.c.l.b16 %v258
    %v722 = vunpack.c.h.b16 %v258
    %v723 = vunpack.c.l.b16 %v259
    %v724 = vunpack.c.l.b16 %v260
    %v725 = vunpack.c.h.b16 %v260
    %v726 = vunpack.c.l.b16 %v261
    %v727 = vunpack.c.h.b16 %v261
    %v728 = vunpack.c.l.b16 %v262
    %v729 = vunpack.c.h.b16 %v262
    %v730 = vunpack.c.l.b16 %v263
    %v731 = vunpack.c.l.b16 %v264
    %v732 = vunpack.c.h.b16 %v264
    %v733 = vunpack.c.l.b16 %v265
    %v734 = vunpack.c.h.b16 %v265
    %v735 = vunpack.c.l.b16 %v266
    %v736 = vunpack.c.h.b16 %v266
    %v737 = vunpack.c.l.b16 %v267
    %v738 = vunpack.c.l.b16 %v268
    %v739 = vunpack.c.h.b16 %v268
    %v740 = vunpack.c.l.b16 %v269
    %v741 = vunpack.c.h.b16 %v269
    %v742 = vunpack.c.l.b16 %v270
    %v743 = vunpack.c.h.b16 %v270
    %v744 = vunpack.c.l.b16 %v271
    %v745 = vunpack.c.l.b16 %v272
    %v746 = vunpack.c.h.b16 %v272
    %v747 = vunpack.c.l.b16 %v273
    %v748 = vunpack.c.h.b16 %v273
    %v749 = vunpack.c.l.b16 %v274
    %v750 = vunpack.c.h.b16 %v274
    %v751 = vunpack.c.l.b16 %v275
    %v752 = vpack.c.b16 %v535, %v528
    %v753 = vpack.c.b16 %v536, %v529
    %v754 = vpack.c.b16 %v537, %v530
    %v755 = vpack.c.b16 %v538, %v531
    %v756 = vpack.c.b16 %v539, %v532
    %v757 = vpack.c.b16 %v540, %v533
    %v758 = vpack.c.b16 %v541, %v534
    %v759 = vpack.c.b16 %v549, %v542
    %v760 = vpack.c.b16 %v550, %v543
    %v761 = vpack.c.b16 %v551, %v544
    %v762 = vpack.c.b16 %v552, %v545
    %v763 = vpack.c.b16 %v553, %v546
    %v764 = vpack.c.b16 %v554, %v547
    %v765 = vpack.c.b16 %v555, %v548
    %v766 = vpack.c.b16 %v563, %v556
    %v767 = vpack.c.b16 %v564, %v557
    %v768 = vpack.c.b16 %v565, %v558
    %v769 = vpack.c.b16 %v566, %v559
    %v770 = vpack.c.b16 %v567, %v560
    %v771 = vpack.c.b16 %v568, %v561
    %v772 = vpack.c.b16 %v569, %v562
    %v773 = vpack.c.b16 %v577, %v570
    %v774 = vpack.c.b16 %v578, %v571
    %v775 = vpack.c.b16 %v579, %v572
    %v776 = vpack.c.b16 %v580, %v573
    %v777 = vpack.c.b16 %v581, %v574
    %v778 = vpack.c.b16 %v582, %v575
    %v779 = vpack.c.b16 %v583, %v576
    %v780 = vpack.c.b16 %v591, %v584
    %v781 = vpack.c.b16 %v592, %v585
    %v782 = vpack.c.b16 %v593, %v586
    %v783 = vpack.c.b16 %v594, %v587
    %v784 = vpack.c.b16 %v595, %v588
    %v785 = vpack.c.b16 %v596, %v589
    %v786 = vpack.c.b16 %v597, %v590
    %v787 = vpack.c.b16 %v605, %v598
    %v788 = vpack.c.b16 %v606, %v599
    %v789 = vpack.c.b16 %v607, %v600
    %v790 = vpack.c.b16 %v608, %v601
    %v791 = vpack.c.b16 %v609, %v602
    %v792 = vpack.c.b16 %v610, %v603
    %v793 = vpack.c.b16 %v611, %v604
    %v794 = vpack.c.b16 %v619, %v612
    %v795 = vpack.c.b16 %v620, %v613
    %v796 = vpack.c.b16 %v621, %v614
    %v797 = vpack.c.b16 %v622, %v615
    %v798 = vpack.c.b16 %v623, %v616
    %v799 = vpack.c.b16 %v624, %v617
    %v800 = vpack.c.b16 %v625, %v618
    %v801 = vpack.c.b16 %v633, %v626
    %v802 = vpack.c.b16 %v634, %v627
    %v803 = vpack.c.b16 %v635, %v628
    %v804 = vpack.c.b16 %v636, %v629
    %v805 = vpack.c.b16 %v637, %v630
    %v806 = vpack.c.b16 %v638, %v631
    %v807 = vpack.c.b16 %v639, %v632
    %v808 = vpack.c.b16 %v647, %v640
    %v809 = vpack.c.b16 %v648, %v641
    %v810 = vpack.c.b16 %v649, %v642
    %v811 = vpack.c.b16 %v650, %v643
    %v812 = vpack.c.b16 %v651, %v644
    %v813 = vpack.c.b16 %v652, %v645
    %v814 = vpack.c.b16 %v653, %v646
    %v815 = vpack.c.b16 %v661, %v654
    %v816 = vpack.c.b16 %v662, %v655
    %v817 = vpack.c.b16 %v663, %v656
    %v818 = vpack.c.b16 %v664, %v657
    %v819 = vpack.c.b16 %v665, %v658
    %v820 = vpack.c.b16 %v666, %v659
    %v821 = vpack.c.b16 %v667, %v660
    %v822 = vpack.c.b16 %v675, %v668
    %v823 = vpack.c.b16 %v676, %v669
    %v824 = vpack.c.b16 %v677, %v670
    %v825 = vpack.c.b16 %v678, %v671
    %v826 = vpack.c.b16 %v679, %v672
    %v827 = vpack.c.b16 %v680, %v673
    %v828 = vpack.c.b16 %v681, %v674
    %v829 = vpack.c.b16 %v689, %v682
    %v830 = vpack.c.b16 %v690, %v683
    %v831 = vpack.c.b16 %v691, %v684
    %v832 = vpack.c.b16 %v692, %v685
    %v833 = vpack.c.b16 %v693, %v686
    %v834 = vpack.c.b16 %v694, %v687
    %v835 = vpack.c.b16 %v695, %v688
    %v836 = vpack.c.b16 %v703, %v696
    %v837 = vpack.c.b16 %v704, %v697
    %v838 = vpack.c.b16 %v705, %v698
    %v839 = vpack.c.b16 %v706, %v699
    %v840 = vpack.c.b16 %v707, %v700
    %v841 = vpack.c.b16 %v708, %v701
    %v842 = vpack.c.b16 %v709, %v702
    %v843 = vpack.c.b16 %v717, %v710
    %v844 = vpack.c.b16 %v718, %v711
    %v845 = vpack.c.b16 %v719, %v712
    %v846 = vpack.c.b16 %v720, %v713
    %v847 = vpack.c.b16 %v721, %v714
    %v848 = vpack.c.b16 %v722, %v715
    %v849 = vpack.c.b16 %v723, %v716
    %v850 = vpack.c.b16 %v731, %v724
    %v851 = vpack.c.b16 %v732, %v725
    %v852 = vpack.c.b16 %v733, %v726
    %v853 = vpack.c.b16 %v734, %v727
    %v854 = vpack.c.b16 %v735, %v728
    %v855 = vpack.c.b16 %v736, %v729
    %v856 = vpack.c.b16 %v737, %v730
    %v857 = vpack.c.b16 %v745, %v738
    %v858 = vpack.c.b16 %v746, %v739
    %v859 = vpack.c.b16 %v747, %v740
    %v860 = vpack.c.b16 %v748, %v741
    %v861 = vpack.c.b16 %v749, %v742
    %v862 = vpack.c.b16 %v750, %v743
    %v863 = vpack.c.b16 %v751, %v744
    %v1088 = vunpack.c.l.b16 %v276
    %v1089 = vunpack.c.h.b16 %v276
    %v1090 = vunpack.c.l.b16 %v277
    %v1091 = vunpack.c.h.b16 %v277
    %v1092 = vunpack.c.l.b16 %v278
    %v1093 = vunpack.c.h.b16 %v278
    %v1094 = vunpack.c.l.b16 %v279
    %v1095 = vunpack.c.h.b16 %v279
    %v1096 = vunpack.c.l.b16 %v280
    %v1097 = vunpack.c.h.b16 %v280
    %v1098 = vunpack.c.l.b16 %v281
    %v1099 = vunpack.c.h.b16 %v281
    %v1100 = vunpack.c.l.b16 %v282
    %v1101 = vunpack.c.h.b16 %v282
    %v1102 = vunpack.c.l.b16 %v283
    %v1103 = vunpack.c.h.b16 %v283
    %v1104 = vunpack.c.l.b16 %v284
    %v1105 = vunpack.c.h.b16 %v284
    %v1106 = vunpack.c.l.b16 %v285
    %v1107 = vunpack.c.h.b16 %v285
    %v1108 = vunpack.c.l.b16 %v286
    %v1109 = vunpack.c.h.b16 %v286
    %v1110 = vunpack.c.l.b16 %v287
    %v1111 = vunpack.c.h.b16 %v287
    %v1112 = vunpack.c.l.b16 %v288
    %v1113 = vunpack.c.h.b16 %v288
    %v1114 = vunpack.c.l.b16 %v289
    %v1115 = vunpack.c.h.b16 %v289
    %v1116 = vunpack.c.l.b16 %v290
    %v1117 = vunpack.c.h.b16 %v290
    %v1118 = vunpack.c.l.b16 %v291
    %v1119 = vunpack.c.h.b16 %v291
    %v1120 = vunpack.c.l.b16 %v292
    %v1121 = vunpack.c.h.b16 %v292
    %v1122 = vunpack.c.l.b16 %v293
    %v1123 = vunpack.c.h.b16 %v293
    %v1124 = vunpack.c.l.b16 %v294
    %v1125 = vunpack.c.h.b16 %v294
    %v1126 = vunpack.c.l.b16 %v295
    %v1127 = vunpack.c.h.b16 %v295
    %v1128 = vunpack.c.l.b16 %v296
    %v1129 = vunpack.c.h.b16 %v296
    %v1130 = vunpack.c.l.b16 %v297
    %v1131 = vunpack.c.h.b16 %v297
    %v1132 = vunpack.c.l.b16 %v298
    %v1133 = vunpack.c.h.b16 %v298
    %v1134 = vunpack.c.l.b16 %v299
    %v1135 = vunpack.c.h.b16 %v299
    %v1136 = vunpack.c.l.b16 %v300
    %v1137 = vunpack.c.h.b16 %v300
    %v1138 = vunpack.c.l.b16 %v301
    %v1139 = vunpack.c.h.b16 %v301
    %v1140 = vunpack.c.l.b16 %v302
    %v1141 = vunpack.c.h.b16 %v302
    %v1142 = vunpack.c.l.b16 %v303
    %v1143 = vunpack.c.h.b16 %v303
    %v1144 = vunpack.c.l.b16 %v304
    %v1145 = vunpack.c.h.b16 %v304
    %v1146 = vunpack.c.l.b16 %v305
    %v1147 = vunpack.c.h.b16 %v305
    %v1148 = vunpack.c.l.b16 %v306
    %v1149 = vunpack.c.h.b16 %v306
    %v1150 = vunpack.c.l.b16 %v307
    %v1151 = vunpack.c.h.b16 %v307
    %v1152 = vunpack.c.l.b16 %v308
    %v1153 = vunpack.c.h.b16 %v308
    %v1154 = vunpack.c.l.b16 %v309
    %v1155 = vunpack.c.h.b16 %v309
    %v1156 = vunpack.c.l.b16 %v310
    %v1157 = vunpack.c.h.b16 %v310
    %v1158 = vunpack.c.l.b16 %v311
    %v1159 = vunpack.c.h.b16 %v311
    %v1160 = vunpack.c.l.b16 %v312
    %v1161 = vunpack.c.h.b16 %v312
    %v1162 = vunpack.c.l.b16 %v313
    %v1163 = vunpack.c.h.b16 %v313
    %v1164 = vunpack.c.l.b16 %v314
    %v1165 = vunpack.c.h.b16 %v314
    %v1166 = vunpack.c.l.b16 %v315
    %v1167 = vunpack.c.h.b16 %v315
    %v1168 = vunpack.c.l.b16 %v316
    %v1169 = vunpack.c.h.b16 %v316
    %v1170 = vunpack.c.l.b16 %v317
    %v1171 = vunpack.c.h.b16 %v317
    %v1172 = vunpack.c.l.b16 %v318
    %v1173 = vunpack.c.h.b16 %v318
    %v1174 = vunpack.c.l.b16 %v319
    %v1175 = vunpack.c.h.b16 %v319
    %v1176 = vunpack.c.l.b16 %v320
    %v1177 = vunpack.c.h.b16 %v320
    %v1178 = vunpack.c.l.b16 %v321
    %v1179 = vunpack.c.h.b16 %v321
    %v1180 = vunpack.c.l.b16 %v322
    %v1181 = vunpack.c.h.b16 %v322
    %v1182 = vunpack.c.l.b16 %v323
    %v1183 = vunpack.c.h.b16 %v323
    %v1184 = vunpack.c.l.b16 %v324
    %v1185 = vunpack.c.h.b16 %v324
    %v1186 = vunpack.c.l.b16 %v325
    %v1187 = vunpack.c.h.b16 %v325
    %v1188 = vunpack.c.l.b16 %v326
    %v1189 = vunpack.c.h.b16 %v326
    %v1190 = vunpack.c.l.b16 %v327
    %v1191 = vunpack.c.h.b16 %v327
    %v1192 = vunpack.c.l.b16 %v328
    %v1193 = vunpack.c.h.b16 %v328
    %v1194 = vunpack.c.l.b16 %v329
    %v1195 = vunpack.c.h.b16 %v329
    %v1196 = vunpack.c.l.b16 %v330
    %v1197 = vunpack.c.h.b16 %v330
    %v1198 = vunpack.c.l.b16 %v331
    %v1199 = vunpack.c.h.b16 %v331
    %v1200 = vunpack.c.l.b16 %v332
    %v1201 = vunpack.c.h.b16 %v332
    %v1202 = vunpack.c.l.b16 %v333
    %v1203 = vunpack.c.h.b16 %v333
    %v1204 = vunpack.c.l.b16 %v334
    %v1205 = vunpack.c.h.b16 %v334
    %v1206 = vunpack.c.l.b16 %v335
    %v1207 = vunpack.c.h.b16 %v335
    %v1208 = vunpack.c.l.b16 %v336
    %v1209 = vunpack.c.h.b16 %v336
    %v1210 = vunpack.c.l.b16 %v337
    %v1211 = vunpack.c.h.b16 %v337
    %v1212 = vunpack.c.l.b16 %v338
    %v1213 = vunpack.c.h.b16 %v338
    %v1214 = vunpack.c.l.b16 %v339
    %v1215 = vunpack.c.h.b16 %v339
    %v1216 = vunpack.c.l.b16 %v340
    %v1217 = vunpack.c.h.b16 %v340
    %v1218 = vunpack.c.l.b16 %v341
    %v1219 = vunpack.c.h.b16 %v341
    %v1220 = vunpack.c.l.b16 %v342
    %v1221 = vunpack.c.h.b16 %v342
    %v1222 = vunpack.c.l.b16 %v343
    %v1223 = vunpack.c.h.b16 %v343
    %v1224 = vunpack.c.l.b16 %v344
    %v1225 = vunpack.c.h.b16 %v344
    %v1226 = vunpack.c.l.b16 %v345
    %v1227 = vunpack.c.h.b16 %v345
    %v1228 = vunpack.c.l.b16 %v346
    %v1229 = vunpack.c.h.b16 %v346
    %v1230 = vunpack.c.l.b16 %v347
    %v1231 = vunpack.c.h.b16 %v347
    %v1232 = vunpack.c.l.b16 %v348
    %v1233 = vunpack.c.h.b16 %v348
    %v1234 = vunpack.c.l.b16 %v349
    %v1235 = vunpack.c.h.b16 %v349
    %v1236 = vunpack.c.l.b16 %v350
    %v1237 = vunpack.c.h.b16 %v350
    %v1238 = vunpack.c.l.b16 %v351
    %v1239 = vunpack.c.h.b16 %v351
    %v1240 = vunpack.c.l.b16 %v352
    %v1241 = vunpack.c.h.b16 %v352
    %v1242 = vunpack.c.l.b16 %v353
    %v1243 = vunpack.c.h.b16 %v353
    %v1244 = vunpack.c.l.b16 %v354
    %v1245 = vunpack.c.h.b16 %v354
    %v1246 = vunpack.c.l.b16 %v355
    %v1247 = vunpack.c.h.b16 %v355
    %v1248 = vunpack.c.l.b16 %v356
    %v1249 = vunpack.c.h.b16 %v356
    %v1250 = vunpack.c.l.b16 %v357
    %v1251 = vunpack.c.h.b16 %v357
    %v1252 = vunpack.c.l.b16 %v358
    %v1253 = vunpack.c.h.b16 %v358
    %v1254 = vunpack.c.l.b16 %v359
    %v1255 = vunpack.c.h.b16 %v359
    %v1256 = vunpack.c.l.b16 %v360
    %v1257 = vunpack.c.h.b16 %v360
    %v1258 = vunpack.c.l.b16 %v361
    %v1259 = vunpack.c.h.b16 %v361
    %v1260 = vunpack.c.l.b16 %v362
    %v1261 = vunpack.c.h.b16 %v362
    %v1262 = vunpack.c.l.b16 %v363
    %v1263 = vunpack.c.h.b16 %v363
    %v1264 = vunpack.c.l.b16 %v364
    %v1265 = vunpack.c.h.b16 %v364
    %v1266 = vunpack.c.l.b16 %v365
    %v1267 = vunpack.c.h.b16 %v365
    %v1268 = vunpack.c.l.b16 %v366
    %v1269 = vunpack.c.h.b16 %v366
    %v1270 = vunpack.c.l.b16 %v367
    %v1271 = vunpack.c.h.b16 %v367
    %v1272 = vunpack.c.l.b16 %v368
    %v1273 = vunpack.c.h.b16 %v368
    %v1274 = vunpack.c.l.b16 %v369
    %v1275 = vunpack.c.h.b16 %v369
    %v1276 = vunpack.c.l.b16 %v370
    %v1277 = vunpack.c.h.b16 %v370
    %v1278 = vunpack.c.l.b16 %v371
    %v1279 = vunpack.c.h.b16 %v371
    %v1280 = vunpack.c.l.b16 %v372
    %v1281 = vunpack.c.h.b16 %v372
    %v1282 = vunpack.c.l.b16 %v373
    %v1283 = vunpack.c.h.b16 %v373
    %v1284 = vunpack.c.l.b16 %v374
    %v1285 = vunpack.c.h.b16 %v374
    %v1286 = vunpack.c.l.b16 %v375
    %v1287 = vunpack.c.h.b16 %v375
    %v1288 = vunpack.c.l.b16 %v376
    %v1289 = vunpack.c.h.b16 %v376
    %v1290 = vunpack.c.l.b16 %v377
    %v1291 = vunpack.c.h.b16 %v377
    %v1292 = vunpack.c.l.b16 %v378
    %v1293 = vunpack.c.h.b16 %v378
    %v1294 = vunpack.c.l.b16 %v379
    %v1295 = vunpack.c.h.b16 %v379
    %v1296 = vunpack.c.l.b16 %v380
    %v1297 = vunpack.c.h.b16 %v380
    %v1298 = vunpack.c.l.b16 %v381
    %v1299 = vunpack.c.h.b16 %v381
    %v1300 = vunpack.c.l.b16 %v382
    %v1301 = vunpack.c.h.b16 %v382
    %v1302 = vunpack.c.l.b16 %v383
    %v1303 = vunpack.c.h.b16 %v383
    %v1304 = vunpack.c.l.b16 %v384
    %v1305 = vunpack.c.h.b16 %v384
    %v1306 = vunpack.c.l.b16 %v385
    %v1307 = vunpack.c.h.b16 %v385
    %v1308 = vunpack.c.l.b16 %v386
    %v1309 = vunpack.c.h.b16 %v386
    %v1310 = vunpack.c.l.b16 %v387
    %v1311 = vunpack.c.h.b16 %v387
    %v1312 = vpack.c.b16 %v1090, %v1088
    %v1313 = vpack.c.b16 %v1091, %v1089
    %v1314 = vpack.c.b16 %v1094, %v1092
    %v1315 = vpack.c.b16 %v1095, %v1093
    %v1316 = vpack.c.b16 %v1098, %v1096
    %v1317 = vpack.c.b16 %v1099, %v1097
    %v1318 = vpack.c.b16 %v1102, %v1100
    %v1319 = vpack.c.b16 %v1103, %v1101
    %v1320 = vpack.c.b16 %v1106, %v1104
    %v1321 = vpack.c.b16 %v1107, %v1105
    %v1322 = vpack.c.b16 %v1110, %v1108
    %v1323 = vpack.c.b16 %v1111, %v1109
    %v1324 = vpack.c.b16 %v1114, %v1112
    %v1325 = vpack.c.b16 %v1115, %v1113
    %v1326 = vpack.c.b16 %v1118, %v1116
    %v1327 = vpack.c.b16 %v1119, %v1117
    %v1328 = vpack.c.b16 %v1122, %v1120
    %v1329 = vpack.c.b16 %v1123, %v1121
    %v1330 = vpack.c.b16 %v1126, %v1124
    %v1331 = vpack.c.b16 %v1127, %v1125
    %v1332 = vpack.c.b16 %v1130, %v1128
    %v1333 = vpack.c.b16 %v1131, %v1129
    %v1334 = vpack.c.b16 %v1134, %v1132
    %v1335 = vpack.c.b16 %v1135, %v1133
    %v1336 = vpack.c.b16 %v1138, %v1136
    %v1337 = vpack.c.b16 %v1139, %v1137
    %v1338 = vpack.c.b16 %v1142, %v1140
    %v1339 = vpack.c.b16 %v1143, %v1141
    %v1340 = vpack.c.b16 %v1146, %v1144
    %v1341 = vpack.c.b16 %v1147, %v1145
    %v1342 = vpack.c.b16 %v1150, %v1148
    %v1343 = vpack.c.b16 %v1151, %v1149
    %v1344 = vpack.c.b16 %v1154, %v1152
    %v1345 = vpack.c.b16 %v1155, %v1153
    %v1346 = vpack.c.b16 %v1158, %v1156
    %v1347 = vpack.c.b16 %v1159, %v1157
    %v1348 = vpack.c.b16 %v1162, %v1160
    %v1349 = vpack.c.b16 %v1163, %v1161
    %v1350 = vpack.c.b16 %v1166, %v1164
    %v1351 = vpack.c.b16 %v1167, %v1165
    %v1352 = vpack.c.b16 %v1170, %v1168
    %v1353 = vpack.c.b16 %v1171, %v1169
    %v1354 = vpack.c.b16 %v1174, %v1172
    %v1355 = vpack.c.b16 %v1175, %v1173
    %v1356 = vpack.c.b16 %v1178, %v1176
    %v1357 = vpack.c.b16 %v1179, %v1177
    %v1358 = vpack.c.b16 %v1182, %v1180
    %v1359 = vpack.c.b16 %v1183, %v1181
    %v1360 = vpack.c.b16 %v1186, %v1184
    %v1361 = vpack.c.b16 %v1187, %v1185
    %v1362 = vpack.c.b16 %v1190, %v1188
    %v1363 = vpack.c.b16 %v1191, %v1189
    %v1364 = vpack.c.b16 %v1194, %v1192
    %v1365 = vpack.c.b16 %v1195, %v1193
    %v1366 = vpack.c.b16 %v1198, %v1196
    %v1367 = vpack.c.b16 %v1199, %v1197
    %v1368 = vpack.c.b16 %v1202, %v1200
    %v1369 = vpack.c.b16 %v1203, %v1201
    %v1370 = vpack.c.b16 %v1206, %v1204
    %v1371 = vpack.c.b16 %v1207, %v1205
    %v1372 = vpack.c.b16 %v1210, %v1208
    %v1373 = vpack.c.b16 %v1211, %v1209
    %v1374 = vpack.c.b16 %v1214, %v1212
    %v1375 = vpack.c.b16 %v1215, %v1213
    %v1376 = vpack.c.b16 %v1218, %v1216
    %v1377 = vpack.c.b16 %v1219, %v1217
    %v1378 = vpack.c.b16 %v1222, %v1220
    %v1379 = vpack.c.b16 %v1223, %v1221
    %v1380 = vpack.c.b16 %v1226, %v1224
    %v1381 = vpack.c.b16 %v1227, %v1225
    %v1382 = vpack.c.b16 %v1230, %v1228
    %v1383 = vpack.c.b16 %v1231, %v1229
    %v1384 = vpack.c.b16 %v1234, %v1232
    %v1385 = vpack.c.b16 %v1235, %v1233
    %v1386 = vpack.c.b16 %v1238, %v1236
    %v1387 = vpack.c.b16 %v1239, %v1237
    %v1388 = vpack.c.b16 %v1242, %v1240
    %v1389 = vpack.c.b16 %v1243, %v1241
    %v1390 = vpack.c.b16 %v1246, %v1244
    %v1391 = vpack.c.b16 %v1247, %v1245
    %v1392 = vpack.c.b16 %v1250, %v1248
    %v1393 = vpack.c.b16 %v1251, %v1249
    %v1394 = vpack.c.b16 %v1254, %v1252
    %v1395 = vpack.c.b16 %v1255, %v1253
    %v1396 = vpack.c.b16 %v1258, %v1256
    %v1397 = vpack.c.b16 %v1259, %v1257
    %v1398 = vpack.c.b16 %v1262, %v1260
    %v1399 = vpack.c.b16 %v1263, %v1261
    %v1400 = vpack.c.b16 %v1266, %v1264
    %v1401 = vpack.c.b16 %v1267, %v1265
    %v1402 = vpack.c.b16 %v1270, %v1268
    %v1403 = vpack.c.b16 %v1271, %v1269
    %v1404 = vpack.c.b16 %v1274, %v1272
    %v1405 = vpack.c.b16 %v1275, %v1273
    %v1406 = vpack.c.b16 %v1278, %v1276
    %v1407 = vpack.c.b16 %v1279, %v1277
    %v1408 = vpack.c.b16 %v1282, %v1280
    %v1409 = vpack.c.b16 %v1283, %v1281
    %v1410 = vpack.c.b16 %v1286, %v1284
    %v1411 = vpack.c.b16 %v1287, %v1285
    %v1412 = vpack.c.b16 %v1290, %v1288
    %v1413 = vpack.c.b16 %v1291, %v1289
    %v1414 = vpack.c.b16 %v1294, %v1292
    %v1415 = vpack.c.b16 %v1295, %v1293
    %v1416 = vpack.c.b16 %v1298, %v1296
    %v1417 = vpack.c.b16 %v1299, %v1297
    %v1418 = vpack.c.b16 %v1302, %v1300
    %v1419 = vpack.c.b16 %v1303, %v1301
    %v1420 = vpack.c.b16 %v1306, %v1304
    %v1421 = vpack.c.b16 %v1307, %v1305
    %v1422 = vpack.c.b16 %v1310, %v1308
    %v1423 = vpack.c.b16 %v1311, %v1309
    %1536 = vmatprep.subr.bf16.mxu0 %v1313
    %1537 = vmatpush1.bf16.msra.mxu0 %v1312
    %1538 = vmatprep.subr.bf16.mxu0 %v1315
    %1539 = vmatpush1.bf16.msra.mxu0 %v1314
    %1540 = vmatprep.subr.bf16.mxu0 %v1317
    %1541 = vmatpush1.bf16.msra.mxu0 %v1316
    %1542 = vmatprep.subr.bf16.mxu0 %v1319
    %1543 = vmatpush1.bf16.msra.mxu0 %v1318
    %1544 = vmatprep.subr.bf16.mxu0 %v1321
    %1545 = vmatpush1.bf16.msra.mxu0 %v1320
    %1546 = vmatprep.subr.bf16.mxu0 %v1323
    %1547 = vmatpush1.bf16.msra.mxu0 %v1322
    %1548 = vmatprep.subr.bf16.mxu0 %v1325
    %1549 = vmatpush1.bf16.msra.mxu0 %v1324
    %1550 = vmatprep.subr.bf16.mxu0 %v1327
    %1551 = vmatpush1.bf16.msra.mxu0 %v1326
    %1552 = vmatprep.subr.bf16.mxu0 %v1329
    %1553 = vmatpush1.bf16.msra.mxu0 %v1328
    %1554 = vmatprep.subr.bf16.mxu0 %v1331
    %1555 = vmatpush1.bf16.msra.mxu0 %v1330
    %1556 = vmatprep.subr.bf16.mxu0 %v1333
    %1557 = vmatpush1.bf16.msra.mxu0 %v1332
    %1558 = vmatprep.subr.bf16.mxu0 %v1335
    %1559 = vmatpush1.bf16.msra.mxu0 %v1334
    %1560 = vmatprep.subr.bf16.mxu0 %v1337
    %1561 = vmatpush1.bf16.msra.mxu0 %v1336
    %1562 = vmatprep.subr.bf16.mxu0 %v1339
    %1563 = vmatpush1.bf16.msra.mxu0 %v1338
    %1564 = vmatprep.subr.bf16.mxu0 %v1341
    %1565 = vmatpush1.bf16.msra.mxu0 %v1340
    %1566 = vmatprep.subr.bf16.mxu0 %v1343
    %1567 = vmatpush1.bf16.msra.mxu0 %v1342
    %1568 = vmatprep.mubr.bf16.mxu0 %v753
    %1569 = vmatmul.mubr.bf16.gmra.mrb[0].mxu0 %v752
    %v1570 = vpop.f32.mrb[0].mxu0
    %v1571 = vadd.f32 %v393, %v1570
    %v1572 = vpop.f32.mrb[0].mxu0
    %v1573 = vadd.f32 %v397, %v1572
    %v1574 = vpop.f32.mrb[0].mxu0
    %v1575 = vadd.f32 %v393, %v1574
    %v1576 = vpop.f32.mrb[0].mxu0
    %v1577 = vadd.f32 %v397, %v1576
    %1578 = vmatprep.mubr.bf16.mxu0 %v760
    %1579 = vmatmul.mubr.bf16.gmra.mrb[0].mxu0 %v759
    %v1580 = vpop.f32.mrb[0].mxu0
    %v1581 = vadd.f32 %v393, %v1580
    %v1582 = vpop.f32.mrb[0].mxu0
    %v1583 = vadd.f32 %v397, %v1582
    %v1584 = vpop.f32.mrb[0].mxu0
    %v1585 = vadd.f32 %v393, %v1584
    %v1586 = vpop.f32.mrb[0].mxu0
    %v1587 = vadd.f32 %v397, %v1586
    %1588 = vmatprep.mubr.bf16.mxu0 %v767
    %1589 = vmatmul.mubr.bf16.gmra.mrb[0].mxu0 %v766
    %v1590 = vpop.f32.mrb[0].mxu0
    %v1591 = vadd.f32 %v393, %v1590
    %v1592 = vpop.f32.mrb[0].mxu0
    %v1593 = vadd.f32 %v397, %v1592
    %v1594 = vpop.f32.mrb[0].mxu0
    %v1595 = vadd.f32 %v393, %v1594
    %v1596 = vpop.f32.mrb[0].mxu0
    %v1597 = vadd.f32 %v397, %v1596
    %1598 = vmatprep.mubr.bf16.mxu0 %v774
    %1599 = vmatmul.mubr.bf16.gmra.mrb[0].mxu0 %v773
    %v1600 = vpop.f32.mrb[0].mxu0
    %v1601 = vadd.f32 %v393, %v1600
    %v1602 = vpop.f32.mrb[0].mxu0
    %v1603 = vadd.f32 %v397, %v1602
    %v1604 = vpop.f32.mrb[0].mxu0
    %v1605 = vadd.f32 %v393, %v1604
    %v1606 = vpop.f32.mrb[0].mxu0
    %v1607 = vadd.f32 %v397, %v1606
    %1608 = vmatprep.mubr.bf16.mxu0 %v781
    %1609 = vmatmul.mubr.bf16.gmra.mrb[0].mxu0 %v780
    %v1610 = vpop.f32.mrb[0].mxu0
    %v1611 = vadd.f32 %v393, %v1610
    %v1612 = vpop.f32.mrb[0].mxu0
    %v1613 = vadd.f32 %v397, %v1612
    %v1614 = vpop.f32.mrb[0].mxu0
    %v1615 = vadd.f32 %v393, %v1614
    %v1616 = vpop.f32.mrb[0].mxu0
    %v1617 = vadd.f32 %v397, %v1616
    %1618 = vmatprep.mubr.bf16.mxu0 %v788
    %1619 = vmatmul.mubr.bf16.gmra.mrb[0].mxu0 %v787
    %v1620 = vpop.f32.mrb[0].mxu0
    %v1621 = vadd.f32 %v393, %v1620
    %v1622 = vpop.f32.mrb[0].mxu0
    %v1623 = vadd.f32 %v397, %v1622
    %v1624 = vpop.f32.mrb[0].mxu0
    %v1625 = vadd.f32 %v393, %v1624
    %v1626 = vpop.f32.mrb[0].mxu0
    %v1627 = vadd.f32 %v397, %v1626
    %1628 = vmatprep.mubr.bf16.mxu0 %v795
    %1629 = vmatmul.mubr.bf16.gmra.mrb[0].mxu0 %v794
    %v1630 = vpop.f32.mrb[0].mxu0
    %v1631 = vadd.f32 %v393, %v1630
    %v1632 = vpop.f32.mrb[0].mxu0
    %v1633 = vadd.f32 %v397, %v1632
    %v1634 = vpop.f32.mrb[0].mxu0
    %v1635 = vadd.f32 %v393, %v1634
    %v1636 = vpop.f32.mrb[0].mxu0
    %v1637 = vadd.f32 %v397, %v1636
    %1638 = vmatprep.mubr.bf16.mxu0 %v802
    %1639 = vmatmul.mubr.bf16.gmra.mrb[0].mxu0 %v801
    %v1640 = vpop.f32.mrb[0].mxu0
    %v1641 = vadd.f32 %v393, %v1640
    %v1642 = vpop.f32.mrb[0].mxu0
    %v1643 = vadd.f32 %v397, %v1642
    %v1644 = vpop.f32.mrb[0].mxu0
    %v1645 = vadd.f32 %v393, %v1644
    %v1646 = vpop.f32.mrb[0].mxu0
    %v1647 = vadd.f32 %v397, %v1646
    %1648 = vmatprep.mubr.bf16.mxu0 %v809
    %1649 = vmatmul.mubr.bf16.gmra.mrb[0].mxu0 %v808
    %v1650 = vpop.f32.mrb[0].mxu0
    %v1651 = vadd.f32 %v393, %v1650
    %v1652 = vpop.f32.mrb[0].mxu0
    %v1653 = vadd.f32 %v397, %v1652
    %v1654 = vpop.f32.mrb[0].mxu0
    %v1655 = vadd.f32 %v393, %v1654
    %v1656 = vpop.f32.mrb[0].mxu0
    %v1657 = vadd.f32 %v397, %v1656
    %1658 = vmatprep.mubr.bf16.mxu0 %v816
    %1659 = vmatmul.mubr.bf16.gmra.mrb[0].mxu0 %v815
    %v1660 = vpop.f32.mrb[0].mxu0
    %v1661 = vadd.f32 %v393, %v1660
    %v1662 = vpop.f32.mrb[0].mxu0
    %v1663 = vadd.f32 %v397, %v1662
    %v1664 = vpop.f32.mrb[0].mxu0
    %v1665 = vadd.f32 %v393, %v1664
    %v1666 = vpop.f32.mrb[0].mxu0
    %v1667 = vadd.f32 %v397, %v1666
    %1668 = vmatprep.mubr.bf16.mxu0 %v823
    %1669 = vmatmul.mubr.bf16.gmra.mrb[0].mxu0 %v822
    %v1670 = vpop.f32.mrb[0].mxu0
    %v1671 = vadd.f32 %v393, %v1670
    %v1672 = vpop.f32.mrb[0].mxu0
    %v1673 = vadd.f32 %v397, %v1672
    %v1674 = vpop.f32.mrb[0].mxu0
    %v1675 = vadd.f32 %v393, %v1674
    %v1676 = vpop.f32.mrb[0].mxu0
    %v1677 = vadd.f32 %v397, %v1676
    %1678 = vmatprep.mubr.bf16.mxu0 %v830
    %1679 = vmatmul.mubr.bf16.gmra.mrb[0].mxu0 %v829
    %v1680 = vpop.f32.mrb[0].mxu0
    %v1681 = vadd.f32 %v393, %v1680
    %v1682 = vpop.f32.mrb[0].mxu0
    %v1683 = vadd.f32 %v397, %v1682
    %v1684 = vpop.f32.mrb[0].mxu0
    %v1685 = vadd.f32 %v393, %v1684
    %v1686 = vpop.f32.mrb[0].mxu0
    %v1687 = vadd.f32 %v397, %v1686
    %1688 = vmatprep.mubr.bf16.mxu0 %v837
    %1689 = vmatmul.mubr.bf16.gmra.mrb[0].mxu0 %v836
    %v1690 = vpop.f32.mrb[0].mxu0
    %v1691 = vadd.f32 %v393, %v1690
    %v1692 = vpop.f32.mrb[0].mxu0
    %v1693 = vadd.f32 %v397, %v1692
    %v1694 = vpop.f32.mrb[0].mxu0
    %v1695 = vadd.f32 %v393, %v1694
    %v1696 = vpop.f32.mrb[0].mxu0
    %v1697 = vadd.f32 %v397, %v1696
    %1698 = vmatprep.mubr.bf16.mxu0 %v844
    %1699 = vmatmul.mubr.bf16.gmra.mrb[0].mxu0 %v843
    %v1700 = vpop.f32.mrb[0].mxu0
    %v1701 = vadd.f32 %v393, %v1700
    %v1702 = vpop.f32.mrb[0].mxu0
    %v1703 = vadd.f32 %v397, %v1702
    %v1704 = vpop.f32.mrb[0].mxu0
    %v1705 = vadd.f32 %v393, %v1704
    %v1706 = vpop.f32.mrb[0].mxu0
    %v1707 = vadd.f32 %v397, %v1706
    %1708 = vmatprep.mubr.bf16.mxu0 %v851
    %1709 = vmatmul.mubr.bf16.gmra.mrb[0].mxu0 %v850
    %v1710 = vpop.f32.mrb[0].mxu0
    %v1711 = vadd.f32 %v393, %v1710
    %v1712 = vpop.f32.mrb[0].mxu0
    %v1713 = vadd.f32 %v397, %v1712
    %v1714 = vpop.f32.mrb[0].mxu0
    %v1715 = vadd.f32 %v393, %v1714
    %v1716 = vpop.f32.mrb[0].mxu0
    %v1717 = vadd.f32 %v397, %v1716
    %1718 = vmatprep.mubr.bf16.mxu0 %v858
    %1719 = vmatmul.mubr.bf16.gmra.mrb[0].mxu0 %v857
    %v1720 = vpop.f32.mrb[0].mxu0
    %v1721 = vadd.f32 %v393, %v1720
    %v1722 = vpop.f32.mrb[0].mxu0
    %v1723 = vadd.f32 %v397, %v1722
    %v1724 = vpop.f32.mrb[0].mxu0
    %v1725 = vadd.f32 %v393, %v1724
    %v1726 = vpop.f32.mrb[0].mxu0
    %v1727 = vadd.f32 %v397, %v1726
    %1728 = vdwg.mxu0
    %1729 = vmatprep.subr.bf16.mxu0 %v1345
    %1730 = vmatpush1.bf16.msra.mxu0 %v1344
    %1731 = vmatprep.subr.bf16.mxu0 %v1347
    %1732 = vmatpush1.bf16.msra.mxu0 %v1346
    %1733 = vmatprep.subr.bf16.mxu0 %v1349
    %1734 = vmatpush1.bf16.msra.mxu0 %v1348
    %1735 = vmatprep.subr.bf16.mxu0 %v1351
    %1736 = vmatpush1.bf16.msra.mxu0 %v1350
    %1737 = vmatprep.subr.bf16.mxu0 %v1353
    %1738 = vmatpush1.bf16.msra.mxu0 %v1352
    %1739 = vmatprep.subr.bf16.mxu0 %v1355
    %1740 = vmatpush1.bf16.msra.mxu0 %v1354
    %1741 = vmatprep.subr.bf16.mxu0 %v1357
    %1742 = vmatpush1.bf16.msra.mxu0 %v1356
    %1743 = vmatprep.subr.bf16.mxu0 %v1359
    %1744 = vmatpush1.bf16.msra.mxu0 %v1358
    %1745 = vmatprep.subr.bf16.mxu0 %v1361
    %1746 = vmatpush1.bf16.msra.mxu0 %v1360
    %1747 = vmatprep.subr.bf16.mxu0 %v1363
    %1748 = vmatpush1.bf16.msra.mxu0 %v1362
    %1749 = vmatprep.subr.bf16.mxu0 %v1365
    %1750 = vmatpush1.bf16.msra.mxu0 %v1364
    %1751 = vmatprep.subr.bf16.mxu0 %v1367
    %1752 = vmatpush1.bf16.msra.mxu0 %v1366
    %1753 = vmatprep.subr.bf16.mxu0 %v1369
    %1754 = vmatpush1.bf16.msra.mxu0 %v1368
    %1755 = vmatprep.subr.bf16.mxu0 %v1371
    %1756 = vmatpush1.bf16.msra.mxu0 %v1370
    %1757 = vmatprep.subr.bf16.mxu0 %v1373
    %1758 = vmatpush1.bf16.msra.mxu0 %v1372
    %1759 = vmatprep.subr.bf16.mxu0 %v1375
    %1760 = vmatpush1.bf16.msra.mxu0 %v1374
    %1761 = vmatprep.mubr.bf16.mxu0 %v755
    %1762 = vmatmul.mubr.bf16.gmra.mrb[0].mxu0 %v754
    %v1763 = vpop.f32.mrb[0].mxu0
    %v1764 = vadd.f32 %v1571, %v1763
    %v1765 = vpop.f32.mrb[0].mxu0
    %v1766 = vadd.f32 %v1573, %v1765
    %v1767 = vpop.f32.mrb[0].mxu0
    %v1768 = vadd.f32 %v1575, %v1767
    %v1769 = vpop.f32.mrb[0].mxu0
    %v1770 = vadd.f32 %v1577, %v1769
    %1771 = vmatprep.mubr.bf16.mxu0 %v762
    %1772 = vmatmul.mubr.bf16.gmra.mrb[0].mxu0 %v761
    %v1773 = vpop.f32.mrb[0].mxu0
    %v1774 = vadd.f32 %v1581, %v1773
    %v1775 = vpop.f32.mrb[0].mxu0
    %v1776 = vadd.f32 %v1583, %v1775
    %v1777 = vpop.f32.mrb[0].mxu0
    %v1778 = vadd.f32 %v1585, %v1777
    %v1779 = vpop.f32.mrb[0].mxu0
    %v1780 = vadd.f32 %v1587, %v1779
    %1781 = vmatprep.mubr.bf16.mxu0 %v769
    %1782 = vmatmul.mubr.bf16.gmra.mrb[0].mxu0 %v768
    %v1783 = vpop.f32.mrb[0].mxu0
    %v1784 = vadd.f32 %v1591, %v1783
    %v1785 = vpop.f32.mrb[0].mxu0
    %v1786 = vadd.f32 %v1593, %v1785
    %v1787 = vpop.f32.mrb[0].mxu0
    %v1788 = vadd.f32 %v1595, %v1787
    %v1789 = vpop.f32.mrb[0].mxu0
    %v1790 = vadd.f32 %v1597, %v1789
    %1791 = vmatprep.mubr.bf16.mxu0 %v776
    %1792 = vmatmul.mubr.bf16.gmra.mrb[0].mxu0 %v775
    %v1793 = vpop.f32.mrb[0].mxu0
    %v1794 = vadd.f32 %v1601, %v1793
    %v1795 = vpop.f32.mrb[0].mxu0
    %v1796 = vadd.f32 %v1603, %v1795
    %v1797 = vpop.f32.mrb[0].mxu0
    %v1798 = vadd.f32 %v1605, %v1797
    %v1799 = vpop.f32.mrb[0].mxu0
    %v1800 = vadd.f32 %v1607, %v1799
    %1801 = vmatprep.mubr.bf16.mxu0 %v783
    %1802 = vmatmul.mubr.bf16.gmra.mrb[0].mxu0 %v782
    %v1803 = vpop.f32.mrb[0].mxu0
    %v1804 = vadd.f32 %v1611, %v1803
    %v1805 = vpop.f32.mrb[0].mxu0
    %v1806 = vadd.f32 %v1613, %v1805
    %v1807 = vpop.f32.mrb[0].mxu0
    %v1808 = vadd.f32 %v1615, %v1807
    %v1809 = vpop.f32.mrb[0].mxu0
    %v1810 = vadd.f32 %v1617, %v1809
    %1811 = vmatprep.mubr.bf16.mxu0 %v790
    %1812 = vmatmul.mubr.bf16.gmra.mrb[0].mxu0 %v789
    %v1813 = vpop.f32.mrb[0].mxu0
    %v1814 = vadd.f32 %v1621, %v1813
    %v1815 = vpop.f32.mrb[0].mxu0
    %v1816 = vadd.f32 %v1623, %v1815
    %v1817 = vpop.f32.mrb[0].mxu0
    %v1818 = vadd.f32 %v1625, %v1817
    %v1819 = vpop.f32.mrb[0].mxu0
    %v1820 = vadd.f32 %v1627, %v1819
    %1821 = vmatprep.mubr.bf16.mxu0 %v797
    %1822 = vmatmul.mubr.bf16.gmra.mrb[0].mxu0 %v796
    %v1823 = vpop.f32.mrb[0].mxu0
    %v1824 = vadd.f32 %v1631, %v1823
    %v1825 = vpop.f32.mrb[0].mxu0
    %v1826 = vadd.f32 %v1633, %v1825
    %v1827 = vpop.f32.mrb[0].mxu0
    %v1828 = vadd.f32 %v1635, %v1827
    %v1829 = vpop.f32.mrb[0].mxu0
    %v1830 = vadd.f32 %v1637, %v1829
    %1831 = vmatprep.mubr.bf16.mxu0 %v804
    %1832 = vmatmul.mubr.bf16.gmra.mrb[0].mxu0 %v803
    %v1833 = vpop.f32.mrb[0].mxu0
    %v1834 = vadd.f32 %v1641, %v1833
    %v1835 = vpop.f32.mrb[0].mxu0
    %v1836 = vadd.f32 %v1643, %v1835
    %v1837 = vpop.f32.mrb[0].mxu0
    %v1838 = vadd.f32 %v1645, %v1837
    %v1839 = vpop.f32.mrb[0].mxu0
    %v1840 = vadd.f32 %v1647, %v1839
    %1841 = vmatprep.mubr.bf16.mxu0 %v811
    %1842 = vmatmul.mubr.bf16.gmra.mrb[0].mxu0 %v810
    %v1843 = vpop.f32.mrb[0].mxu0
    %v1844 = vadd.f32 %v1651, %v1843
    %v1845 = vpop.f32.mrb[0].mxu0
    %v1846 = vadd.f32 %v1653, %v1845
    %v1847 = vpop.f32.mrb[0].mxu0
    %v1848 = vadd.f32 %v1655, %v1847
    %v1849 = vpop.f32.mrb[0].mxu0
    %v1850 = vadd.f32 %v1657, %v1849
    %1851 = vmatprep.mubr.bf16.mxu0 %v818
    %1852 = vmatmul.mubr.bf16.gmra.mrb[0].mxu0 %v817
    %v1853 = vpop.f32.mrb[0].mxu0
    %v1854 = vadd.f32 %v1661, %v1853
    %v1855 = vpop.f32.mrb[0].mxu0
    %v1856 = vadd.f32 %v1663, %v1855
    %v1857 = vpop.f32.mrb[0].mxu0
    %v1858 = vadd.f32 %v1665, %v1857
    %v1859 = vpop.f32.mrb[0].mxu0
    %v1860 = vadd.f32 %v1667, %v1859
    %1861 = vmatprep.mubr.bf16.mxu0 %v825
    %1862 = vmatmul.mubr.bf16.gmra.mrb[0].mxu0 %v824
    %v1863 = vpop.f32.mrb[0].mxu0
    %v1864 = vadd.f32 %v1671, %v1863
    %v1865 = vpop.f32.mrb[0].mxu0
    %v1866 = vadd.f32 %v1673, %v1865
    %v1867 = vpop.f32.mrb[0].mxu0
    %v1868 = vadd.f32 %v1675, %v1867
    %v1869 = vpop.f32.mrb[0].mxu0
    %v1870 = vadd.f32 %v1677, %v1869
    %1871 = vmatprep.mubr.bf16.mxu0 %v832
    %1872 = vmatmul.mubr.bf16.gmra.mrb[0].mxu0 %v831
    %v1873 = vpop.f32.mrb[0].mxu0
    %v1874 = vadd.f32 %v1681, %v1873
    %v1875 = vpop.f32.mrb[0].mxu0
    %v1876 = vadd.f32 %v1683, %v1875
    %v1877 = vpop.f32.mrb[0].mxu0
    %v1878 = vadd.f32 %v1685, %v1877
    %v1879 = vpop.f32.mrb[0].mxu0
    %v1880 = vadd.f32 %v1687, %v1879
    %1881 = vmatprep.mubr.bf16.mxu0 %v839
    %1882 = vmatmul.mubr.bf16.gmra.mrb[0].mxu0 %v838
    %v1883 = vpop.f32.mrb[0].mxu0
    %v1884 = vadd.f32 %v1691, %v1883
    %v1885 = vpop.f32.mrb[0].mxu0
    %v1886 = vadd.f32 %v1693, %v1885
    %v1887 = vpop.f32.mrb[0].mxu0
    %v1888 = vadd.f32 %v1695, %v1887
    %v1889 = vpop.f32.mrb[0].mxu0
    %v1890 = vadd.f32 %v1697, %v1889
    %1891 = vmatprep.mubr.bf16.mxu0 %v846
    %1892 = vmatmul.mubr.bf16.gmra.mrb[0].mxu0 %v845
    %v1893 = vpop.f32.mrb[0].mxu0
    %v1894 = vadd.f32 %v1701, %v1893
    %v1895 = vpop.f32.mrb[0].mxu0
    %v1896 = vadd.f32 %v1703, %v1895
    %v1897 = vpop.f32.mrb[0].mxu0
    %v1898 = vadd.f32 %v1705, %v1897
    %v1899 = vpop.f32.mrb[0].mxu0
    %v1900 = vadd.f32 %v1707, %v1899
    %1901 = vmatprep.mubr.bf16.mxu0 %v853
    %1902 = vmatmul.mubr.bf16.gmra.mrb[0].mxu0 %v852
    %v1903 = vpop.f32.mrb[0].mxu0
    %v1904 = vadd.f32 %v1711, %v1903
    %v1905 = vpop.f32.mrb[0].mxu0
    %v1906 = vadd.f32 %v1713, %v1905
    %v1907 = vpop.f32.mrb[0].mxu0
    %v1908 = vadd.f32 %v1715, %v1907
    %v1909 = vpop.f32.mrb[0].mxu0
    %v1910 = vadd.f32 %v1717, %v1909
    %1911 = vmatprep.mubr.bf16.mxu0 %v860
    %1912 = vmatmul.mubr.bf16.gmra.mrb[0].mxu0 %v859
    %v1913 = vpop.f32.mrb[0].mxu0
    %v1914 = vadd.f32 %v1721, %v1913
    %v1915 = vpop.f32.mrb[0].mxu0
    %v1916 = vadd.f32 %v1723, %v1915
    %v1917 = vpop.f32.mrb[0].mxu0
    %v1918 = vadd.f32 %v1725, %v1917
    %v1919 = vpop.f32.mrb[0].mxu0
    %v1920 = vadd.f32 %v1727, %v1919
    %1921 = vdwg.mxu0
    %1922 = vmatprep.subr.bf16.mxu0 %v1377
    %1923 = vmatpush1.bf16.msra.mxu0 %v1376
    %1924 = vmatprep.subr.bf16.mxu0 %v1379
    %1925 = vmatpush1.bf16.msra.mxu0 %v1378
    %1926 = vmatprep.subr.bf16.mxu0 %v1381
    %1927 = vmatpush1.bf16.msra.mxu0 %v1380
    %1928 = vmatprep.subr.bf16.mxu0 %v1383
    %1929 = vmatpush1.bf16.msra.mxu0 %v1382
    %1930 = vmatprep.subr.bf16.mxu0 %v1385
    %1931 = vmatpush1.bf16.msra.mxu0 %v1384
    %1932 = vmatprep.subr.bf16.mxu0 %v1387
    %1933 = vmatpush1.bf16.msra.mxu0 %v1386
    %1934 = vmatprep.subr.bf16.mxu0 %v1389
    %1935 = vmatpush1.bf16.msra.mxu0 %v1388
    %1936 = vmatprep.subr.bf16.mxu0 %v1391
    %1937 = vmatpush1.bf16.msra.mxu0 %v1390
    %1938 = vmatprep.subr.bf16.mxu0 %v1393
    %1939 = vmatpush1.bf16.msra.mxu0 %v1392
    %1940 = vmatprep.subr.bf16.mxu0 %v1395
    %1941 = vmatpush1.bf16.msra.mxu0 %v1394
    %1942 = vmatprep.subr.bf16.mxu0 %v1397
    %1943 = vmatpush1.bf16.msra.mxu0 %v1396
    %1944 = vmatprep.subr.bf16.mxu0 %v1399
    %1945 = vmatpush1.bf16.msra.mxu0 %v1398
    %1946 = vmatprep.subr.bf16.mxu0 %v1401
    %1947 = vmatpush1.bf16.msra.mxu0 %v1400
    %1948 = vmatprep.subr.bf16.mxu0 %v1403
    %1949 = vmatpush1.bf16.msra.mxu0 %v1402
    %1950 = vmatprep.subr.bf16.mxu0 %v1405
    %1951 = vmatpush1.bf16.msra.mxu0 %v1404
    %1952 = vmatprep.subr.bf16.mxu0 %v1407
    %1953 = vmatpush1.bf16.msra.mxu0 %v1406
    %1954 = vmatprep.mubr.bf16.mxu0 %v757
    %1955 = vmatmul.mubr.bf16.gmra.mrb[0].mxu0 %v756
    %v1956 = vpop.f32.mrb[0].mxu0
    %v1957 = vadd.f32 %v1764, %v1956
    %v1958 = vpop.f32.mrb[0].mxu0
    %v1959 = vadd.f32 %v1766, %v1958
    %v1960 = vpop.f32.mrb[0].mxu0
    %v1961 = vadd.f32 %v1768, %v1960
    %v1962 = vpop.f32.mrb[0].mxu0
    %v1963 = vadd.f32 %v1770, %v1962
    %1964 = vmatprep.mubr.bf16.mxu0 %v764
    %1965 = vmatmul.mubr.bf16.gmra.mrb[0].mxu0 %v763
    %v1966 = vpop.f32.mrb[0].mxu0
    %v1967 = vadd.f32 %v1774, %v1966
    %v1968 = vpop.f32.mrb[0].mxu0
    %v1969 = vadd.f32 %v1776, %v1968
    %v1970 = vpop.f32.mrb[0].mxu0
    %v1971 = vadd.f32 %v1778, %v1970
    %v1972 = vpop.f32.mrb[0].mxu0
    %v1973 = vadd.f32 %v1780, %v1972
    %1974 = vmatprep.mubr.bf16.mxu0 %v771
    %1975 = vmatmul.mubr.bf16.gmra.mrb[0].mxu0 %v770
    %v1976 = vpop.f32.mrb[0].mxu0
    %v1977 = vadd.f32 %v1784, %v1976
    %v1978 = vpop.f32.mrb[0].mxu0
    %v1979 = vadd.f32 %v1786, %v1978
    %v1980 = vpop.f32.mrb[0].mxu0
    %v1981 = vadd.f32 %v1788, %v1980
    %v1982 = vpop.f32.mrb[0].mxu0
    %v1983 = vadd.f32 %v1790, %v1982
    %1984 = vmatprep.mubr.bf16.mxu0 %v778
    %1985 = vmatmul.mubr.bf16.gmra.mrb[0].mxu0 %v777
    %v1986 = vpop.f32.mrb[0].mxu0
    %v1987 = vadd.f32 %v1794, %v1986
    %v1988 = vpop.f32.mrb[0].mxu0
    %v1989 = vadd.f32 %v1796, %v1988
    %v1990 = vpop.f32.mrb[0].mxu0
    %v1991 = vadd.f32 %v1798, %v1990
    %v1992 = vpop.f32.mrb[0].mxu0
    %v1993 = vadd.f32 %v1800, %v1992
    %1994 = vmatprep.mubr.bf16.mxu0 %v785
    %1995 = vmatmul.mubr.bf16.gmra.mrb[0].mxu0 %v784
    %v1996 = vpop.f32.mrb[0].mxu0
    %v1997 = vadd.f32 %v1804, %v1996
    %v1998 = vpop.f32.mrb[0].mxu0
    %v1999 = vadd.f32 %v1806, %v1998
    %v2000 = vpop.f32.mrb[0].mxu0
    %v2001 = vadd.f32 %v1808, %v2000
    %v2002 = vpop.f32.mrb[0].mxu0
    %v2003 = vadd.f32 %v1810, %v2002
    %2004 = vmatprep.mubr.bf16.mxu0 %v792
    %2005 = vmatmul.mubr.bf16.gmra.mrb[0].mxu0 %v791
    %v2006 = vpop.f32.mrb[0].mxu0
    %v2007 = vadd.f32 %v1814, %v2006
    %v2008 = vpop.f32.mrb[0].mxu0
    %v2009 = vadd.f32 %v1816, %v2008
    %v2010 = vpop.f32.mrb[0].mxu0
    %v2011 = vadd.f32 %v1818, %v2010
    %v2012 = vpop.f32.mrb[0].mxu0
    %v2013 = vadd.f32 %v1820, %v2012
    %2014 = vmatprep.mubr.bf16.mxu0 %v799
    %2015 = vmatmul.mubr.bf16.gmra.mrb[0].mxu0 %v798
    %v2016 = vpop.f32.mrb[0].mxu0
    %v2017 = vadd.f32 %v1824, %v2016
    %v2018 = vpop.f32.mrb[0].mxu0
    %v2019 = vadd.f32 %v1826, %v2018
    %v2020 = vpop.f32.mrb[0].mxu0
    %v2021 = vadd.f32 %v1828, %v2020
    %v2022 = vpop.f32.mrb[0].mxu0
    %v2023 = vadd.f32 %v1830, %v2022
    %2024 = vmatprep.mubr.bf16.mxu0 %v806
    %2025 = vmatmul.mubr.bf16.gmra.mrb[0].mxu0 %v805
    %v2026 = vpop.f32.mrb[0].mxu0
    %v2027 = vadd.f32 %v1834, %v2026
    %v2028 = vpop.f32.mrb[0].mxu0
    %v2029 = vadd.f32 %v1836, %v2028
    %v2030 = vpop.f32.mrb[0].mxu0
    %v2031 = vadd.f32 %v1838, %v2030
    %v2032 = vpop.f32.mrb[0].mxu0
    %v2033 = vadd.f32 %v1840, %v2032
    %2034 = vmatprep.mubr.bf16.mxu0 %v813
    %2035 = vmatmul.mubr.bf16.gmra.mrb[0].mxu0 %v812
    %v2036 = vpop.f32.mrb[0].mxu0
    %v2037 = vadd.f32 %v1844, %v2036
    %v2038 = vpop.f32.mrb[0].mxu0
    %v2039 = vadd.f32 %v1846, %v2038
    %v2040 = vpop.f32.mrb[0].mxu0
    %v2041 = vadd.f32 %v1848, %v2040
    %v2042 = vpop.f32.mrb[0].mxu0
    %v2043 = vadd.f32 %v1850, %v2042
    %2044 = vmatprep.mubr.bf16.mxu0 %v820
    %2045 = vmatmul.mubr.bf16.gmra.mrb[0].mxu0 %v819
    %v2046 = vpop.f32.mrb[0].mxu0
    %v2047 = vadd.f32 %v1854, %v2046
    %v2048 = vpop.f32.mrb[0].mxu0
    %v2049 = vadd.f32 %v1856, %v2048
    %v2050 = vpop.f32.mrb[0].mxu0
    %v2051 = vadd.f32 %v1858, %v2050
    %v2052 = vpop.f32.mrb[0].mxu0
    %v2053 = vadd.f32 %v1860, %v2052
    %2054 = vmatprep.mubr.bf16.mxu0 %v827
    %2055 = vmatmul.mubr.bf16.gmra.mrb[0].mxu0 %v826
    %v2056 = vpop.f32.mrb[0].mxu0
    %v2057 = vadd.f32 %v1864, %v2056
    %v2058 = vpop.f32.mrb[0].mxu0
    %v2059 = vadd.f32 %v1866, %v2058
    %v2060 = vpop.f32.mrb[0].mxu0
    %v2061 = vadd.f32 %v1868, %v2060
    %v2062 = vpop.f32.mrb[0].mxu0
    %v2063 = vadd.f32 %v1870, %v2062
    %2064 = vmatprep.mubr.bf16.mxu0 %v834
    %2065 = vmatmul.mubr.bf16.gmra.mrb[0].mxu0 %v833
    %v2066 = vpop.f32.mrb[0].mxu0
    %v2067 = vadd.f32 %v1874, %v2066
    %v2068 = vpop.f32.mrb[0].mxu0
    %v2069 = vadd.f32 %v1876, %v2068
    %v2070 = vpop.f32.mrb[0].mxu0
    %v2071 = vadd.f32 %v1878, %v2070
    %v2072 = vpop.f32.mrb[0].mxu0
    %v2073 = vadd.f32 %v1880, %v2072
    %2074 = vmatprep.mubr.bf16.mxu0 %v841
    %2075 = vmatmul.mubr.bf16.gmra.mrb[0].mxu0 %v840
    %v2076 = vpop.f32.mrb[0].mxu0
    %v2077 = vadd.f32 %v1884, %v2076
    %v2078 = vpop.f32.mrb[0].mxu0
    %v2079 = vadd.f32 %v1886, %v2078
    %v2080 = vpop.f32.mrb[0].mxu0
    %v2081 = vadd.f32 %v1888, %v2080
    %v2082 = vpop.f32.mrb[0].mxu0
    %v2083 = vadd.f32 %v1890, %v2082
    %2084 = vmatprep.mubr.bf16.mxu0 %v848
    %2085 = vmatmul.mubr.bf16.gmra.mrb[0].mxu0 %v847
    %v2086 = vpop.f32.mrb[0].mxu0
    %v2087 = vadd.f32 %v1894, %v2086
    %v2088 = vpop.f32.mrb[0].mxu0
    %v2089 = vadd.f32 %v1896, %v2088
    %v2090 = vpop.f32.mrb[0].mxu0
    %v2091 = vadd.f32 %v1898, %v2090
    %v2092 = vpop.f32.mrb[0].mxu0
    %v2093 = vadd.f32 %v1900, %v2092
    %2094 = vmatprep.mubr.bf16.mxu0 %v855
    %2095 = vmatmul.mubr.bf16.gmra.mrb[0].mxu0 %v854
    %v2096 = vpop.f32.mrb[0].mxu0
    %v2097 = vadd.f32 %v1904, %v2096
    %v2098 = vpop.f32.mrb[0].mxu0
    %v2099 = vadd.f32 %v1906, %v2098
    %v2100 = vpop.f32.mrb[0].mxu0
    %v2101 = vadd.f32 %v1908, %v2100
    %v2102 = vpop.f32.mrb[0].mxu0
    %v2103 = vadd.f32 %v1910, %v2102
    %2104 = vmatprep.mubr.bf16.mxu0 %v862
    %2105 = vmatmul.mubr.bf16.gmra.mrb[0].mxu0 %v861
    %v2106 = vpop.f32.mrb[0].mxu0
    %v2107 = vadd.f32 %v1914, %v2106
    %v2108 = vpop.f32.mrb[0].mxu0
    %v2109 = vadd.f32 %v1916, %v2108
    %v2110 = vpop.f32.mrb[0].mxu0
    %v2111 = vadd.f32 %v1918, %v2110
    %v2112 = vpop.f32.mrb[0].mxu0
    %v2113 = vadd.f32 %v1920, %v2112
    %2114 = vdwg.mxu0
    %2115 = vmatprep.subr.bf16.mxu0 %v1409
    %2116 = vmatpush1.bf16.msra.mxu0 %v1408
    %2117 = vmatprep.subr.bf16.mxu0 %v1411
    %2118 = vmatpush1.bf16.msra.mxu0 %v1410
    %2119 = vmatprep.subr.bf16.mxu0 %v1413
    %2120 = vmatpush1.bf16.msra.mxu0 %v1412
    %2121 = vmatprep.subr.bf16.mxu0 %v1415
    %2122 = vmatpush1.bf16.msra.mxu0 %v1414
    %2123 = vmatprep.subr.bf16.mxu0 %v1417
    %2124 = vmatpush1.bf16.msra.mxu0 %v1416
    %2125 = vmatprep.subr.bf16.mxu0 %v1419
    %2126 = vmatpush1.bf16.msra.mxu0 %v1418
    %2127 = vmatprep.subr.bf16.mxu0 %v1421
    %2128 = vmatpush1.bf16.msra.mxu0 %v1420
    %2129 = vmatprep.subr.bf16.mxu0 %v1423
    %2130 = vmatpush1.bf16.msra.mxu0 %v1422
    %2131 = vmatprep.subr.bf16.mxu0 0
    %2132 = vmatpush1.bf16.msra.mxu0 0
    %2133 = vmatprep.subr.bf16.mxu0 0
    %2134 = vmatpush1.bf16.msra.mxu0 0
    %2135 = vmatprep.subr.bf16.mxu0 0
    %2136 = vmatpush1.bf16.msra.mxu0 0
    %2137 = vmatprep.subr.bf16.mxu0 0
    %2138 = vmatpush1.bf16.msra.mxu0 0
    %2139 = vmatprep.subr.bf16.mxu0 0
    %2140 = vmatpush1.bf16.msra.mxu0 0
    %2141 = vmatprep.subr.bf16.mxu0 0
    %2142 = vmatpush1.bf16.msra.mxu0 0
    %2143 = vmatprep.subr.bf16.mxu0 0
    %2144 = vmatpush1.bf16.msra.mxu0 0
    %2145 = vmatprep.subr.bf16.mxu0 0
    %2146 = vmatpush1.bf16.msra.mxu0 0
    %2147 = vmatprep.mubr.bf16.mxu0 0
    %2148 = vmatmul.mubr.bf16.gmra.mrb[0].mxu0 %v758
    %v2149 = vpop.f32.mrb[0].mxu0
    %v2150 = vadd.f32 %v1957, %v2149
    %v2151 = vpop.f32.mrb[0].mxu0
    %v2152 = vadd.f32 %v1959, %v2151
    %v2153 = vpop.f32.mrb[0].mxu0
    %v2154 = vadd.f32 %v1961, %v2153
    %v2155 = vpop.f32.mrb[0].mxu0
    %v2156 = vadd.f32 %v1963, %v2155
    %2157 = vmatprep.mubr.bf16.mxu0 0
    %2158 = vmatmul.mubr.bf16.gmra.mrb[0].mxu0 %v765
    %v2159 = vpop.f32.mrb[0].mxu0
    %v2160 = vadd.f32 %v1967, %v2159
    %v2161 = vpop.f32.mrb[0].mxu0
    %v2162 = vadd.f32 %v1969, %v2161
    %v2163 = vpop.f32.mrb[0].mxu0
    %v2164 = vadd.f32 %v1971, %v2163
    %v2165 = vpop.f32.mrb[0].mxu0
    %v2166 = vadd.f32 %v1973, %v2165
    %2167 = vmatprep.mubr.bf16.mxu0 0
    %2168 = vmatmul.mubr.bf16.gmra.mrb[0].mxu0 %v772
    %v2169 = vpop.f32.mrb[0].mxu0
    %v2170 = vadd.f32 %v1977, %v2169
    %v2171 = vpop.f32.mrb[0].mxu0
    %v2172 = vadd.f32 %v1979, %v2171
    %v2173 = vpop.f32.mrb[0].mxu0
    %v2174 = vadd.f32 %v1981, %v2173
    %v2175 = vpop.f32.mrb[0].mxu0
    %v2176 = vadd.f32 %v1983, %v2175
    %2177 = vmatprep.mubr.bf16.mxu0 0
    %2178 = vmatmul.mubr.bf16.gmra.mrb[0].mxu0 %v779
    %v2179 = vpop.f32.mrb[0].mxu0
    %v2180 = vadd.f32 %v1987, %v2179
    %v2181 = vpop.f32.mrb[0].mxu0
    %v2182 = vadd.f32 %v1989, %v2181
    %v2183 = vpop.f32.mrb[0].mxu0
    %v2184 = vadd.f32 %v1991, %v2183
    %v2185 = vpop.f32.mrb[0].mxu0
    %v2186 = vadd.f32 %v1993, %v2185
    %2187 = vmatprep.mubr.bf16.mxu0 0
    %2188 = vmatmul.mubr.bf16.gmra.mrb[0].mxu0 %v786
    %v2189 = vpop.f32.mrb[0].mxu0
    %v2190 = vadd.f32 %v1997, %v2189
    %v2191 = vpop.f32.mrb[0].mxu0
    %v2192 = vadd.f32 %v1999, %v2191
    %v2193 = vpop.f32.mrb[0].mxu0
    %v2194 = vadd.f32 %v2001, %v2193
    %v2195 = vpop.f32.mrb[0].mxu0
    %v2196 = vadd.f32 %v2003, %v2195
    %2197 = vmatprep.mubr.bf16.mxu0 0
    %2198 = vmatmul.mubr.bf16.gmra.mrb[0].mxu0 %v793
    %v2199 = vpop.f32.mrb[0].mxu0
    %v2200 = vadd.f32 %v2007, %v2199
    %v2201 = vpop.f32.mrb[0].mxu0
    %v2202 = vadd.f32 %v2009, %v2201
    %v2203 = vpop.f32.mrb[0].mxu0
    %v2204 = vadd.f32 %v2011, %v2203
    %v2205 = vpop.f32.mrb[0].mxu0
    %v2206 = vadd.f32 %v2013, %v2205
    %2207 = vmatprep.mubr.bf16.mxu0 0
    %2208 = vmatmul.mubr.bf16.gmra.mrb[0].mxu0 %v800
    %v2209 = vpop.f32.mrb[0].mxu0
    %v2210 = vadd.f32 %v2017, %v2209
    %v2211 = vpop.f32.mrb[0].mxu0
    %v2212 = vadd.f32 %v2019, %v2211
    %v2213 = vpop.f32.mrb[0].mxu0
    %v2214 = vadd.f32 %v2021, %v2213
    %v2215 = vpop.f32.mrb[0].mxu0
    %v2216 = vadd.f32 %v2023, %v2215
    %2217 = vmatprep.mubr.bf16.mxu0 0
    %2218 = vmatmul.mubr.bf16.gmra.mrb[0].mxu0 %v807
    %v2219 = vpop.f32.mrb[0].mxu0
    %v2220 = vadd.f32 %v2027, %v2219
    %v2221 = vpop.f32.mrb[0].mxu0
    %v2222 = vadd.f32 %v2029, %v2221
    %v2223 = vpop.f32.mrb[0].mxu0
    %v2224 = vadd.f32 %v2031, %v2223
    %v2225 = vpop.f32.mrb[0].mxu0
    %v2226 = vadd.f32 %v2033, %v2225
    %2227 = vmatprep.mubr.bf16.mxu0 0
    %2228 = vmatmul.mubr.bf16.gmra.mrb[0].mxu0 %v814
    %v2229 = vpop.f32.mrb[0].mxu0
    %v2230 = vadd.f32 %v2037, %v2229
    %v2231 = vpop.f32.mrb[0].mxu0
    %v2232 = vadd.f32 %v2039, %v2231
    %v2233 = vpop.f32.mrb[0].mxu0
    %v2234 = vadd.f32 %v2041, %v2233
    %v2235 = vpop.f32.mrb[0].mxu0
    %v2236 = vadd.f32 %v2043, %v2235
    %2237 = vmatprep.mubr.bf16.mxu0 0
    %2238 = vmatmul.mubr.bf16.gmra.mrb[0].mxu0 %v821
    %v2239 = vpop.f32.mrb[0].mxu0
    %v2240 = vadd.f32 %v2047, %v2239
    %v2241 = vpop.f32.mrb[0].mxu0
    %v2242 = vadd.f32 %v2049, %v2241
    %v2243 = vpop.f32.mrb[0].mxu0
    %v2244 = vadd.f32 %v2051, %v2243
    %v2245 = vpop.f32.mrb[0].mxu0
    %v2246 = vadd.f32 %v2053, %v2245
    %2247 = vmatprep.mubr.bf16.mxu0 0
    %2248 = vmatmul.mubr.bf16.gmra.mrb[0].mxu0 %v828
    %v2249 = vpop.f32.mrb[0].mxu0
    %v2250 = vadd.f32 %v2057, %v2249
    %v2251 = vpop.f32.mrb[0].mxu0
    %v2252 = vadd.f32 %v2059, %v2251
    %v2253 = vpop.f32.mrb[0].mxu0
    %v2254 = vadd.f32 %v2061, %v2253
    %v2255 = vpop.f32.mrb[0].mxu0
    %v2256 = vadd.f32 %v2063, %v2255
    %2257 = vmatprep.mubr.bf16.mxu0 0
    %2258 = vmatmul.mubr.bf16.gmra.mrb[0].mxu0 %v835
    %v2259 = vpop.f32.mrb[0].mxu0
    %v2260 = vadd.f32 %v2067, %v2259
    %v2261 = vpop.f32.mrb[0].mxu0
    %v2262 = vadd.f32 %v2069, %v2261
    %v2263 = vpop.f32.mrb[0].mxu0
    %v2264 = vadd.f32 %v2071, %v2263
    %v2265 = vpop.f32.mrb[0].mxu0
    %v2266 = vadd.f32 %v2073, %v2265
    %2267 = vmatprep.mubr.bf16.mxu0 0
    %2268 = vmatmul.mubr.bf16.gmra.mrb[0].mxu0 %v842
    %v2269 = vpop.f32.mrb[0].mxu0
    %v2270 = vadd.f32 %v2077, %v2269
    %v2271 = vpop.f32.mrb[0].mxu0
    %v2272 = vadd.f32 %v2079, %v2271
    %v2273 = vpop.f32.mrb[0].mxu0
    %v2274 = vadd.f32 %v2081, %v2273
    %v2275 = vpop.f32.mrb[0].mxu0
    %v2276 = vadd.f32 %v2083, %v2275
    %2277 = vmatprep.mubr.bf16.mxu0 0
    %2278 = vmatmul.mubr.bf16.gmra.mrb[0].mxu0 %v849
    %v2279 = vpop.f32.mrb[0].mxu0
    %v2280 = vadd.f32 %v2087, %v2279
    %v2281 = vpop.f32.mrb[0].mxu0
    %v2282 = vadd.f32 %v2089, %v2281
    %v2283 = vpop.f32.mrb[0].mxu0
    %v2284 = vadd.f32 %v2091, %v2283
    %v2285 = vpop.f32.mrb[0].mxu0
    %v2286 = vadd.f32 %v2093, %v2285
    %2287 = vmatprep.mubr.bf16.mxu0 0
    %2288 = vmatmul.mubr.bf16.gmra.mrb[0].mxu0 %v856
    %v2289 = vpop.f32.mrb[0].mxu0
    %v2290 = vadd.f32 %v2097, %v2289
    %v2291 = vpop.f32.mrb[0].mxu0
    %v2292 = vadd.f32 %v2099, %v2291
    %v2293 = vpop.f32.mrb[0].mxu0
    %v2294 = vadd.f32 %v2101, %v2293
    %v2295 = vpop.f32.mrb[0].mxu0
    %v2296 = vadd.f32 %v2103, %v2295
    %2297 = vmatprep.mubr.bf16.mxu0 0
    %2298 = vmatmul.mubr.bf16.gmra.mrb[0].mxu0 %v863
    %v2299 = vpop.f32.mrb[0].mxu0
    %v2300 = vadd.f32 %v2107, %v2299
    %v2301 = vpop.f32.mrb[0].mxu0
    %v2302 = vadd.f32 %v2109, %v2301
    %v2303 = vpop.f32.mrb[0].mxu0
    %v2304 = vadd.f32 %v2111, %v2303
    %v2305 = vpop.f32.mrb[0].mxu0
    %v2306 = vadd.f32 %v2113, %v2305
    %2307 = vdwg.mxu0
    %v2308 = vsub.f32 0.0, %v2150
    %v2309 = vsub.f32 0.0, %v2152
    %v2310 = vsub.f32 0.0, %v2154
    %v2311 = vsub.f32 0.0, %v2156
    %v2312 = vsub.f32 0.0, %v2160
    %v2313 = vsub.f32 0.0, %v2162
    %v2314 = vsub.f32 0.0, %v2164
    %v2315 = vsub.f32 0.0, %v2166
    %v2316 = vsub.f32 0.0, %v2170
    %v2317 = vsub.f32 0.0, %v2172
    %v2318 = vsub.f32 0.0, %v2174
    %v2319 = vsub.f32 0.0, %v2176
    %v2320 = vsub.f32 0.0, %v2180
    %v2321 = vsub.f32 0.0, %v2182
    %v2322 = vsub.f32 0.0, %v2184
    %v2323 = vsub.f32 0.0, %v2186
    %v2324 = vsub.f32 0.0, %v2190
    %v2325 = vsub.f32 0.0, %v2192
    %v2326 = vsub.f32 0.0, %v2194
    %v2327 = vsub.f32 0.0, %v2196
    %v2328 = vsub.f32 0.0, %v2200
    %v2329 = vsub.f32 0.0, %v2202
    %v2330 = vsub.f32 0.0, %v2204
    %v2331 = vsub.f32 0.0, %v2206
    %v2332 = vsub.f32 0.0, %v2210
    %v2333 = vsub.f32 0.0, %v2212
    %v2334 = vsub.f32 0.0, %v2214
    %v2335 = vsub.f32 0.0, %v2216
    %v2336 = vsub.f32 0.0, %v2220
    %v2337 = vsub.f32 0.0, %v2222
    %v2338 = vsub.f32 0.0, %v2224
    %v2339 = vsub.f32 0.0, %v2226
    %v2340 = vsub.f32 0.0, %v2230
    %v2341 = vsub.f32 0.0, %v2232
    %v2342 = vsub.f32 0.0, %v2234
    %v2343 = vsub.f32 0.0, %v2236
    %v2344 = vsub.f32 0.0, %v2240
    %v2345 = vsub.f32 0.0, %v2242
    %v2346 = vsub.f32 0.0, %v2244
    %v2347 = vsub.f32 0.0, %v2246
    %v2348 = vsub.f32 0.0, %v2250
    %v2349 = vsub.f32 0.0, %v2252
    %v2350 = vsub.f32 0.0, %v2254
    %v2351 = vsub.f32 0.0, %v2256
    %v2352 = vsub.f32 0.0, %v2260
    %v2353 = vsub.f32 0.0, %v2262
    %v2354 = vsub.f32 0.0, %v2264
    %v2355 = vsub.f32 0.0, %v2266
    %v2356 = vsub.f32 0.0, %v2270
    %v2357 = vsub.f32 0.0, %v2272
    %v2358 = vsub.f32 0.0, %v2274
    %v2359 = vsub.f32 0.0, %v2276
    %v2360 = vsub.f32 0.0, %v2280
    %v2361 = vsub.f32 0.0, %v2282
    %v2362 = vsub.f32 0.0, %v2284
    %v2363 = vsub.f32 0.0, %v2286
    %v2364 = vsub.f32 0.0, %v2290
    %v2365 = vsub.f32 0.0, %v2292
    %v2366 = vsub.f32 0.0, %v2294
    %v2367 = vsub.f32 0.0, %v2296
    %v2368 = vsub.f32 0.0, %v2300
    %v2369 = vsub.f32 0.0, %v2302
    %v2370 = vsub.f32 0.0, %v2304
    %v2371 = vsub.f32 0.0, %v2306
    %v2372 = vmul.f32 %v2308, 1.442695
    %v2373 = vpow.pop %v2372
    %v2374 = vmul.f32 %v2309, 1.442695
    %v2375 = vpow.pop %v2374
    %v2376 = vmul.f32 %v2310, 1.442695
    %v2377 = vpow.pop %v2376
    %v2378 = vmul.f32 %v2311, 1.442695
    %v2379 = vpow.pop %v2378
    %v2380 = vmul.f32 %v2312, 1.442695
    %v2381 = vpow.pop %v2380
    %v2382 = vmul.f32 %v2313, 1.442695
    %v2383 = vpow.pop %v2382
    %v2384 = vmul.f32 %v2314, 1.442695
    %v2385 = vpow.pop %v2384
    %v2386 = vmul.f32 %v2315, 1.442695
    %v2387 = vpow.pop %v2386
    %v2388 = vmul.f32 %v2316, 1.442695
    %v2389 = vpow.pop %v2388
    %v2390 = vmul.f32 %v2317, 1.442695
    %v2391 = vpow.pop %v2390
    %v2392 = vmul.f32 %v2318, 1.442695
    %v2393 = vpow.pop %v2392
    %v2394 = vmul.f32 %v2319, 1.442695
    %v2395 = vpow.pop %v2394
    %v2396 = vmul.f32 %v2320, 1.442695
    %v2397 = vpow.pop %v2396
    %v2398 = vmul.f32 %v2321, 1.442695
    %v2399 = vpow.pop %v2398
    %v2400 = vmul.f32 %v2322, 1.442695
    %v2401 = vpow.pop %v2400
    %v2402 = vmul.f32 %v2323, 1.442695
    %v2403 = vpow.pop %v2402
    %v2404 = vmul.f32 %v2324, 1.442695
    %v2405 = vpow.pop %v2404
    %v2406 = vmul.f32 %v2325, 1.442695
    %v2407 = vpow.pop %v2406
    %v2408 = vmul.f32 %v2326, 1.442695
    %v2409 = vpow.pop %v2408
    %v2410 = vmul.f32 %v2327, 1.442695
    %v2411 = vpow.pop %v2410
    %v2412 = vmul.f32 %v2328, 1.442695
    %v2413 = vpow.pop %v2412
    %v2414 = vmul.f32 %v2329, 1.442695
    %v2415 = vpow.pop %v2414
    %v2416 = vmul.f32 %v2330, 1.442695
    %v2417 = vpow.pop %v2416
    %v2418 = vmul.f32 %v2331, 1.442695
    %v2419 = vpow.pop %v2418
    %v2420 = vmul.f32 %v2332, 1.442695
    %v2421 = vpow.pop %v2420
    %v2422 = vmul.f32 %v2333, 1.442695
    %v2423 = vpow.pop %v2422
    %v2424 = vmul.f32 %v2334, 1.442695
    %v2425 = vpow.pop %v2424
    %v2426 = vmul.f32 %v2335, 1.442695
    %v2427 = vpow.pop %v2426
    %v2428 = vmul.f32 %v2336, 1.442695
    %v2429 = vpow.pop %v2428
    %v2430 = vmul.f32 %v2337, 1.442695
    %v2431 = vpow.pop %v2430
    %v2432 = vmul.f32 %v2338, 1.442695
    %v2433 = vpow.pop %v2432
    %v2434 = vmul.f32 %v2339, 1.442695
    %v2435 = vpow.pop %v2434
    %v2436 = vmul.f32 %v2340, 1.442695
    %v2437 = vpow.pop %v2436
    %v2438 = vmul.f32 %v2341, 1.442695
    %v2439 = vpow.pop %v2438
    %v2440 = vmul.f32 %v2342, 1.442695
    %v2441 = vpow.pop %v2440
    %v2442 = vmul.f32 %v2343, 1.442695
    %v2443 = vpow.pop %v2442
    %v2444 = vmul.f32 %v2344, 1.442695
    %v2445 = vpow.pop %v2444
    %v2446 = vmul.f32 %v2345, 1.442695
    %v2447 = vpow.pop %v2446
    %v2448 = vmul.f32 %v2346, 1.442695
    %v2449 = vpow.pop %v2448
    %v2450 = vmul.f32 %v2347, 1.442695
    %v2451 = vpow.pop %v2450
    %v2452 = vmul.f32 %v2348, 1.442695
    %v2453 = vpow.pop %v2452
    %v2454 = vmul.f32 %v2349, 1.442695
    %v2455 = vpow.pop %v2454
    %v2456 = vmul.f32 %v2350, 1.442695
    %v2457 = vpow.pop %v2456
    %v2458 = vmul.f32 %v2351, 1.442695
    %v2459 = vpow.pop %v2458
    %v2460 = vmul.f32 %v2352, 1.442695
    %v2461 = vpow.pop %v2460
    %v2462 = vmul.f32 %v2353, 1.442695
    %v2463 = vpow.pop %v2462
    %v2464 = vmul.f32 %v2354, 1.442695
    %v2465 = vpow.pop %v2464
    %v2466 = vmul.f32 %v2355, 1.442695
    %v2467 = vpow.pop %v2466
    %v2468 = vmul.f32 %v2356, 1.442695
    %v2469 = vpow.pop %v2468
    %v2470 = vmul.f32 %v2357, 1.442695
    %v2471 = vpow.pop %v2470
    %v2472 = vmul.f32 %v2358, 1.442695
    %v2473 = vpow.pop %v2472
    %v2474 = vmul.f32 %v2359, 1.442695
    %v2475 = vpow.pop %v2474
    %v2476 = vmul.f32 %v2360, 1.442695
    %v2477 = vpow.pop %v2476
    %v2478 = vmul.f32 %v2361, 1.442695
    %v2479 = vpow.pop %v2478
    %v2480 = vmul.f32 %v2362, 1.442695
    %v2481 = vpow.pop %v2480
    %v2482 = vmul.f32 %v2363, 1.442695
    %v2483 = vpow.pop %v2482
    %v2484 = vmul.f32 %v2364, 1.442695
    %v2485 = vpow.pop %v2484
    %v2486 = vmul.f32 %v2365, 1.442695
    %v2487 = vpow.pop %v2486
    %v2488 = vmul.f32 %v2366, 1.442695
    %v2489 = vpow.pop %v2488
    %v2490 = vmul.f32 %v2367, 1.442695
    %v2491 = vpow.pop %v2490
    %v2492 = vmul.f32 %v2368, 1.442695
    %v2493 = vpow.pop %v2492
    %v2494 = vmul.f32 %v2369, 1.442695
    %v2495 = vpow.pop %v2494
    %v2496 = vmul.f32 %v2370, 1.442695
    %v2497 = vpow.pop %v2496
    %v2498 = vmul.f32 %v2371, 1.442695
    %v2499 = vpow.pop %v2498
    %v2500 = vadd.f32 %v2373, 1.0
    %v2501 = vadd.f32 %v2375, 1.0
    %v2502 = vadd.f32 %v2377, 1.0
    %v2503 = vadd.f32 %v2379, 1.0
    %v2504 = vadd.f32 %v2381, 1.0
    %v2505 = vadd.f32 %v2383, 1.0
    %v2506 = vadd.f32 %v2385, 1.0
    %v2507 = vadd.f32 %v2387, 1.0
    %v2508 = vadd.f32 %v2389, 1.0
    %v2509 = vadd.f32 %v2391, 1.0
    %v2510 = vadd.f32 %v2393, 1.0
    %v2511 = vadd.f32 %v2395, 1.0
    %v2512 = vadd.f32 %v2397, 1.0
    %v2513 = vadd.f32 %v2399, 1.0
    %v2514 = vadd.f32 %v2401, 1.0
    %v2515 = vadd.f32 %v2403, 1.0
    %v2516 = vadd.f32 %v2405, 1.0
    %v2517 = vadd.f32 %v2407, 1.0
    %v2518 = vadd.f32 %v2409, 1.0
    %v2519 = vadd.f32 %v2411, 1.0
    %v2520 = vadd.f32 %v2413, 1.0
    %v2521 = vadd.f32 %v2415, 1.0
    %v2522 = vadd.f32 %v2417, 1.0
    %v2523 = vadd.f32 %v2419, 1.0
    %v2524 = vadd.f32 %v2421, 1.0
    %v2525 = vadd.f32 %v2423, 1.0
    %v2526 = vadd.f32 %v2425, 1.0
    %v2527 = vadd.f32 %v2427, 1.0
    %v2528 = vadd.f32 %v2429, 1.0
    %v2529 = vadd.f32 %v2431, 1.0
    %v2530 = vadd.f32 %v2433, 1.0
    %v2531 = vadd.f32 %v2435, 1.0
    %v2532 = vadd.f32 %v2437, 1.0
    %v2533 = vadd.f32 %v2439, 1.0
    %v2534 = vadd.f32 %v2441, 1.0
    %v2535 = vadd.f32 %v2443, 1.0
    %v2536 = vadd.f32 %v2445, 1.0
    %v2537 = vadd.f32 %v2447, 1.0
    %v2538 = vadd.f32 %v2449, 1.0
    %v2539 = vadd.f32 %v2451, 1.0
    %v2540 = vadd.f32 %v2453, 1.0
    %v2541 = vadd.f32 %v2455, 1.0
    %v2542 = vadd.f32 %v2457, 1.0
    %v2543 = vadd.f32 %v2459, 1.0
    %v2544 = vadd.f32 %v2461, 1.0
    %v2545 = vadd.f32 %v2463, 1.0
    %v2546 = vadd.f32 %v2465, 1.0
    %v2547 = vadd.f32 %v2467, 1.0
    %v2548 = vadd.f32 %v2469, 1.0
    %v2549 = vadd.f32 %v2471, 1.0
    %v2550 = vadd.f32 %v2473, 1.0
    %v2551 = vadd.f32 %v2475, 1.0
    %v2552 = vadd.f32 %v2477, 1.0
    %v2553 = vadd.f32 %v2479, 1.0
    %v2554 = vadd.f32 %v2481, 1.0
    %v2555 = vadd.f32 %v2483, 1.0
    %v2556 = vadd.f32 %v2485, 1.0
    %v2557 = vadd.f32 %v2487, 1.0
    %v2558 = vadd.f32 %v2489, 1.0
    %v2559 = vadd.f32 %v2491, 1.0
    %v2560 = vadd.f32 %v2493, 1.0
    %v2561 = vadd.f32 %v2495, 1.0
    %v2562 = vadd.f32 %v2497, 1.0
    %v2563 = vadd.f32 %v2499, 1.0
    %v2564 = vrcp.pop %v2500
    %v2565 = vrcp.pop %v2501
    %v2566 = vrcp.pop %v2502
    %v2567 = vrcp.pop %v2503
    %v2568 = vrcp.pop %v2504
    %v2569 = vrcp.pop %v2505
    %v2570 = vrcp.pop %v2506
    %v2571 = vrcp.pop %v2507
    %v2572 = vrcp.pop %v2508
    %v2573 = vrcp.pop %v2509
    %v2574 = vrcp.pop %v2510
    %v2575 = vrcp.pop %v2511
    %v2576 = vrcp.pop %v2512
    %v2577 = vrcp.pop %v2513
    %v2578 = vrcp.pop %v2514
    %v2579 = vrcp.pop %v2515
    %v2580 = vrcp.pop %v2516
    %v2581 = vrcp.pop %v2517
    %v2582 = vrcp.pop %v2518
    %v2583 = vrcp.pop %v2519
    %v2584 = vrcp.pop %v2520
    %v2585 = vrcp.pop %v2521
    %v2586 = vrcp.pop %v2522
    %v2587 = vrcp.pop %v2523
    %v2588 = vrcp.pop %v2524
    %v2589 = vrcp.pop %v2525
    %v2590 = vrcp.pop %v2526
    %v2591 = vrcp.pop %v2527
    %v2592 = vrcp.pop %v2528
    %v2593 = vrcp.pop %v2529
    %v2594 = vrcp.pop %v2530
    %v2595 = vrcp.pop %v2531
    %v2596 = vrcp.pop %v2532
    %v2597 = vrcp.pop %v2533
    %v2598 = vrcp.pop %v2534
    %v2599 = vrcp.pop %v2535
    %v2600 = vrcp.pop %v2536
    %v2601 = vrcp.pop %v2537
    %v2602 = vrcp.pop %v2538
    %v2603 = vrcp.pop %v2539
    %v2604 = vrcp.pop %v2540
    %v2605 = vrcp.pop %v2541
    %v2606 = vrcp.pop %v2542
    %v2607 = vrcp.pop %v2543
    %v2608 = vrcp.pop %v2544
    %v2609 = vrcp.pop %v2545
    %v2610 = vrcp.pop %v2546
    %v2611 = vrcp.pop %v2547
    %v2612 = vrcp.pop %v2548
    %v2613 = vrcp.pop %v2549
    %v2614 = vrcp.pop %v2550
    %v2615 = vrcp.pop %v2551
    %v2616 = vrcp.pop %v2552
    %v2617 = vrcp.pop %v2553
    %v2618 = vrcp.pop %v2554
    %v2619 = vrcp.pop %v2555
    %v2620 = vrcp.pop %v2556
    %v2621 = vrcp.pop %v2557
    %v2622 = vrcp.pop %v2558
    %v2623 = vrcp.pop %v2559
    %v2624 = vrcp.pop %v2560
    %v2625 = vrcp.pop %v2561
    %v2626 = vrcp.pop %v2562
    %v2627 = vrcp.pop %v2563
    %v2628 = vpack.c.bf16 %v2566, %v2564
    %v2629 = vpack.c.bf16 %v2567, %v2565
    %v2630 = vpack.c.bf16 %v2570, %v2568
    %v2631 = vpack.c.bf16 %v2571, %v2569
    %v2632 = vpack.c.bf16 %v2574, %v2572
    %v2633 = vpack.c.bf16 %v2575, %v2573
    %v2634 = vpack.c.bf16 %v2578, %v2576
    %v2635 = vpack.c.bf16 %v2579, %v2577
    %v2636 = vpack.c.bf16 %v2582, %v2580
    %v2637 = vpack.c.bf16 %v2583, %v2581
    %v2638 = vpack.c.bf16 %v2586, %v2584
    %v2639 = vpack.c.bf16 %v2587, %v2585
    %v2640 = vpack.c.bf16 %v2590, %v2588
    %v2641 = vpack.c.bf16 %v2591, %v2589
    %v2642 = vpack.c.bf16 %v2594, %v2592
    %v2643 = vpack.c.bf16 %v2595, %v2593
    %v2644 = vpack.c.bf16 %v2598, %v2596
    %v2645 = vpack.c.bf16 %v2599, %v2597
    %v2646 = vpack.c.bf16 %v2602, %v2600
    %v2647 = vpack.c.bf16 %v2603, %v2601
    %v2648 = vpack.c.bf16 %v2606, %v2604
    %v2649 = vpack.c.bf16 %v2607, %v2605
    %v2650 = vpack.c.bf16 %v2610, %v2608
    %v2651 = vpack.c.bf16 %v2611, %v2609
    %v2652 = vpack.c.bf16 %v2614, %v2612
    %v2653 = vpack.c.bf16 %v2615, %v2613
    %v2654 = vpack.c.bf16 %v2618, %v2616
    %v2655 = vpack.c.bf16 %v2619, %v2617
    %v2656 = vpack.c.bf16 %v2622, %v2620
    %v2657 = vpack.c.bf16 %v2623, %v2621
    %v2658 = vpack.c.bf16 %v2626, %v2624
    %v2659 = vpack.c.bf16 %v2627, %v2625
    %v2660 = vld [vmem:[#allocation8] sm:$0xff]
    %v2661 = vld [vmem:[#allocation8 + $0x8] sm:$0xff]
    %v2662 = vld [vmem:[#allocation8 + $0x10] sm:$0xff]
    %v2663 = vld [vmem:[#allocation8 + $0x18] sm:$0xff]
    %v2664 = vld [vmem:[#allocation8 + $0x20] sm:$0xff]
    %v2665 = vld [vmem:[#allocation8 + $0x28] sm:$0xff]
    %v2666 = vld [vmem:[#allocation8 + $0x30] sm:$0xff]
    %v2667 = vld [vmem:[#allocation8 + $0x38] sm:$0xff]
    %v2668 = vld [vmem:[#allocation8 + $0x40] sm:$0xff]
    %v2669 = vld [vmem:[#allocation8 + $0x48] sm:$0xff]
    %v2670 = vld [vmem:[#allocation8 + $0x50] sm:$0xff]
    %v2671 = vld [vmem:[#allocation8 + $0x58] sm:$0xff]
    %v2672 = vld [vmem:[#allocation8 + $0x60] sm:$0xff]
    %v2673 = vld [vmem:[#allocation8 + $0x68] sm:$0xff]
    %v2674 = vld [vmem:[#allocation8 + $0x70] sm:$0xff]
    %v2675 = vld [vmem:[#allocation8 + $0x78] sm:$0xff]
    %v2676 = vld [vmem:[#allocation8 + $0x80] sm:$0xff]
    %v2677 = vld [vmem:[#allocation8 + $0x88] sm:$0xff]
    %v2678 = vld [vmem:[#allocation8 + $0x90] sm:$0xff]
    %v2679 = vld [vmem:[#allocation8 + $0x98] sm:$0xff]
    %v2680 = vld [vmem:[#allocation8 + $0xa0] sm:$0xff]
    %v2681 = vld [vmem:[#allocation8 + $0xa8] sm:$0xff]
    %v2682 = vld [vmem:[#allocation8 + $0xb0] sm:$0xff]
    %v2683 = vld [vmem:[#allocation8 + $0xb8] sm:$0xff]
    %v2684 = vld [vmem:[#allocation8 + $0xc0] sm:$0xff]
    %v2685 = vld [vmem:[#allocation8 + $0xc8] sm:$0xff]
    %v2686 = vld [vmem:[#allocation8 + $0xd0] sm:$0xff]
    %v2687 = vld [vmem:[#allocation8 + $0xd8] sm:$0xff]
    %v2688 = vld [vmem:[#allocation8 + $0xe0] sm:$0xff]
    %v2689 = vld [vmem:[#allocation8 + $0xe8] sm:$0xff]
    %v2690 = vld [vmem:[#allocation8 + $0xf0] sm:$0xff]
    %v2691 = vld [vmem:[#allocation8 + $0xf8] sm:$0xff]
    %v2692 = vld [vmem:[#allocation10] sm:$0x3]
    %v2694 = vlaneseq
    %v2695 = vshrl.u32 %v2694, 7
    %v2696 = vsub.s32 0, %v2695
    %v2697 = vrot.slane %v2692, %v2696
    %v2698 = vlaneseq
    %v2699 = vshrl.u32 %v2698, 7
    %v2700 = vsub.s32 1, %v2699
    %v2701 = vrot.slane %v2692, %v2700
    %v2736 = vunpack.c.l.b16 %v2660
    %v2737 = vunpack.c.h.b16 %v2660
    %v2738 = vunpack.c.l.b16 %v2661
    %v2739 = vunpack.c.h.b16 %v2661
    %v2740 = vunpack.c.l.b16 %v2662
    %v2741 = vunpack.c.h.b16 %v2662
    %v2742 = vunpack.c.l.b16 %v2663
    %v2743 = vunpack.c.h.b16 %v2663
    %v2744 = vunpack.c.l.b16 %v2664
    %v2745 = vunpack.c.h.b16 %v2664
    %v2746 = vunpack.c.l.b16 %v2665
    %v2747 = vunpack.c.h.b16 %v2665
    %v2748 = vunpack.c.l.b16 %v2666
    %v2749 = vunpack.c.h.b16 %v2666
    %v2750 = vunpack.c.l.b16 %v2667
    %v2751 = vunpack.c.h.b16 %v2667
    %v2752 = vunpack.c.l.b16 %v2668
    %v2753 = vunpack.c.h.b16 %v2668
    %v2754 = vunpack.c.l.b16 %v2669
    %v2755 = vunpack.c.h.b16 %v2669
    %v2756 = vunpack.c.l.b16 %v2670
    %v2757 = vunpack.c.h.b16 %v2670
    %v2758 = vunpack.c.l.b16 %v2671
    %v2759 = vunpack.c.h.b16 %v2671
    %v2760 = vunpack.c.l.b16 %v2672
    %v2761 = vunpack.c.h.b16 %v2672
    %v2762 = vunpack.c.l.b16 %v2673
    %v2763 = vunpack.c.h.b16 %v2673
    %v2764 = vunpack.c.l.b16 %v2674
    %v2765 = vunpack.c.h.b16 %v2674
    %v2766 = vunpack.c.l.b16 %v2675
    %v2767 = vunpack.c.h.b16 %v2675
    %v2768 = vunpack.c.l.b16 %v2676
    %v2769 = vunpack.c.h.b16 %v2676
    %v2770 = vunpack.c.l.b16 %v2677
    %v2771 = vunpack.c.h.b16 %v2677
    %v2772 = vunpack.c.l.b16 %v2678
    %v2773 = vunpack.c.h.b16 %v2678
    %v2774 = vunpack.c.l.b16 %v2679
    %v2775 = vunpack.c.h.b16 %v2679
    %v2776 = vunpack.c.l.b16 %v2680
    %v2777 = vunpack.c.h.b16 %v2680
    %v2778 = vunpack.c.l.b16 %v2681
    %v2779 = vunpack.c.h.b16 %v2681
    %v2780 = vunpack.c.l.b16 %v2682
    %v2781 = vunpack.c.h.b16 %v2682
    %v2782 = vunpack.c.l.b16 %v2683
    %v2783 = vunpack.c.h.b16 %v2683
    %v2784 = vunpack.c.l.b16 %v2684
    %v2785 = vunpack.c.h.b16 %v2684
    %v2786 = vunpack.c.l.b16 %v2685
    %v2787 = vunpack.c.h.b16 %v2685
    %v2788 = vunpack.c.l.b16 %v2686
    %v2789 = vunpack.c.h.b16 %v2686
    %v2790 = vunpack.c.l.b16 %v2687
    %v2791 = vunpack.c.h.b16 %v2687
    %v2792 = vunpack.c.l.b16 %v2688
    %v2793 = vunpack.c.h.b16 %v2688
    %v2794 = vunpack.c.l.b16 %v2689
    %v2795 = vunpack.c.h.b16 %v2689
    %v2796 = vunpack.c.l.b16 %v2690
    %v2797 = vunpack.c.h.b16 %v2690
    %v2798 = vunpack.c.l.b16 %v2691
    %v2799 = vunpack.c.h.b16 %v2691
    %v2800 = vpack.c.b16 %v2738, %v2736
    %v2801 = vpack.c.b16 %v2739, %v2737
    %v2802 = vpack.c.b16 %v2742, %v2740
    %v2803 = vpack.c.b16 %v2743, %v2741
    %v2804 = vpack.c.b16 %v2746, %v2744
    %v2805 = vpack.c.b16 %v2747, %v2745
    %v2806 = vpack.c.b16 %v2750, %v2748
    %v2807 = vpack.c.b16 %v2751, %v2749
    %v2808 = vpack.c.b16 %v2754, %v2752
    %v2809 = vpack.c.b16 %v2755, %v2753
    %v2810 = vpack.c.b16 %v2758, %v2756
    %v2811 = vpack.c.b16 %v2759, %v2757
    %v2812 = vpack.c.b16 %v2762, %v2760
    %v2813 = vpack.c.b16 %v2763, %v2761
    %v2814 = vpack.c.b16 %v2766, %v2764
    %v2815 = vpack.c.b16 %v2767, %v2765
    %v2816 = vpack.c.b16 %v2770, %v2768
    %v2817 = vpack.c.b16 %v2771, %v2769
    %v2818 = vpack.c.b16 %v2774, %v2772
    %v2819 = vpack.c.b16 %v2775, %v2773
    %v2820 = vpack.c.b16 %v2778, %v2776
    %v2821 = vpack.c.b16 %v2779, %v2777
    %v2822 = vpack.c.b16 %v2782, %v2780
    %v2823 = vpack.c.b16 %v2783, %v2781
    %v2824 = vpack.c.b16 %v2786, %v2784
    %v2825 = vpack.c.b16 %v2787, %v2785
    %v2826 = vpack.c.b16 %v2790, %v2788
    %v2827 = vpack.c.b16 %v2791, %v2789
    %v2828 = vpack.c.b16 %v2794, %v2792
    %v2829 = vpack.c.b16 %v2795, %v2793
    %v2830 = vpack.c.b16 %v2798, %v2796
    %v2831 = vpack.c.b16 %v2799, %v2797
    %2864 = vmatprep.subr.bf16.mxu0 %v2801
    %2865 = vmatpush1.bf16.msra.mxu0 %v2800
    %2866 = vmatprep.subr.bf16.mxu0 %v2803
    %2867 = vmatpush1.bf16.msra.mxu0 %v2802
    %2868 = vmatprep.subr.bf16.mxu0 %v2805
    %2869 = vmatpush1.bf16.msra.mxu0 %v2804
    %2870 = vmatprep.subr.bf16.mxu0 %v2807
    %2871 = vmatpush1.bf16.msra.mxu0 %v2806
    %2872 = vmatprep.subr.bf16.mxu0 %v2809
    %2873 = vmatpush1.bf16.msra.mxu0 %v2808
    %2874 = vmatprep.subr.bf16.mxu0 %v2811
    %2875 = vmatpush1.bf16.msra.mxu0 %v2810
    %2876 = vmatprep.subr.bf16.mxu0 %v2813
    %2877 = vmatpush1.bf16.msra.mxu0 %v2812
    %2878 = vmatprep.subr.bf16.mxu0 %v2815
    %2879 = vmatpush1.bf16.msra.mxu0 %v2814
    %2880 = vmatprep.subr.bf16.mxu0 %v2817
    %2881 = vmatpush1.bf16.msra.mxu0 %v2816
    %2882 = vmatprep.subr.bf16.mxu0 %v2819
    %2883 = vmatpush1.bf16.msra.mxu0 %v2818
    %2884 = vmatprep.subr.bf16.mxu0 %v2821
    %2885 = vmatpush1.bf16.msra.mxu0 %v2820
    %2886 = vmatprep.subr.bf16.mxu0 %v2823
    %2887 = vmatpush1.bf16.msra.mxu0 %v2822
    %2888 = vmatprep.subr.bf16.mxu0 %v2825
    %2889 = vmatpush1.bf16.msra.mxu0 %v2824
    %2890 = vmatprep.subr.bf16.mxu0 %v2827
    %2891 = vmatpush1.bf16.msra.mxu0 %v2826
    %2892 = vmatprep.subr.bf16.mxu0 %v2829
    %2893 = vmatpush1.bf16.msra.mxu0 %v2828
    %2894 = vmatprep.subr.bf16.mxu0 %v2831
    %2895 = vmatpush1.bf16.msra.mxu0 %v2830
    %2896 = vmatprep.mubr.bf16.mxu0 %v2629
    %2897 = vmatmul.mubr.bf16.gmra.mrb[0].mxu0 %v2628
    %v2898 = vpop.f32.mrb[0].mxu0
    %v2899 = vadd.f32 %v2697, %v2898
    %v2900 = vpop.f32.mrb[0].mxu0
    %v2901 = vadd.f32 %v2701, %v2900
    %v2902 = vpop.f32.mrb[0].mxu0
    %v2903 = vadd.f32 %v2697, %v2902
    %v2904 = vpop.f32.mrb[0].mxu0
    %v2905 = vadd.f32 %v2701, %v2904
    %2906 = vmatprep.mubr.bf16.mxu0 %v2631
    %2907 = vmatmul.mubr.bf16.gmra.mrb[0].mxu0 %v2630
    %v2908 = vpop.f32.mrb[0].mxu0
    %v2909 = vadd.f32 %v2697, %v2908
    %v2910 = vpop.f32.mrb[0].mxu0
    %v2911 = vadd.f32 %v2701, %v2910
    %v2912 = vpop.f32.mrb[0].mxu0
    %v2913 = vadd.f32 %v2697, %v2912
    %v2914 = vpop.f32.mrb[0].mxu0
    %v2915 = vadd.f32 %v2701, %v2914
    %2916 = vmatprep.mubr.bf16.mxu0 %v2633
    %2917 = vmatmul.mubr.bf16.gmra.mrb[0].mxu0 %v2632
    %v2918 = vpop.f32.mrb[0].mxu0
    %v2919 = vadd.f32 %v2697, %v2918
    %v2920 = vpop.f32.mrb[0].mxu0
    %v2921 = vadd.f32 %v2701, %v2920
    %v2922 = vpop.f32.mrb[0].mxu0
    %v2923 = vadd.f32 %v2697, %v2922
    %v2924 = vpop.f32.mrb[0].mxu0
    %v2925 = vadd.f32 %v2701, %v2924
    %2926 = vmatprep.mubr.bf16.mxu0 %v2635
    %2927 = vmatmul.mubr.bf16.gmra.mrb[0].mxu0 %v2634
    %v2928 = vpop.f32.mrb[0].mxu0
    %v2929 = vadd.f32 %v2697, %v2928
    %v2930 = vpop.f32.mrb[0].mxu0
    %v2931 = vadd.f32 %v2701, %v2930
    %v2932 = vpop.f32.mrb[0].mxu0
    %v2933 = vadd.f32 %v2697, %v2932
    %v2934 = vpop.f32.mrb[0].mxu0
    %v2935 = vadd.f32 %v2701, %v2934
    %2936 = vmatprep.mubr.bf16.mxu0 %v2637
    %2937 = vmatmul.mubr.bf16.gmra.mrb[0].mxu0 %v2636
    %v2938 = vpop.f32.mrb[0].mxu0
    %v2939 = vadd.f32 %v2697, %v2938
    %v2940 = vpop.f32.mrb[0].mxu0
    %v2941 = vadd.f32 %v2701, %v2940
    %v2942 = vpop.f32.mrb[0].mxu0
    %v2943 = vadd.f32 %v2697, %v2942
    %v2944 = vpop.f32.mrb[0].mxu0
    %v2945 = vadd.f32 %v2701, %v2944
    %2946 = vmatprep.mubr.bf16.mxu0 %v2639
    %2947 = vmatmul.mubr.bf16.gmra.mrb[0].mxu0 %v2638
    %v2948 = vpop.f32.mrb[0].mxu0
    %v2949 = vadd.f32 %v2697, %v2948
    %v2950 = vpop.f32.mrb[0].mxu0
    %v2951 = vadd.f32 %v2701, %v2950
    %v2952 = vpop.f32.mrb[0].mxu0
    %v2953 = vadd.f32 %v2697, %v2952
    %v2954 = vpop.f32.mrb[0].mxu0
    %v2955 = vadd.f32 %v2701, %v2954
    %2956 = vmatprep.mubr.bf16.mxu0 %v2641
    %2957 = vmatmul.mubr.bf16.gmra.mrb[0].mxu0 %v2640
    %v2958 = vpop.f32.mrb[0].mxu0
    %v2959 = vadd.f32 %v2697, %v2958
    %v2960 = vpop.f32.mrb[0].mxu0
    %v2961 = vadd.f32 %v2701, %v2960
    %v2962 = vpop.f32.mrb[0].mxu0
    %v2963 = vadd.f32 %v2697, %v2962
    %v2964 = vpop.f32.mrb[0].mxu0
    %v2965 = vadd.f32 %v2701, %v2964
    %2966 = vmatprep.mubr.bf16.mxu0 %v2643
    %2967 = vmatmul.mubr.bf16.gmra.mrb[0].mxu0 %v2642
    %v2968 = vpop.f32.mrb[0].mxu0
    %v2969 = vadd.f32 %v2697, %v2968
    %v2970 = vpop.f32.mrb[0].mxu0
    %v2971 = vadd.f32 %v2701, %v2970
    %v2972 = vpop.f32.mrb[0].mxu0
    %v2973 = vadd.f32 %v2697, %v2972
    %v2974 = vpop.f32.mrb[0].mxu0
    %v2975 = vadd.f32 %v2701, %v2974
    %2976 = vmatprep.mubr.bf16.mxu0 %v2645
    %2977 = vmatmul.mubr.bf16.gmra.mrb[0].mxu0 %v2644
    %v2978 = vpop.f32.mrb[0].mxu0
    %v2979 = vadd.f32 %v2697, %v2978
    %v2980 = vpop.f32.mrb[0].mxu0
    %v2981 = vadd.f32 %v2701, %v2980
    %v2982 = vpop.f32.mrb[0].mxu0
    %v2983 = vadd.f32 %v2697, %v2982
    %v2984 = vpop.f32.mrb[0].mxu0
    %v2985 = vadd.f32 %v2701, %v2984
    %2986 = vmatprep.mubr.bf16.mxu0 %v2647
    %2987 = vmatmul.mubr.bf16.gmra.mrb[0].mxu0 %v2646
    %v2988 = vpop.f32.mrb[0].mxu0
    %v2989 = vadd.f32 %v2697, %v2988
    %v2990 = vpop.f32.mrb[0].mxu0
    %v2991 = vadd.f32 %v2701, %v2990
    %v2992 = vpop.f32.mrb[0].mxu0
    %v2993 = vadd.f32 %v2697, %v2992
    %v2994 = vpop.f32.mrb[0].mxu0
    %v2995 = vadd.f32 %v2701, %v2994
    %2996 = vmatprep.mubr.bf16.mxu0 %v2649
    %2997 = vmatmul.mubr.bf16.gmra.mrb[0].mxu0 %v2648
    %v2998 = vpop.f32.mrb[0].mxu0
    %v2999 = vadd.f32 %v2697, %v2998
    %v3000 = vpop.f32.mrb[0].mxu0
    %v3001 = vadd.f32 %v2701, %v3000
    %v3002 = vpop.f32.mrb[0].mxu0
    %v3003 = vadd.f32 %v2697, %v3002
    %v3004 = vpop.f32.mrb[0].mxu0
    %v3005 = vadd.f32 %v2701, %v3004
    %3006 = vmatprep.mubr.bf16.mxu0 %v2651
    %3007 = vmatmul.mubr.bf16.gmra.mrb[0].mxu0 %v2650
    %v3008 = vpop.f32.mrb[0].mxu0
    %v3009 = vadd.f32 %v2697, %v3008
    %v3010 = vpop.f32.mrb[0].mxu0
    %v3011 = vadd.f32 %v2701, %v3010
    %v3012 = vpop.f32.mrb[0].mxu0
    %v3013 = vadd.f32 %v2697, %v3012
    %v3014 = vpop.f32.mrb[0].mxu0
    %v3015 = vadd.f32 %v2701, %v3014
    %3016 = vmatprep.mubr.bf16.mxu0 %v2653
    %3017 = vmatmul.mubr.bf16.gmra.mrb[0].mxu0 %v2652
    %v3018 = vpop.f32.mrb[0].mxu0
    %v3019 = vadd.f32 %v2697, %v3018
    %v3020 = vpop.f32.mrb[0].mxu0
    %v3021 = vadd.f32 %v2701, %v3020
    %v3022 = vpop.f32.mrb[0].mxu0
    %v3023 = vadd.f32 %v2697, %v3022
    %v3024 = vpop.f32.mrb[0].mxu0
    %v3025 = vadd.f32 %v2701, %v3024
    %3026 = vmatprep.mubr.bf16.mxu0 %v2655
    %3027 = vmatmul.mubr.bf16.gmra.mrb[0].mxu0 %v2654
    %v3028 = vpop.f32.mrb[0].mxu0
    %v3029 = vadd.f32 %v2697, %v3028
    %v3030 = vpop.f32.mrb[0].mxu0
    %v3031 = vadd.f32 %v2701, %v3030
    %v3032 = vpop.f32.mrb[0].mxu0
    %v3033 = vadd.f32 %v2697, %v3032
    %v3034 = vpop.f32.mrb[0].mxu0
    %v3035 = vadd.f32 %v2701, %v3034
    %3036 = vmatprep.mubr.bf16.mxu0 %v2657
    %3037 = vmatmul.mubr.bf16.gmra.mrb[0].mxu0 %v2656
    %v3038 = vpop.f32.mrb[0].mxu0
    %v3039 = vadd.f32 %v2697, %v3038
    %v3040 = vpop.f32.mrb[0].mxu0
    %v3041 = vadd.f32 %v2701, %v3040
    %v3042 = vpop.f32.mrb[0].mxu0
    %v3043 = vadd.f32 %v2697, %v3042
    %v3044 = vpop.f32.mrb[0].mxu0
    %v3045 = vadd.f32 %v2701, %v3044
    %3046 = vmatprep.mubr.bf16.mxu0 %v2659
    %3047 = vmatmul.mubr.bf16.gmra.mrb[0].mxu0 %v2658
    %v3048 = vpop.f32.mrb[0].mxu0
    %v3049 = vadd.f32 %v2697, %v3048
    %v3050 = vpop.f32.mrb[0].mxu0
    %v3051 = vadd.f32 %v2701, %v3050
    %v3052 = vpop.f32.mrb[0].mxu0
    %v3053 = vadd.f32 %v2697, %v3052
    %v3054 = vpop.f32.mrb[0].mxu0
    %v3055 = vadd.f32 %v2701, %v3054
    %3056 = vdwg.mxu0
    %v3057 = vsub.f32 0.0, %v2899
    %v3058 = vsub.f32 0.0, %v2901
    %v3059 = vsub.f32 0.0, %v2903
    %v3060 = vsub.f32 0.0, %v2905
    %v3061 = vsub.f32 0.0, %v2909
    %v3062 = vsub.f32 0.0, %v2911
    %v3063 = vsub.f32 0.0, %v2913
    %v3064 = vsub.f32 0.0, %v2915
    %v3065 = vsub.f32 0.0, %v2919
    %v3066 = vsub.f32 0.0, %v2921
    %v3067 = vsub.f32 0.0, %v2923
    %v3068 = vsub.f32 0.0, %v2925
    %v3069 = vsub.f32 0.0, %v2929
    %v3070 = vsub.f32 0.0, %v2931
    %v3071 = vsub.f32 0.0, %v2933
    %v3072 = vsub.f32 0.0, %v2935
    %v3073 = vsub.f32 0.0, %v2939
    %v3074 = vsub.f32 0.0, %v2941
    %v3075 = vsub.f32 0.0, %v2943
    %v3076 = vsub.f32 0.0, %v2945
    %v3077 = vsub.f32 0.0, %v2949
    %v3078 = vsub.f32 0.0, %v2951
    %v3079 = vsub.f32 0.0, %v2953
    %v3080 = vsub.f32 0.0, %v2955
    %v3081 = vsub.f32 0.0, %v2959
    %v3082 = vsub.f32 0.0, %v2961
    %v3083 = vsub.f32 0.0, %v2963
    %v3084 = vsub.f32 0.0, %v2965
    %v3085 = vsub.f32 0.0, %v2969
    %v3086 = vsub.f32 0.0, %v2971
    %v3087 = vsub.f32 0.0, %v2973
    %v3088 = vsub.f32 0.0, %v2975
    %v3089 = vsub.f32 0.0, %v2979
    %v3090 = vsub.f32 0.0, %v2981
    %v3091 = vsub.f32 0.0, %v2983
    %v3092 = vsub.f32 0.0, %v2985
    %v3093 = vsub.f32 0.0, %v2989
    %v3094 = vsub.f32 0.0, %v2991
    %v3095 = vsub.f32 0.0, %v2993
    %v3096 = vsub.f32 0.0, %v2995
    %v3097 = vsub.f32 0.0, %v2999
    %v3098 = vsub.f32 0.0, %v3001
    %v3099 = vsub.f32 0.0, %v3003
    %v3100 = vsub.f32 0.0, %v3005
    %v3101 = vsub.f32 0.0, %v3009
    %v3102 = vsub.f32 0.0, %v3011
    %v3103 = vsub.f32 0.0, %v3013
    %v3104 = vsub.f32 0.0, %v3015
    %v3105 = vsub.f32 0.0, %v3019
    %v3106 = vsub.f32 0.0, %v3021
    %v3107 = vsub.f32 0.0, %v3023
    %v3108 = vsub.f32 0.0, %v3025
    %v3109 = vsub.f32 0.0, %v3029
    %v3110 = vsub.f32 0.0, %v3031
    %v3111 = vsub.f32 0.0, %v3033
    %v3112 = vsub.f32 0.0, %v3035
    %v3113 = vsub.f32 0.0, %v3039
    %v3114 = vsub.f32 0.0, %v3041
    %v3115 = vsub.f32 0.0, %v3043
    %v3116 = vsub.f32 0.0, %v3045
    %v3117 = vsub.f32 0.0, %v3049
    %v3118 = vsub.f32 0.0, %v3051
    %v3119 = vsub.f32 0.0, %v3053
    %v3120 = vsub.f32 0.0, %v3055
    %v3121 = vmul.f32 %v3057, 1.442695
    %v3122 = vpow.pop %v3121
    %v3123 = vmul.f32 %v3058, 1.442695
    %v3124 = vpow.pop %v3123
    %v3125 = vmul.f32 %v3059, 1.442695
    %v3126 = vpow.pop %v3125
    %v3127 = vmul.f32 %v3060, 1.442695
    %v3128 = vpow.pop %v3127
    %v3129 = vmul.f32 %v3061, 1.442695
    %v3130 = vpow.pop %v3129
    %v3131 = vmul.f32 %v3062, 1.442695
    %v3132 = vpow.pop %v3131
    %v3133 = vmul.f32 %v3063, 1.442695
    %v3134 = vpow.pop %v3133
    %v3135 = vmul.f32 %v3064, 1.442695
    %v3136 = vpow.pop %v3135
    %v3137 = vmul.f32 %v3065, 1.442695
    %v3138 = vpow.pop %v3137
    %v3139 = vmul.f32 %v3066, 1.442695
    %v3140 = vpow.pop %v3139
    %v3141 = vmul.f32 %v3067, 1.442695
    %v3142 = vpow.pop %v3141
    %v3143 = vmul.f32 %v3068, 1.442695
    %v3144 = vpow.pop %v3143
    %v3145 = vmul.f32 %v3069, 1.442695
    %v3146 = vpow.pop %v3145
    %v3147 = vmul.f32 %v3070, 1.442695
    %v3148 = vpow.pop %v3147
    %v3149 = vmul.f32 %v3071, 1.442695
    %v3150 = vpow.pop %v3149
    %v3151 = vmul.f32 %v3072, 1.442695
    %v3152 = vpow.pop %v3151
    %v3153 = vmul.f32 %v3073, 1.442695
    %v3154 = vpow.pop %v3153
    %v3155 = vmul.f32 %v3074, 1.442695
    %v3156 = vpow.pop %v3155
    %v3157 = vmul.f32 %v3075, 1.442695
    %v3158 = vpow.pop %v3157
    %v3159 = vmul.f32 %v3076, 1.442695
    %v3160 = vpow.pop %v3159
    %v3161 = vmul.f32 %v3077, 1.442695
    %v3162 = vpow.pop %v3161
    %v3163 = vmul.f32 %v3078, 1.442695
    %v3164 = vpow.pop %v3163
    %v3165 = vmul.f32 %v3079, 1.442695
    %v3166 = vpow.pop %v3165
    %v3167 = vmul.f32 %v3080, 1.442695
    %v3168 = vpow.pop %v3167
    %v3169 = vmul.f32 %v3081, 1.442695
    %v3170 = vpow.pop %v3169
    %v3171 = vmul.f32 %v3082, 1.442695
    %v3172 = vpow.pop %v3171
    %v3173 = vmul.f32 %v3083, 1.442695
    %v3174 = vpow.pop %v3173
    %v3175 = vmul.f32 %v3084, 1.442695
    %v3176 = vpow.pop %v3175
    %v3177 = vmul.f32 %v3085, 1.442695
    %v3178 = vpow.pop %v3177
    %v3179 = vmul.f32 %v3086, 1.442695
    %v3180 = vpow.pop %v3179
    %v3181 = vmul.f32 %v3087, 1.442695
    %v3182 = vpow.pop %v3181
    %v3183 = vmul.f32 %v3088, 1.442695
    %v3184 = vpow.pop %v3183
    %v3185 = vmul.f32 %v3089, 1.442695
    %v3186 = vpow.pop %v3185
    %v3187 = vmul.f32 %v3090, 1.442695
    %v3188 = vpow.pop %v3187
    %v3189 = vmul.f32 %v3091, 1.442695
    %v3190 = vpow.pop %v3189
    %v3191 = vmul.f32 %v3092, 1.442695
    %v3192 = vpow.pop %v3191
    %v3193 = vmul.f32 %v3093, 1.442695
    %v3194 = vpow.pop %v3193
    %v3195 = vmul.f32 %v3094, 1.442695
    %v3196 = vpow.pop %v3195
    %v3197 = vmul.f32 %v3095, 1.442695
    %v3198 = vpow.pop %v3197
    %v3199 = vmul.f32 %v3096, 1.442695
    %v3200 = vpow.pop %v3199
    %v3201 = vmul.f32 %v3097, 1.442695
    %v3202 = vpow.pop %v3201
    %v3203 = vmul.f32 %v3098, 1.442695
    %v3204 = vpow.pop %v3203
    %v3205 = vmul.f32 %v3099, 1.442695
    %v3206 = vpow.pop %v3205
    %v3207 = vmul.f32 %v3100, 1.442695
    %v3208 = vpow.pop %v3207
    %v3209 = vmul.f32 %v3101, 1.442695
    %v3210 = vpow.pop %v3209
    %v3211 = vmul.f32 %v3102, 1.442695
    %v3212 = vpow.pop %v3211
    %v3213 = vmul.f32 %v3103, 1.442695
    %v3214 = vpow.pop %v3213
    %v3215 = vmul.f32 %v3104, 1.442695
    %v3216 = vpow.pop %v3215
    %v3217 = vmul.f32 %v3105, 1.442695
    %v3218 = vpow.pop %v3217
    %v3219 = vmul.f32 %v3106, 1.442695
    %v3220 = vpow.pop %v3219
    %v3221 = vmul.f32 %v3107, 1.442695
    %v3222 = vpow.pop %v3221
    %v3223 = vmul.f32 %v3108, 1.442695
    %v3224 = vpow.pop %v3223
    %v3225 = vmul.f32 %v3109, 1.442695
    %v3226 = vpow.pop %v3225
    %v3227 = vmul.f32 %v3110, 1.442695
    %v3228 = vpow.pop %v3227
    %v3229 = vmul.f32 %v3111, 1.442695
    %v3230 = vpow.pop %v3229
    %v3231 = vmul.f32 %v3112, 1.442695
    %v3232 = vpow.pop %v3231
    %v3233 = vmul.f32 %v3113, 1.442695
    %v3234 = vpow.pop %v3233
    %v3235 = vmul.f32 %v3114, 1.442695
    %v3236 = vpow.pop %v3235
    %v3237 = vmul.f32 %v3115, 1.442695
    %v3238 = vpow.pop %v3237
    %v3239 = vmul.f32 %v3116, 1.442695
    %v3240 = vpow.pop %v3239
    %v3241 = vmul.f32 %v3117, 1.442695
    %v3242 = vpow.pop %v3241
    %v3243 = vmul.f32 %v3118, 1.442695
    %v3244 = vpow.pop %v3243
    %v3245 = vmul.f32 %v3119, 1.442695
    %v3246 = vpow.pop %v3245
    %v3247 = vmul.f32 %v3120, 1.442695
    %v3248 = vpow.pop %v3247
    %v3249 = vadd.f32 %v3122, 1.0
    %v3250 = vadd.f32 %v3124, 1.0
    %v3251 = vadd.f32 %v3126, 1.0
    %v3252 = vadd.f32 %v3128, 1.0
    %v3253 = vadd.f32 %v3130, 1.0
    %v3254 = vadd.f32 %v3132, 1.0
    %v3255 = vadd.f32 %v3134, 1.0
    %v3256 = vadd.f32 %v3136, 1.0
    %v3257 = vadd.f32 %v3138, 1.0
    %v3258 = vadd.f32 %v3140, 1.0
    %v3259 = vadd.f32 %v3142, 1.0
    %v3260 = vadd.f32 %v3144, 1.0
    %v3261 = vadd.f32 %v3146, 1.0
    %v3262 = vadd.f32 %v3148, 1.0
    %v3263 = vadd.f32 %v3150, 1.0
    %v3264 = vadd.f32 %v3152, 1.0
    %v3265 = vadd.f32 %v3154, 1.0
    %v3266 = vadd.f32 %v3156, 1.0
    %v3267 = vadd.f32 %v3158, 1.0
    %v3268 = vadd.f32 %v3160, 1.0
    %v3269 = vadd.f32 %v3162, 1.0
    %v3270 = vadd.f32 %v3164, 1.0
    %v3271 = vadd.f32 %v3166, 1.0
    %v3272 = vadd.f32 %v3168, 1.0
    %v3273 = vadd.f32 %v3170, 1.0
    %v3274 = vadd.f32 %v3172, 1.0
    %v3275 = vadd.f32 %v3174, 1.0
    %v3276 = vadd.f32 %v3176, 1.0
    %v3277 = vadd.f32 %v3178, 1.0
    %v3278 = vadd.f32 %v3180, 1.0
    %v3279 = vadd.f32 %v3182, 1.0
    %v3280 = vadd.f32 %v3184, 1.0
    %v3281 = vadd.f32 %v3186, 1.0
    %v3282 = vadd.f32 %v3188, 1.0
    %v3283 = vadd.f32 %v3190, 1.0
    %v3284 = vadd.f32 %v3192, 1.0
    %v3285 = vadd.f32 %v3194, 1.0
    %v3286 = vadd.f32 %v3196, 1.0
    %v3287 = vadd.f32 %v3198, 1.0
    %v3288 = vadd.f32 %v3200, 1.0
    %v3289 = vadd.f32 %v3202, 1.0
    %v3290 = vadd.f32 %v3204, 1.0
    %v3291 = vadd.f32 %v3206, 1.0
    %v3292 = vadd.f32 %v3208, 1.0
    %v3293 = vadd.f32 %v3210, 1.0
    %v3294 = vadd.f32 %v3212, 1.0
    %v3295 = vadd.f32 %v3214, 1.0
    %v3296 = vadd.f32 %v3216, 1.0
    %v3297 = vadd.f32 %v3218, 1.0
    %v3298 = vadd.f32 %v3220, 1.0
    %v3299 = vadd.f32 %v3222, 1.0
    %v3300 = vadd.f32 %v3224, 1.0
    %v3301 = vadd.f32 %v3226, 1.0
    %v3302 = vadd.f32 %v3228, 1.0
    %v3303 = vadd.f32 %v3230, 1.0
    %v3304 = vadd.f32 %v3232, 1.0
    %v3305 = vadd.f32 %v3234, 1.0
    %v3306 = vadd.f32 %v3236, 1.0
    %v3307 = vadd.f32 %v3238, 1.0
    %v3308 = vadd.f32 %v3240, 1.0
    %v3309 = vadd.f32 %v3242, 1.0
    %v3310 = vadd.f32 %v3244, 1.0
    %v3311 = vadd.f32 %v3246, 1.0
    %v3312 = vadd.f32 %v3248, 1.0
    %v3313 = vrcp.pop %v3249
    %v3314 = vrcp.pop %v3250
    %v3315 = vrcp.pop %v3251
    %v3316 = vrcp.pop %v3252
    %v3317 = vrcp.pop %v3253
    %v3318 = vrcp.pop %v3254
    %v3319 = vrcp.pop %v3255
    %v3320 = vrcp.pop %v3256
    %v3321 = vrcp.pop %v3257
    %v3322 = vrcp.pop %v3258
    %v3323 = vrcp.pop %v3259
    %v3324 = vrcp.pop %v3260
    %v3325 = vrcp.pop %v3261
    %v3326 = vrcp.pop %v3262
    %v3327 = vrcp.pop %v3263
    %v3328 = vrcp.pop %v3264
    %v3329 = vrcp.pop %v3265
    %v3330 = vrcp.pop %v3266
    %v3331 = vrcp.pop %v3267
    %v3332 = vrcp.pop %v3268
    %v3333 = vrcp.pop %v3269
    %v3334 = vrcp.pop %v3270
    %v3335 = vrcp.pop %v3271
    %v3336 = vrcp.pop %v3272
    %v3337 = vrcp.pop %v3273
    %v3338 = vrcp.pop %v3274
    %v3339 = vrcp.pop %v3275
    %v3340 = vrcp.pop %v3276
    %v3341 = vrcp.pop %v3277
    %v3342 = vrcp.pop %v3278
    %v3343 = vrcp.pop %v3279
    %v3344 = vrcp.pop %v3280
    %v3345 = vrcp.pop %v3281
    %v3346 = vrcp.pop %v3282
    %v3347 = vrcp.pop %v3283
    %v3348 = vrcp.pop %v3284
    %v3349 = vrcp.pop %v3285
    %v3350 = vrcp.pop %v3286
    %v3351 = vrcp.pop %v3287
    %v3352 = vrcp.pop %v3288
    %v3353 = vrcp.pop %v3289
    %v3354 = vrcp.pop %v3290
    %v3355 = vrcp.pop %v3291
    %v3356 = vrcp.pop %v3292
    %v3357 = vrcp.pop %v3293
    %v3358 = vrcp.pop %v3294
    %v3359 = vrcp.pop %v3295
    %v3360 = vrcp.pop %v3296
    %v3361 = vrcp.pop %v3297
    %v3362 = vrcp.pop %v3298
    %v3363 = vrcp.pop %v3299
    %v3364 = vrcp.pop %v3300
    %v3365 = vrcp.pop %v3301
    %v3366 = vrcp.pop %v3302
    %v3367 = vrcp.pop %v3303
    %v3368 = vrcp.pop %v3304
    %v3369 = vrcp.pop %v3305
    %v3370 = vrcp.pop %v3306
    %v3371 = vrcp.pop %v3307
    %v3372 = vrcp.pop %v3308
    %v3373 = vrcp.pop %v3309
    %v3374 = vrcp.pop %v3310
    %v3375 = vrcp.pop %v3311
    %v3376 = vrcp.pop %v3312
    %v3377 = vpack.c.bf16 %v3315, %v3313
    %v3378 = vpack.c.bf16 %v3316, %v3314
    %v3379 = vpack.c.bf16 %v3319, %v3317
    %v3380 = vpack.c.bf16 %v3320, %v3318
    %v3381 = vpack.c.bf16 %v3323, %v3321
    %v3382 = vpack.c.bf16 %v3324, %v3322
    %v3383 = vpack.c.bf16 %v3327, %v3325
    %v3384 = vpack.c.bf16 %v3328, %v3326
    %v3385 = vpack.c.bf16 %v3331, %v3329
    %v3386 = vpack.c.bf16 %v3332, %v3330
    %v3387 = vpack.c.bf16 %v3335, %v3333
    %v3388 = vpack.c.bf16 %v3336, %v3334
    %v3389 = vpack.c.bf16 %v3339, %v3337
    %v3390 = vpack.c.bf16 %v3340, %v3338
    %v3391 = vpack.c.bf16 %v3343, %v3341
    %v3392 = vpack.c.bf16 %v3344, %v3342
    %v3393 = vpack.c.bf16 %v3347, %v3345
    %v3394 = vpack.c.bf16 %v3348, %v3346
    %v3395 = vpack.c.bf16 %v3351, %v3349
    %v3396 = vpack.c.bf16 %v3352, %v3350
    %v3397 = vpack.c.bf16 %v3355, %v3353
    %v3398 = vpack.c.bf16 %v3356, %v3354
    %v3399 = vpack.c.bf16 %v3359, %v3357
    %v3400 = vpack.c.bf16 %v3360, %v3358
    %v3401 = vpack.c.bf16 %v3363, %v3361
    %v3402 = vpack.c.bf16 %v3364, %v3362
    %v3403 = vpack.c.bf16 %v3367, %v3365
    %v3404 = vpack.c.bf16 %v3368, %v3366
    %v3405 = vpack.c.bf16 %v3371, %v3369
    %v3406 = vpack.c.bf16 %v3372, %v3370
    %v3407 = vpack.c.bf16 %v3375, %v3373
    %v3408 = vpack.c.bf16 %v3376, %v3374
    %v3409 = vld [vmem:[#allocation11] sm:$0xff]
    %v3410 = vld [vmem:[#allocation11 + $0x8] sm:$0xff]
    %v3411 = vld [vmem:[#allocation11 + $0x10] sm:$0xff]
    %v3412 = vld [vmem:[#allocation11 + $0x18] sm:$0xff]
    %v3413 = vld [vmem:[#allocation11 + $0x20] sm:$0xff]
    %v3414 = vld [vmem:[#allocation11 + $0x28] sm:$0xff]
    %v3415 = vld [vmem:[#allocation11 + $0x30] sm:$0xff]
    %v3416 = vld [vmem:[#allocation11 + $0x38] sm:$0xff]
    %v3417 = vld [vmem:[#allocation11 + $0x40] sm:$0xff]
    %v3418 = vld [vmem:[#allocation11 + $0x48] sm:$0xff]
    %v3419 = vld [vmem:[#allocation11 + $0x50] sm:$0xff]
    %v3420 = vld [vmem:[#allocation11 + $0x58] sm:$0xff]
    %v3421 = vld [vmem:[#allocation11 + $0x60] sm:$0xff]
    %v3422 = vld [vmem:[#allocation11 + $0x68] sm:$0xff]
    %v3423 = vld [vmem:[#allocation11 + $0x70] sm:$0xff]
    %v3424 = vld [vmem:[#allocation11 + $0x78] sm:$0xff]
    %v3425 = vld [vmem:[#allocation11 + $0x80] sm:$0xff]
    %v3426 = vld [vmem:[#allocation11 + $0x88] sm:$0xff]
    %v3427 = vld [vmem:[#allocation11 + $0x90] sm:$0xff]
    %v3428 = vld [vmem:[#allocation11 + $0x98] sm:$0xff]
    %v3429 = vld [vmem:[#allocation11 + $0xa0] sm:$0xff]
    %v3430 = vld [vmem:[#allocation11 + $0xa8] sm:$0xff]
    %v3431 = vld [vmem:[#allocation11 + $0xb0] sm:$0xff]
    %v3432 = vld [vmem:[#allocation11 + $0xb8] sm:$0xff]
    %v3433 = vld [vmem:[#allocation11 + $0xc0] sm:$0xff]
    %v3434 = vld [vmem:[#allocation11 + $0xc8] sm:$0xff]
    %v3435 = vld [vmem:[#allocation11 + $0xd0] sm:$0xff]
    %v3436 = vld [vmem:[#allocation11 + $0xd8] sm:$0xff]
    %v3437 = vld [vmem:[#allocation11 + $0xe0] sm:$0xff]
    %v3438 = vld [vmem:[#allocation11 + $0xe8] sm:$0xff]
    %v3439 = vld [vmem:[#allocation11 + $0xf0] sm:$0xff]
    %v3440 = vld [vmem:[#allocation11 + $0xf8] sm:$0xff]
    %v3441 = vld [vmem:[#allocation13] sm:$0x3]
    %v3443 = vlaneseq
    %v3444 = vshrl.u32 %v3443, 7
    %v3445 = vsub.s32 0, %v3444
    %v3446 = vrot.slane %v3441, %v3445
    %v3447 = vlaneseq
    %v3448 = vshrl.u32 %v3447, 7
    %v3449 = vsub.s32 1, %v3448
    %v3450 = vrot.slane %v3441, %v3449
    %v3485 = vunpack.c.l.b16 %v3409
    %v3486 = vunpack.c.h.b16 %v3409
    %v3487 = vunpack.c.l.b16 %v3410
    %v3488 = vunpack.c.h.b16 %v3410
    %v3489 = vunpack.c.l.b16 %v3411
    %v3490 = vunpack.c.h.b16 %v3411
    %v3491 = vunpack.c.l.b16 %v3412
    %v3492 = vunpack.c.h.b16 %v3412
    %v3493 = vunpack.c.l.b16 %v3413
    %v3494 = vunpack.c.h.b16 %v3413
    %v3495 = vunpack.c.l.b16 %v3414
    %v3496 = vunpack.c.h.b16 %v3414
    %v3497 = vunpack.c.l.b16 %v3415
    %v3498 = vunpack.c.h.b16 %v3415
    %v3499 = vunpack.c.l.b16 %v3416
    %v3500 = vunpack.c.h.b16 %v3416
    %v3501 = vunpack.c.l.b16 %v3417
    %v3502 = vunpack.c.h.b16 %v3417
    %v3503 = vunpack.c.l.b16 %v3418
    %v3504 = vunpack.c.h.b16 %v3418
    %v3505 = vunpack.c.l.b16 %v3419
    %v3506 = vunpack.c.h.b16 %v3419
    %v3507 = vunpack.c.l.b16 %v3420
    %v3508 = vunpack.c.h.b16 %v3420
    %v3509 = vunpack.c.l.b16 %v3421
    %v3510 = vunpack.c.h.b16 %v3421
    %v3511 = vunpack.c.l.b16 %v3422
    %v3512 = vunpack.c.h.b16 %v3422
    %v3513 = vunpack.c.l.b16 %v3423
    %v3514 = vunpack.c.h.b16 %v3423
    %v3515 = vunpack.c.l.b16 %v3424
    %v3516 = vunpack.c.h.b16 %v3424
    %v3517 = vunpack.c.l.b16 %v3425
    %v3518 = vunpack.c.h.b16 %v3425
    %v3519 = vunpack.c.l.b16 %v3426
    %v3520 = vunpack.c.h.b16 %v3426
    %v3521 = vunpack.c.l.b16 %v3427
    %v3522 = vunpack.c.h.b16 %v3427
    %v3523 = vunpack.c.l.b16 %v3428
    %v3524 = vunpack.c.h.b16 %v3428
    %v3525 = vunpack.c.l.b16 %v3429
    %v3526 = vunpack.c.h.b16 %v3429
    %v3527 = vunpack.c.l.b16 %v3430
    %v3528 = vunpack.c.h.b16 %v3430
    %v3529 = vunpack.c.l.b16 %v3431
    %v3530 = vunpack.c.h.b16 %v3431
    %v3531 = vunpack.c.l.b16 %v3432
    %v3532 = vunpack.c.h.b16 %v3432
    %v3533 = vunpack.c.l.b16 %v3433
    %v3534 = vunpack.c.h.b16 %v3433
    %v3535 = vunpack.c.l.b16 %v3434
    %v3536 = vunpack.c.h.b16 %v3434
    %v3537 = vunpack.c.l.b16 %v3435
    %v3538 = vunpack.c.h.b16 %v3435
    %v3539 = vunpack.c.l.b16 %v3436
    %v3540 = vunpack.c.h.b16 %v3436
    %v3541 = vunpack.c.l.b16 %v3437
    %v3542 = vunpack.c.h.b16 %v3437
    %v3543 = vunpack.c.l.b16 %v3438
    %v3544 = vunpack.c.h.b16 %v3438
    %v3545 = vunpack.c.l.b16 %v3439
    %v3546 = vunpack.c.h.b16 %v3439
    %v3547 = vunpack.c.l.b16 %v3440
    %v3548 = vunpack.c.h.b16 %v3440
    %v3549 = vpack.c.b16 %v3487, %v3485
    %v3550 = vpack.c.b16 %v3488, %v3486
    %v3551 = vpack.c.b16 %v3491, %v3489
    %v3552 = vpack.c.b16 %v3492, %v3490
    %v3553 = vpack.c.b16 %v3495, %v3493
    %v3554 = vpack.c.b16 %v3496, %v3494
    %v3555 = vpack.c.b16 %v3499, %v3497
    %v3556 = vpack.c.b16 %v3500, %v3498
    %v3557 = vpack.c.b16 %v3503, %v3501
    %v3558 = vpack.c.b16 %v3504, %v3502
    %v3559 = vpack.c.b16 %v3507, %v3505
    %v3560 = vpack.c.b16 %v3508, %v3506
    %v3561 = vpack.c.b16 %v3511, %v3509
    %v3562 = vpack.c.b16 %v3512, %v3510
    %v3563 = vpack.c.b16 %v3515, %v3513
    %v3564 = vpack.c.b16 %v3516, %v3514
    %v3565 = vpack.c.b16 %v3519, %v3517
    %v3566 = vpack.c.b16 %v3520, %v3518
    %v3567 = vpack.c.b16 %v3523, %v3521
    %v3568 = vpack.c.b16 %v3524, %v3522
    %v3569 = vpack.c.b16 %v3527, %v3525
    %v3570 = vpack.c.b16 %v3528, %v3526
    %v3571 = vpack.c.b16 %v3531, %v3529
    %v3572 = vpack.c.b16 %v3532, %v3530
    %v3573 = vpack.c.b16 %v3535, %v3533
    %v3574 = vpack.c.b16 %v3536, %v3534
    %v3575 = vpack.c.b16 %v3539, %v3537
    %v3576 = vpack.c.b16 %v3540, %v3538
    %v3577 = vpack.c.b16 %v3543, %v3541
    %v3578 = vpack.c.b16 %v3544, %v3542
    %v3579 = vpack.c.b16 %v3547, %v3545
    %v3580 = vpack.c.b16 %v3548, %v3546
    %3613 = vmatprep.subr.bf16.mxu0 %v3550
    %3614 = vmatpush1.bf16.msra.mxu0 %v3549
    %3615 = vmatprep.subr.bf16.mxu0 %v3552
    %3616 = vmatpush1.bf16.msra.mxu0 %v3551
    %3617 = vmatprep.subr.bf16.mxu0 %v3554
    %3618 = vmatpush1.bf16.msra.mxu0 %v3553
    %3619 = vmatprep.subr.bf16.mxu0 %v3556
    %3620 = vmatpush1.bf16.msra.mxu0 %v3555
    %3621 = vmatprep.subr.bf16.mxu0 %v3558
    %3622 = vmatpush1.bf16.msra.mxu0 %v3557
    %3623 = vmatprep.subr.bf16.mxu0 %v3560
    %3624 = vmatpush1.bf16.msra.mxu0 %v3559
    %3625 = vmatprep.subr.bf16.mxu0 %v3562
    %3626 = vmatpush1.bf16.msra.mxu0 %v3561
    %3627 = vmatprep.subr.bf16.mxu0 %v3564
    %3628 = vmatpush1.bf16.msra.mxu0 %v3563
    %3629 = vmatprep.subr.bf16.mxu0 %v3566
    %3630 = vmatpush1.bf16.msra.mxu0 %v3565
    %3631 = vmatprep.subr.bf16.mxu0 %v3568
    %3632 = vmatpush1.bf16.msra.mxu0 %v3567
    %3633 = vmatprep.subr.bf16.mxu0 %v3570
    %3634 = vmatpush1.bf16.msra.mxu0 %v3569
    %3635 = vmatprep.subr.bf16.mxu0 %v3572
    %3636 = vmatpush1.bf16.msra.mxu0 %v3571
    %3637 = vmatprep.subr.bf16.mxu0 %v3574
    %3638 = vmatpush1.bf16.msra.mxu0 %v3573
    %3639 = vmatprep.subr.bf16.mxu0 %v3576
    %3640 = vmatpush1.bf16.msra.mxu0 %v3575
    %3641 = vmatprep.subr.bf16.mxu0 %v3578
    %3642 = vmatpush1.bf16.msra.mxu0 %v3577
    %3643 = vmatprep.subr.bf16.mxu0 %v3580
    %3644 = vmatpush1.bf16.msra.mxu0 %v3579
    %3645 = vmatprep.mubr.bf16.mxu0 %v3378
    %3646 = vmatmul.mubr.bf16.gmra.mrb[0].mxu0 %v3377
    %v3647 = vpop.f32.mrb[0].mxu0
    %v3648 = vadd.f32 %v3446, %v3647
    %v3649 = vpop.f32.mrb[0].mxu0
    %v3650 = vadd.f32 %v3450, %v3649
    %v3651 = vpop.f32.mrb[0].mxu0
    %v3652 = vadd.f32 %v3446, %v3651
    %v3653 = vpop.f32.mrb[0].mxu0
    %v3654 = vadd.f32 %v3450, %v3653
    %3655 = vmatprep.mubr.bf16.mxu0 %v3380
    %3656 = vmatmul.mubr.bf16.gmra.mrb[0].mxu0 %v3379
    %v3657 = vpop.f32.mrb[0].mxu0
    %v3658 = vadd.f32 %v3446, %v3657
    %v3659 = vpop.f32.mrb[0].mxu0
    %v3660 = vadd.f32 %v3450, %v3659
    %v3661 = vpop.f32.mrb[0].mxu0
    %v3662 = vadd.f32 %v3446, %v3661
    %v3663 = vpop.f32.mrb[0].mxu0
    %v3664 = vadd.f32 %v3450, %v3663
    %3665 = vmatprep.mubr.bf16.mxu0 %v3382
    %3666 = vmatmul.mubr.bf16.gmra.mrb[0].mxu0 %v3381
    %v3667 = vpop.f32.mrb[0].mxu0
    %v3668 = vadd.f32 %v3446, %v3667
    %v3669 = vpop.f32.mrb[0].mxu0
    %v3670 = vadd.f32 %v3450, %v3669
    %v3671 = vpop.f32.mrb[0].mxu0
    %v3672 = vadd.f32 %v3446, %v3671
    %v3673 = vpop.f32.mrb[0].mxu0
    %v3674 = vadd.f32 %v3450, %v3673
    %3675 = vmatprep.mubr.bf16.mxu0 %v3384
    %3676 = vmatmul.mubr.bf16.gmra.mrb[0].mxu0 %v3383
    %v3677 = vpop.f32.mrb[0].mxu0
    %v3678 = vadd.f32 %v3446, %v3677
    %v3679 = vpop.f32.mrb[0].mxu0
    %v3680 = vadd.f32 %v3450, %v3679
    %v3681 = vpop.f32.mrb[0].mxu0
    %v3682 = vadd.f32 %v3446, %v3681
    %v3683 = vpop.f32.mrb[0].mxu0
    %v3684 = vadd.f32 %v3450, %v3683
    %3685 = vmatprep.mubr.bf16.mxu0 %v3386
    %3686 = vmatmul.mubr.bf16.gmra.mrb[0].mxu0 %v3385
    %v3687 = vpop.f32.mrb[0].mxu0
    %v3688 = vadd.f32 %v3446, %v3687
    %v3689 = vpop.f32.mrb[0].mxu0
    %v3690 = vadd.f32 %v3450, %v3689
    %v3691 = vpop.f32.mrb[0].mxu0
    %v3692 = vadd.f32 %v3446, %v3691
    %v3693 = vpop.f32.mrb[0].mxu0
    %v3694 = vadd.f32 %v3450, %v3693
    %3695 = vmatprep.mubr.bf16.mxu0 %v3388
    %3696 = vmatmul.mubr.bf16.gmra.mrb[0].mxu0 %v3387
    %v3697 = vpop.f32.mrb[0].mxu0
    %v3698 = vadd.f32 %v3446, %v3697
    %v3699 = vpop.f32.mrb[0].mxu0
    %v3700 = vadd.f32 %v3450, %v3699
    %v3701 = vpop.f32.mrb[0].mxu0
    %v3702 = vadd.f32 %v3446, %v3701
    %v3703 = vpop.f32.mrb[0].mxu0
    %v3704 = vadd.f32 %v3450, %v3703
    %3705 = vmatprep.mubr.bf16.mxu0 %v3390
    %3706 = vmatmul.mubr.bf16.gmra.mrb[0].mxu0 %v3389
    %v3707 = vpop.f32.mrb[0].mxu0
    %v3708 = vadd.f32 %v3446, %v3707
    %v3709 = vpop.f32.mrb[0].mxu0
    %v3710 = vadd.f32 %v3450, %v3709
    %v3711 = vpop.f32.mrb[0].mxu0
    %v3712 = vadd.f32 %v3446, %v3711
    %v3713 = vpop.f32.mrb[0].mxu0
    %v3714 = vadd.f32 %v3450, %v3713
    %3715 = vmatprep.mubr.bf16.mxu0 %v3392
    %3716 = vmatmul.mubr.bf16.gmra.mrb[0].mxu0 %v3391
    %v3717 = vpop.f32.mrb[0].mxu0
    %v3718 = vadd.f32 %v3446, %v3717
    %v3719 = vpop.f32.mrb[0].mxu0
    %v3720 = vadd.f32 %v3450, %v3719
    %v3721 = vpop.f32.mrb[0].mxu0
    %v3722 = vadd.f32 %v3446, %v3721
    %v3723 = vpop.f32.mrb[0].mxu0
    %v3724 = vadd.f32 %v3450, %v3723
    %3725 = vmatprep.mubr.bf16.mxu0 %v3394
    %3726 = vmatmul.mubr.bf16.gmra.mrb[0].mxu0 %v3393
    %v3727 = vpop.f32.mrb[0].mxu0
    %v3728 = vadd.f32 %v3446, %v3727
    %v3729 = vpop.f32.mrb[0].mxu0
    %v3730 = vadd.f32 %v3450, %v3729
    %v3731 = vpop.f32.mrb[0].mxu0
    %v3732 = vadd.f32 %v3446, %v3731
    %v3733 = vpop.f32.mrb[0].mxu0
    %v3734 = vadd.f32 %v3450, %v3733
    %3735 = vmatprep.mubr.bf16.mxu0 %v3396
    %3736 = vmatmul.mubr.bf16.gmra.mrb[0].mxu0 %v3395
    %v3737 = vpop.f32.mrb[0].mxu0
    %v3738 = vadd.f32 %v3446, %v3737
    %v3739 = vpop.f32.mrb[0].mxu0
    %v3740 = vadd.f32 %v3450, %v3739
    %v3741 = vpop.f32.mrb[0].mxu0
    %v3742 = vadd.f32 %v3446, %v3741
    %v3743 = vpop.f32.mrb[0].mxu0
    %v3744 = vadd.f32 %v3450, %v3743
    %3745 = vmatprep.mubr.bf16.mxu0 %v3398
    %3746 = vmatmul.mubr.bf16.gmra.mrb[0].mxu0 %v3397
    %v3747 = vpop.f32.mrb[0].mxu0
    %v3748 = vadd.f32 %v3446, %v3747
    %v3749 = vpop.f32.mrb[0].mxu0
    %v3750 = vadd.f32 %v3450, %v3749
    %v3751 = vpop.f32.mrb[0].mxu0
    %v3752 = vadd.f32 %v3446, %v3751
    %v3753 = vpop.f32.mrb[0].mxu0
    %v3754 = vadd.f32 %v3450, %v3753
    %3755 = vmatprep.mubr.bf16.mxu0 %v3400
    %3756 = vmatmul.mubr.bf16.gmra.mrb[0].mxu0 %v3399
    %v3757 = vpop.f32.mrb[0].mxu0
    %v3758 = vadd.f32 %v3446, %v3757
    %v3759 = vpop.f32.mrb[0].mxu0
    %v3760 = vadd.f32 %v3450, %v3759
    %v3761 = vpop.f32.mrb[0].mxu0
    %v3762 = vadd.f32 %v3446, %v3761
    %v3763 = vpop.f32.mrb[0].mxu0
    %v3764 = vadd.f32 %v3450, %v3763
    %3765 = vmatprep.mubr.bf16.mxu0 %v3402
    %3766 = vmatmul.mubr.bf16.gmra.mrb[0].mxu0 %v3401
    %v3767 = vpop.f32.mrb[0].mxu0
    %v3768 = vadd.f32 %v3446, %v3767
    %v3769 = vpop.f32.mrb[0].mxu0
    %v3770 = vadd.f32 %v3450, %v3769
    %v3771 = vpop.f32.mrb[0].mxu0
    %v3772 = vadd.f32 %v3446, %v3771
    %v3773 = vpop.f32.mrb[0].mxu0
    %v3774 = vadd.f32 %v3450, %v3773
    %3775 = vmatprep.mubr.bf16.mxu0 %v3404
    %3776 = vmatmul.mubr.bf16.gmra.mrb[0].mxu0 %v3403
    %v3777 = vpop.f32.mrb[0].mxu0
    %v3778 = vadd.f32 %v3446, %v3777
    %v3779 = vpop.f32.mrb[0].mxu0
    %v3780 = vadd.f32 %v3450, %v3779
    %v3781 = vpop.f32.mrb[0].mxu0
    %v3782 = vadd.f32 %v3446, %v3781
    %v3783 = vpop.f32.mrb[0].mxu0
    %v3784 = vadd.f32 %v3450, %v3783
    %3785 = vmatprep.mubr.bf16.mxu0 %v3406
    %3786 = vmatmul.mubr.bf16.gmra.mrb[0].mxu0 %v3405
    %v3787 = vpop.f32.mrb[0].mxu0
    %v3788 = vadd.f32 %v3446, %v3787
    %v3789 = vpop.f32.mrb[0].mxu0
    %v3790 = vadd.f32 %v3450, %v3789
    %v3791 = vpop.f32.mrb[0].mxu0
    %v3792 = vadd.f32 %v3446, %v3791
    %v3793 = vpop.f32.mrb[0].mxu0
    %v3794 = vadd.f32 %v3450, %v3793
    %3795 = vmatprep.mubr.bf16.mxu0 %v3408
    %3796 = vmatmul.mubr.bf16.gmra.mrb[0].mxu0 %v3407
    %v3797 = vpop.f32.mrb[0].mxu0
    %v3798 = vadd.f32 %v3446, %v3797
    %v3799 = vpop.f32.mrb[0].mxu0
    %v3800 = vadd.f32 %v3450, %v3799
    %v3801 = vpop.f32.mrb[0].mxu0
    %v3802 = vadd.f32 %v3446, %v3801
    %v3803 = vpop.f32.mrb[0].mxu0
    %v3804 = vadd.f32 %v3450, %v3803
    %3805 = vdwg.mxu0
    %v3806 = vsub.f32 0.0, %v3648
    %v3807 = vsub.f32 0.0, %v3650
    %v3808 = vsub.f32 0.0, %v3652
    %v3809 = vsub.f32 0.0, %v3654
    %v3810 = vsub.f32 0.0, %v3658
    %v3811 = vsub.f32 0.0, %v3660
    %v3812 = vsub.f32 0.0, %v3662
    %v3813 = vsub.f32 0.0, %v3664
    %v3814 = vsub.f32 0.0, %v3668
    %v3815 = vsub.f32 0.0, %v3670
    %v3816 = vsub.f32 0.0, %v3672
    %v3817 = vsub.f32 0.0, %v3674
    %v3818 = vsub.f32 0.0, %v3678
    %v3819 = vsub.f32 0.0, %v3680
    %v3820 = vsub.f32 0.0, %v3682
    %v3821 = vsub.f32 0.0, %v3684
    %v3822 = vsub.f32 0.0, %v3688
    %v3823 = vsub.f32 0.0, %v3690
    %v3824 = vsub.f32 0.0, %v3692
    %v3825 = vsub.f32 0.0, %v3694
    %v3826 = vsub.f32 0.0, %v3698
    %v3827 = vsub.f32 0.0, %v3700
    %v3828 = vsub.f32 0.0, %v3702
    %v3829 = vsub.f32 0.0, %v3704
    %v3830 = vsub.f32 0.0, %v3708
    %v3831 = vsub.f32 0.0, %v3710
    %v3832 = vsub.f32 0.0, %v3712
    %v3833 = vsub.f32 0.0, %v3714
    %v3834 = vsub.f32 0.0, %v3718
    %v3835 = vsub.f32 0.0, %v3720
    %v3836 = vsub.f32 0.0, %v3722
    %v3837 = vsub.f32 0.0, %v3724
    %v3838 = vsub.f32 0.0, %v3728
    %v3839 = vsub.f32 0.0, %v3730
    %v3840 = vsub.f32 0.0, %v3732
    %v3841 = vsub.f32 0.0, %v3734
    %v3842 = vsub.f32 0.0, %v3738
    %v3843 = vsub.f32 0.0, %v3740
    %v3844 = vsub.f32 0.0, %v3742
    %v3845 = vsub.f32 0.0, %v3744
    %v3846 = vsub.f32 0.0, %v3748
    %v3847 = vsub.f32 0.0, %v3750
    %v3848 = vsub.f32 0.0, %v3752
    %v3849 = vsub.f32 0.0, %v3754
    %v3850 = vsub.f32 0.0, %v3758
    %v3851 = vsub.f32 0.0, %v3760
    %v3852 = vsub.f32 0.0, %v3762
    %v3853 = vsub.f32 0.0, %v3764
    %v3854 = vsub.f32 0.0, %v3768
    %v3855 = vsub.f32 0.0, %v3770
    %v3856 = vsub.f32 0.0, %v3772
    %v3857 = vsub.f32 0.0, %v3774
    %v3858 = vsub.f32 0.0, %v3778
    %v3859 = vsub.f32 0.0, %v3780
    %v3860 = vsub.f32 0.0, %v3782
    %v3861 = vsub.f32 0.0, %v3784
    %v3862 = vsub.f32 0.0, %v3788
    %v3863 = vsub.f32 0.0, %v3790
    %v3864 = vsub.f32 0.0, %v3792
    %v3865 = vsub.f32 0.0, %v3794
    %v3866 = vsub.f32 0.0, %v3798
    %v3867 = vsub.f32 0.0, %v3800
    %v3868 = vsub.f32 0.0, %v3802
    %v3869 = vsub.f32 0.0, %v3804
    %v3870 = vmul.f32 %v3806, 1.442695
    %v3871 = vpow.pop %v3870
    %v3872 = vmul.f32 %v3807, 1.442695
    %v3873 = vpow.pop %v3872
    %v3874 = vmul.f32 %v3808, 1.442695
    %v3875 = vpow.pop %v3874
    %v3876 = vmul.f32 %v3809, 1.442695
    %v3877 = vpow.pop %v3876
    %v3878 = vmul.f32 %v3810, 1.442695
    %v3879 = vpow.pop %v3878
    %v3880 = vmul.f32 %v3811, 1.442695
    %v3881 = vpow.pop %v3880
    %v3882 = vmul.f32 %v3812, 1.442695
    %v3883 = vpow.pop %v3882
    %v3884 = vmul.f32 %v3813, 1.442695
    %v3885 = vpow.pop %v3884
    %v3886 = vmul.f32 %v3814, 1.442695
    %v3887 = vpow.pop %v3886
    %v3888 = vmul.f32 %v3815, 1.442695
    %v3889 = vpow.pop %v3888
    %v3890 = vmul.f32 %v3816, 1.442695
    %v3891 = vpow.pop %v3890
    %v3892 = vmul.f32 %v3817, 1.442695
    %v3893 = vpow.pop %v3892
    %v3894 = vmul.f32 %v3818, 1.442695
    %v3895 = vpow.pop %v3894
    %v3896 = vmul.f32 %v3819, 1.442695
    %v3897 = vpow.pop %v3896
    %v3898 = vmul.f32 %v3820, 1.442695
    %v3899 = vpow.pop %v3898
    %v3900 = vmul.f32 %v3821, 1.442695
    %v3901 = vpow.pop %v3900
    %v3902 = vmul.f32 %v3822, 1.442695
    %v3903 = vpow.pop %v3902
    %v3904 = vmul.f32 %v3823, 1.442695
    %v3905 = vpow.pop %v3904
    %v3906 = vmul.f32 %v3824, 1.442695
    %v3907 = vpow.pop %v3906
    %v3908 = vmul.f32 %v3825, 1.442695
    %v3909 = vpow.pop %v3908
    %v3910 = vmul.f32 %v3826, 1.442695
    %v3911 = vpow.pop %v3910
    %v3912 = vmul.f32 %v3827, 1.442695
    %v3913 = vpow.pop %v3912
    %v3914 = vmul.f32 %v3828, 1.442695
    %v3915 = vpow.pop %v3914
    %v3916 = vmul.f32 %v3829, 1.442695
    %v3917 = vpow.pop %v3916
    %v3918 = vmul.f32 %v3830, 1.442695
    %v3919 = vpow.pop %v3918
    %v3920 = vmul.f32 %v3831, 1.442695
    %v3921 = vpow.pop %v3920
    %v3922 = vmul.f32 %v3832, 1.442695
    %v3923 = vpow.pop %v3922
    %v3924 = vmul.f32 %v3833, 1.442695
    %v3925 = vpow.pop %v3924
    %v3926 = vmul.f32 %v3834, 1.442695
    %v3927 = vpow.pop %v3926
    %v3928 = vmul.f32 %v3835, 1.442695
    %v3929 = vpow.pop %v3928
    %v3930 = vmul.f32 %v3836, 1.442695
    %v3931 = vpow.pop %v3930
    %v3932 = vmul.f32 %v3837, 1.442695
    %v3933 = vpow.pop %v3932
    %v3934 = vmul.f32 %v3838, 1.442695
    %v3935 = vpow.pop %v3934
    %v3936 = vmul.f32 %v3839, 1.442695
    %v3937 = vpow.pop %v3936
    %v3938 = vmul.f32 %v3840, 1.442695
    %v3939 = vpow.pop %v3938
    %v3940 = vmul.f32 %v3841, 1.442695
    %v3941 = vpow.pop %v3940
    %v3942 = vmul.f32 %v3842, 1.442695
    %v3943 = vpow.pop %v3942
    %v3944 = vmul.f32 %v3843, 1.442695
    %v3945 = vpow.pop %v3944
    %v3946 = vmul.f32 %v3844, 1.442695
    %v3947 = vpow.pop %v3946
    %v3948 = vmul.f32 %v3845, 1.442695
    %v3949 = vpow.pop %v3948
    %v3950 = vmul.f32 %v3846, 1.442695
    %v3951 = vpow.pop %v3950
    %v3952 = vmul.f32 %v3847, 1.442695
    %v3953 = vpow.pop %v3952
    %v3954 = vmul.f32 %v3848, 1.442695
    %v3955 = vpow.pop %v3954
    %v3956 = vmul.f32 %v3849, 1.442695
    %v3957 = vpow.pop %v3956
    %v3958 = vmul.f32 %v3850, 1.442695
    %v3959 = vpow.pop %v3958
    %v3960 = vmul.f32 %v3851, 1.442695
    %v3961 = vpow.pop %v3960
    %v3962 = vmul.f32 %v3852, 1.442695
    %v3963 = vpow.pop %v3962
    %v3964 = vmul.f32 %v3853, 1.442695
    %v3965 = vpow.pop %v3964
    %v3966 = vmul.f32 %v3854, 1.442695
    %v3967 = vpow.pop %v3966
    %v3968 = vmul.f32 %v3855, 1.442695
    %v3969 = vpow.pop %v3968
    %v3970 = vmul.f32 %v3856, 1.442695
    %v3971 = vpow.pop %v3970
    %v3972 = vmul.f32 %v3857, 1.442695
    %v3973 = vpow.pop %v3972
    %v3974 = vmul.f32 %v3858, 1.442695
    %v3975 = vpow.pop %v3974
    %v3976 = vmul.f32 %v3859, 1.442695
    %v3977 = vpow.pop %v3976
    %v3978 = vmul.f32 %v3860, 1.442695
    %v3979 = vpow.pop %v3978
    %v3980 = vmul.f32 %v3861, 1.442695
    %v3981 = vpow.pop %v3980
    %v3982 = vmul.f32 %v3862, 1.442695
    %v3983 = vpow.pop %v3982
    %v3984 = vmul.f32 %v3863, 1.442695
    %v3985 = vpow.pop %v3984
    %v3986 = vmul.f32 %v3864, 1.442695
    %v3987 = vpow.pop %v3986
    %v3988 = vmul.f32 %v3865, 1.442695
    %v3989 = vpow.pop %v3988
    %v3990 = vmul.f32 %v3866, 1.442695
    %v3991 = vpow.pop %v3990
    %v3992 = vmul.f32 %v3867, 1.442695
    %v3993 = vpow.pop %v3992
    %v3994 = vmul.f32 %v3868, 1.442695
    %v3995 = vpow.pop %v3994
    %v3996 = vmul.f32 %v3869, 1.442695
    %v3997 = vpow.pop %v3996
    %v3998 = vadd.f32 %v3871, 1.0
    %v3999 = vadd.f32 %v3873, 1.0
    %v4000 = vadd.f32 %v3875, 1.0
    %v4001 = vadd.f32 %v3877, 1.0
    %v4002 = vadd.f32 %v3879, 1.0
    %v4003 = vadd.f32 %v3881, 1.0
    %v4004 = vadd.f32 %v3883, 1.0
    %v4005 = vadd.f32 %v3885, 1.0
    %v4006 = vadd.f32 %v3887, 1.0
    %v4007 = vadd.f32 %v3889, 1.0
    %v4008 = vadd.f32 %v3891, 1.0
    %v4009 = vadd.f32 %v3893, 1.0
    %v4010 = vadd.f32 %v3895, 1.0
    %v4011 = vadd.f32 %v3897, 1.0
    %v4012 = vadd.f32 %v3899, 1.0
    %v4013 = vadd.f32 %v3901, 1.0
    %v4014 = vadd.f32 %v3903, 1.0
    %v4015 = vadd.f32 %v3905, 1.0
    %v4016 = vadd.f32 %v3907, 1.0
    %v4017 = vadd.f32 %v3909, 1.0
    %v4018 = vadd.f32 %v3911, 1.0
    %v4019 = vadd.f32 %v3913, 1.0
    %v4020 = vadd.f32 %v3915, 1.0
    %v4021 = vadd.f32 %v3917, 1.0
    %v4022 = vadd.f32 %v3919, 1.0
    %v4023 = vadd.f32 %v3921, 1.0
    %v4024 = vadd.f32 %v3923, 1.0
    %v4025 = vadd.f32 %v3925, 1.0
    %v4026 = vadd.f32 %v3927, 1.0
    %v4027 = vadd.f32 %v3929, 1.0
    %v4028 = vadd.f32 %v3931, 1.0
    %v4029 = vadd.f32 %v3933, 1.0
    %v4030 = vadd.f32 %v3935, 1.0
    %v4031 = vadd.f32 %v3937, 1.0
    %v4032 = vadd.f32 %v3939, 1.0
    %v4033 = vadd.f32 %v3941, 1.0
    %v4034 = vadd.f32 %v3943, 1.0
    %v4035 = vadd.f32 %v3945, 1.0
    %v4036 = vadd.f32 %v3947, 1.0
    %v4037 = vadd.f32 %v3949, 1.0
    %v4038 = vadd.f32 %v3951, 1.0
    %v4039 = vadd.f32 %v3953, 1.0
    %v4040 = vadd.f32 %v3955, 1.0
    %v4041 = vadd.f32 %v3957, 1.0
    %v4042 = vadd.f32 %v3959, 1.0
    %v4043 = vadd.f32 %v3961, 1.0
    %v4044 = vadd.f32 %v3963, 1.0
    %v4045 = vadd.f32 %v3965, 1.0
    %v4046 = vadd.f32 %v3967, 1.0
    %v4047 = vadd.f32 %v3969, 1.0
    %v4048 = vadd.f32 %v3971, 1.0
    %v4049 = vadd.f32 %v3973, 1.0
    %v4050 = vadd.f32 %v3975, 1.0
    %v4051 = vadd.f32 %v3977, 1.0
    %v4052 = vadd.f32 %v3979, 1.0
    %v4053 = vadd.f32 %v3981, 1.0
    %v4054 = vadd.f32 %v3983, 1.0
    %v4055 = vadd.f32 %v3985, 1.0
    %v4056 = vadd.f32 %v3987, 1.0
    %v4057 = vadd.f32 %v3989, 1.0
    %v4058 = vadd.f32 %v3991, 1.0
    %v4059 = vadd.f32 %v3993, 1.0
    %v4060 = vadd.f32 %v3995, 1.0
    %v4061 = vadd.f32 %v3997, 1.0
    %v4062 = vrcp.pop %v3998
    %v4063 = vrcp.pop %v3999
    %v4064 = vrcp.pop %v4000
    %v4065 = vrcp.pop %v4001
    %v4066 = vrcp.pop %v4002
    %v4067 = vrcp.pop %v4003
    %v4068 = vrcp.pop %v4004
    %v4069 = vrcp.pop %v4005
    %v4070 = vrcp.pop %v4006
    %v4071 = vrcp.pop %v4007
    %v4072 = vrcp.pop %v4008
    %v4073 = vrcp.pop %v4009
    %v4074 = vrcp.pop %v4010
    %v4075 = vrcp.pop %v4011
    %v4076 = vrcp.pop %v4012
    %v4077 = vrcp.pop %v4013
    %v4078 = vrcp.pop %v4014
    %v4079 = vrcp.pop %v4015
    %v4080 = vrcp.pop %v4016
    %v4081 = vrcp.pop %v4017
    %v4082 = vrcp.pop %v4018
    %v4083 = vrcp.pop %v4019
    %v4084 = vrcp.pop %v4020
    %v4085 = vrcp.pop %v4021
    %v4086 = vrcp.pop %v4022
    %v4087 = vrcp.pop %v4023
    %v4088 = vrcp.pop %v4024
    %v4089 = vrcp.pop %v4025
    %v4090 = vrcp.pop %v4026
    %v4091 = vrcp.pop %v4027
    %v4092 = vrcp.pop %v4028
    %v4093 = vrcp.pop %v4029
    %v4094 = vrcp.pop %v4030
    %v4095 = vrcp.pop %v4031
    %v4096 = vrcp.pop %v4032
    %v4097 = vrcp.pop %v4033
    %v4098 = vrcp.pop %v4034
    %v4099 = vrcp.pop %v4035
    %v4100 = vrcp.pop %v4036
    %v4101 = vrcp.pop %v4037
    %v4102 = vrcp.pop %v4038
    %v4103 = vrcp.pop %v4039
    %v4104 = vrcp.pop %v4040
    %v4105 = vrcp.pop %v4041
    %v4106 = vrcp.pop %v4042
    %v4107 = vrcp.pop %v4043
    %v4108 = vrcp.pop %v4044
    %v4109 = vrcp.pop %v4045
    %v4110 = vrcp.pop %v4046
    %v4111 = vrcp.pop %v4047
    %v4112 = vrcp.pop %v4048
    %v4113 = vrcp.pop %v4049
    %v4114 = vrcp.pop %v4050
    %v4115 = vrcp.pop %v4051
    %v4116 = vrcp.pop %v4052
    %v4117 = vrcp.pop %v4053
    %v4118 = vrcp.pop %v4054
    %v4119 = vrcp.pop %v4055
    %v4120 = vrcp.pop %v4056
    %v4121 = vrcp.pop %v4057
    %v4122 = vrcp.pop %v4058
    %v4123 = vrcp.pop %v4059
    %v4124 = vrcp.pop %v4060
    %v4125 = vrcp.pop %v4061
    %v4126 = vpack.c.bf16 %v4064, %v4062
    %v4127 = vpack.c.bf16 %v4065, %v4063
    %v4128 = vpack.c.bf16 %v4068, %v4066
    %v4129 = vpack.c.bf16 %v4069, %v4067
    %v4130 = vpack.c.bf16 %v4072, %v4070
    %v4131 = vpack.c.bf16 %v4073, %v4071
    %v4132 = vpack.c.bf16 %v4076, %v4074
    %v4133 = vpack.c.bf16 %v4077, %v4075
    %v4134 = vpack.c.bf16 %v4080, %v4078
    %v4135 = vpack.c.bf16 %v4081, %v4079
    %v4136 = vpack.c.bf16 %v4084, %v4082
    %v4137 = vpack.c.bf16 %v4085, %v4083
    %v4138 = vpack.c.bf16 %v4088, %v4086
    %v4139 = vpack.c.bf16 %v4089, %v4087
    %v4140 = vpack.c.bf16 %v4092, %v4090
    %v4141 = vpack.c.bf16 %v4093, %v4091
    %v4142 = vpack.c.bf16 %v4096, %v4094
    %v4143 = vpack.c.bf16 %v4097, %v4095
    %v4144 = vpack.c.bf16 %v4100, %v4098
    %v4145 = vpack.c.bf16 %v4101, %v4099
    %v4146 = vpack.c.bf16 %v4104, %v4102
    %v4147 = vpack.c.bf16 %v4105, %v4103
    %v4148 = vpack.c.bf16 %v4108, %v4106
    %v4149 = vpack.c.bf16 %v4109, %v4107
    %v4150 = vpack.c.bf16 %v4112, %v4110
    %v4151 = vpack.c.bf16 %v4113, %v4111
    %v4152 = vpack.c.bf16 %v4116, %v4114
    %v4153 = vpack.c.bf16 %v4117, %v4115
    %v4154 = vpack.c.bf16 %v4120, %v4118
    %v4155 = vpack.c.bf16 %v4121, %v4119
    %v4156 = vpack.c.bf16 %v4124, %v4122
    %v4157 = vpack.c.bf16 %v4125, %v4123
    %v4158 = vld [vmem:[#allocation14] sm:$0xf]
    %v4159 = vld [vmem:[#allocation14 + $0x4] sm:$0xf]
    %v4160 = vld [vmem:[#allocation14 + $0x8] sm:$0xf]
    %v4161 = vld [vmem:[#allocation14 + $0xc] sm:$0xf]
    %v4162 = vld [vmem:[#allocation14 + $0x10] sm:$0xf]
    %v4163 = vld [vmem:[#allocation14 + $0x14] sm:$0xf]
    %v4164 = vld [vmem:[#allocation14 + $0x18] sm:$0xf]
    %v4165 = vld [vmem:[#allocation14 + $0x1c] sm:$0xf]
    %v4166 = vld [vmem:[#allocation14 + $0x20] sm:$0xf]
    %v4167 = vld [vmem:[#allocation14 + $0x24] sm:$0xf]
    %v4168 = vld [vmem:[#allocation14 + $0x28] sm:$0xf]
    %v4169 = vld [vmem:[#allocation14 + $0x2c] sm:$0xf]
    %v4170 = vld [vmem:[#allocation14 + $0x30] sm:$0xf]
    %v4171 = vld [vmem:[#allocation14 + $0x34] sm:$0xf]
    %v4172 = vld [vmem:[#allocation14 + $0x38] sm:$0xf]
    %v4173 = vld [vmem:[#allocation14 + $0x3c] sm:$0xf]
    %v4174 = vld [vmem:[#allocation14 + $0x40] sm:$0xf]
    %v4175 = vld [vmem:[#allocation14 + $0x44] sm:$0xf]
    %v4176 = vld [vmem:[#allocation14 + $0x48] sm:$0xf]
    %v4177 = vld [vmem:[#allocation14 + $0x4c] sm:$0xf]
    %v4178 = vld [vmem:[#allocation14 + $0x50] sm:$0xf]
    %v4179 = vld [vmem:[#allocation14 + $0x54] sm:$0xf]
    %v4180 = vld [vmem:[#allocation14 + $0x58] sm:$0xf]
    %v4181 = vld [vmem:[#allocation14 + $0x5c] sm:$0xf]
    %v4182 = vld [vmem:[#allocation14 + $0x60] sm:$0xf]
    %v4183 = vld [vmem:[#allocation14 + $0x64] sm:$0xf]
    %v4184 = vld [vmem:[#allocation14 + $0x68] sm:$0xf]
    %v4185 = vld [vmem:[#allocation14 + $0x6c] sm:$0xf]
    %v4186 = vld [vmem:[#allocation14 + $0x70] sm:$0xf]
    %v4187 = vld [vmem:[#allocation14 + $0x74] sm:$0xf]
    %v4188 = vld [vmem:[#allocation14 + $0x78] sm:$0xf]
    %v4189 = vld [vmem:[#allocation14 + $0x7c] sm:$0xf]
    %v4190 = vld [vmem:[#allocation16] sm:$0x1]
    %v4192 = vlaneseq
    %v4193 = vshrl.u32 %v4192, 7
    %v4194 = vsub.s32 0, %v4193
    %v4195 = vrot.slane %v4190, %v4194
    %v4229 = vunpack.c.l.b16 %v4158
    %v4230 = vunpack.c.l.b16 %v4159
    %v4231 = vunpack.c.l.b16 %v4160
    %v4232 = vunpack.c.l.b16 %v4161
    %v4233 = vunpack.c.l.b16 %v4162
    %v4234 = vunpack.c.l.b16 %v4163
    %v4235 = vunpack.c.l.b16 %v4164
    %v4236 = vunpack.c.l.b16 %v4165
    %v4237 = vunpack.c.l.b16 %v4166
    %v4238 = vunpack.c.l.b16 %v4167
    %v4239 = vunpack.c.l.b16 %v4168
    %v4240 = vunpack.c.l.b16 %v4169
    %v4241 = vunpack.c.l.b16 %v4170
    %v4242 = vunpack.c.l.b16 %v4171
    %v4243 = vunpack.c.l.b16 %v4172
    %v4244 = vunpack.c.l.b16 %v4173
    %v4245 = vunpack.c.l.b16 %v4174
    %v4246 = vunpack.c.l.b16 %v4175
    %v4247 = vunpack.c.l.b16 %v4176
    %v4248 = vunpack.c.l.b16 %v4177
    %v4249 = vunpack.c.l.b16 %v4178
    %v4250 = vunpack.c.l.b16 %v4179
    %v4251 = vunpack.c.l.b16 %v4180
    %v4252 = vunpack.c.l.b16 %v4181
    %v4253 = vunpack.c.l.b16 %v4182
    %v4254 = vunpack.c.l.b16 %v4183
    %v4255 = vunpack.c.l.b16 %v4184
    %v4256 = vunpack.c.l.b16 %v4185
    %v4257 = vunpack.c.l.b16 %v4186
    %v4258 = vunpack.c.l.b16 %v4187
    %v4259 = vunpack.c.l.b16 %v4188
    %v4260 = vunpack.c.l.b16 %v4189
    %v4261 = vpack.c.b16 %v4230, %v4229
    %v4262 = vpack.c.b16 %v4232, %v4231
    %v4263 = vpack.c.b16 %v4234, %v4233
    %v4264 = vpack.c.b16 %v4236, %v4235
    %v4265 = vpack.c.b16 %v4238, %v4237
    %v4266 = vpack.c.b16 %v4240, %v4239
    %v4267 = vpack.c.b16 %v4242, %v4241
    %v4268 = vpack.c.b16 %v4244, %v4243
    %v4269 = vpack.c.b16 %v4246, %v4245
    %v4270 = vpack.c.b16 %v4248, %v4247
    %v4271 = vpack.c.b16 %v4250, %v4249
    %v4272 = vpack.c.b16 %v4252, %v4251
    %v4273 = vpack.c.b16 %v4254, %v4253
    %v4274 = vpack.c.b16 %v4256, %v4255
    %v4275 = vpack.c.b16 %v4258, %v4257
    %v4276 = vpack.c.b16 %v4260, %v4259
    %4293 = vmatprep.subr.bf16.mxu0 0
    %4294 = vmatpush1.bf16.msra.mxu0 %v4261
    %4295 = vmatprep.subr.bf16.mxu0 0
    %4296 = vmatpush1.bf16.msra.mxu0 %v4262
    %4297 = vmatprep.subr.bf16.mxu0 0
    %4298 = vmatpush1.bf16.msra.mxu0 %v4263
    %4299 = vmatprep.subr.bf16.mxu0 0
    %4300 = vmatpush1.bf16.msra.mxu0 %v4264
    %4301 = vmatprep.subr.bf16.mxu0 0
    %4302 = vmatpush1.bf16.msra.mxu0 %v4265
    %4303 = vmatprep.subr.bf16.mxu0 0
    %4304 = vmatpush1.bf16.msra.mxu0 %v4266
    %4305 = vmatprep.subr.bf16.mxu0 0
    %4306 = vmatpush1.bf16.msra.mxu0 %v4267
    %4307 = vmatprep.subr.bf16.mxu0 0
    %4308 = vmatpush1.bf16.msra.mxu0 %v4268
    %4309 = vmatprep.subr.bf16.mxu0 0
    %4310 = vmatpush1.bf16.msra.mxu0 %v4269
    %4311 = vmatprep.subr.bf16.mxu0 0
    %4312 = vmatpush1.bf16.msra.mxu0 %v4270
    %4313 = vmatprep.subr.bf16.mxu0 0
    %4314 = vmatpush1.bf16.msra.mxu0 %v4271
    %4315 = vmatprep.subr.bf16.mxu0 0
    %4316 = vmatpush1.bf16.msra.mxu0 %v4272
    %4317 = vmatprep.subr.bf16.mxu0 0
    %4318 = vmatpush1.bf16.msra.mxu0 %v4273
    %4319 = vmatprep.subr.bf16.mxu0 0
    %4320 = vmatpush1.bf16.msra.mxu0 %v4274
    %4321 = vmatprep.subr.bf16.mxu0 0
    %4322 = vmatpush1.bf16.msra.mxu0 %v4275
    %4323 = vmatprep.subr.bf16.mxu0 0
    %4324 = vmatpush1.bf16.msra.mxu0 %v4276
    %4325 = vmatprep.mubr.bf16.mxu0 %v4127
    %4326 = vmatmul.mubr.bf16.gmra.mrb[0].mxu0 %v4126
    %v4327 = vpop.f32.mrb[0].mxu0
    %v4328 = vadd.f32 %v4195, %v4327
    %v4329 = vpop.f32.mrb[0].mxu0
    %v4330 = vpop.f32.mrb[0].mxu0
    %v4331 = vadd.f32 %v4195, %v4330
    %v4332 = vpop.f32.mrb[0].mxu0
    %4333 = vmatprep.mubr.bf16.mxu0 %v4129
    %4334 = vmatmul.mubr.bf16.gmra.mrb[0].mxu0 %v4128
    %v4335 = vpop.f32.mrb[0].mxu0
    %v4336 = vadd.f32 %v4195, %v4335
    %v4337 = vpop.f32.mrb[0].mxu0
    %v4338 = vpop.f32.mrb[0].mxu0
    %v4339 = vadd.f32 %v4195, %v4338
    %v4340 = vpop.f32.mrb[0].mxu0
    %4341 = vmatprep.mubr.bf16.mxu0 %v4131
    %4342 = vmatmul.mubr.bf16.gmra.mrb[0].mxu0 %v4130
    %v4343 = vpop.f32.mrb[0].mxu0
    %v4344 = vadd.f32 %v4195, %v4343
    %v4345 = vpop.f32.mrb[0].mxu0
    %v4346 = vpop.f32.mrb[0].mxu0
    %v4347 = vadd.f32 %v4195, %v4346
    %v4348 = vpop.f32.mrb[0].mxu0
    %4349 = vmatprep.mubr.bf16.mxu0 %v4133
    %4350 = vmatmul.mubr.bf16.gmra.mrb[0].mxu0 %v4132
    %v4351 = vpop.f32.mrb[0].mxu0
    %v4352 = vadd.f32 %v4195, %v4351
    %v4353 = vpop.f32.mrb[0].mxu0
    %v4354 = vpop.f32.mrb[0].mxu0
    %v4355 = vadd.f32 %v4195, %v4354
    %v4356 = vpop.f32.mrb[0].mxu0
    %4357 = vmatprep.mubr.bf16.mxu0 %v4135
    %4358 = vmatmul.mubr.bf16.gmra.mrb[0].mxu0 %v4134
    %v4359 = vpop.f32.mrb[0].mxu0
    %v4360 = vadd.f32 %v4195, %v4359
    %v4361 = vpop.f32.mrb[0].mxu0
    %v4362 = vpop.f32.mrb[0].mxu0
    %v4363 = vadd.f32 %v4195, %v4362
    %v4364 = vpop.f32.mrb[0].mxu0
    %4365 = vmatprep.mubr.bf16.mxu0 %v4137
    %4366 = vmatmul.mubr.bf16.gmra.mrb[0].mxu0 %v4136
    %v4367 = vpop.f32.mrb[0].mxu0
    %v4368 = vadd.f32 %v4195, %v4367
    %v4369 = vpop.f32.mrb[0].mxu0
    %v4370 = vpop.f32.mrb[0].mxu0
    %v4371 = vadd.f32 %v4195, %v4370
    %v4372 = vpop.f32.mrb[0].mxu0
    %4373 = vmatprep.mubr.bf16.mxu0 %v4139
    %4374 = vmatmul.mubr.bf16.gmra.mrb[0].mxu0 %v4138
    %v4375 = vpop.f32.mrb[0].mxu0
    %v4376 = vadd.f32 %v4195, %v4375
    %v4377 = vpop.f32.mrb[0].mxu0
    %v4378 = vpop.f32.mrb[0].mxu0
    %v4379 = vadd.f32 %v4195, %v4378
    %v4380 = vpop.f32.mrb[0].mxu0
    %4381 = vmatprep.mubr.bf16.mxu0 %v4141
    %4382 = vmatmul.mubr.bf16.gmra.mrb[0].mxu0 %v4140
    %v4383 = vpop.f32.mrb[0].mxu0
    %v4384 = vadd.f32 %v4195, %v4383
    %v4385 = vpop.f32.mrb[0].mxu0
    %v4386 = vpop.f32.mrb[0].mxu0
    %v4387 = vadd.f32 %v4195, %v4386
    %v4388 = vpop.f32.mrb[0].mxu0
    %4389 = vmatprep.mubr.bf16.mxu0 %v4143
    %4390 = vmatmul.mubr.bf16.gmra.mrb[0].mxu0 %v4142
    %v4391 = vpop.f32.mrb[0].mxu0
    %v4392 = vadd.f32 %v4195, %v4391
    %v4393 = vpop.f32.mrb[0].mxu0
    %v4394 = vpop.f32.mrb[0].mxu0
    %v4395 = vadd.f32 %v4195, %v4394
    %v4396 = vpop.f32.mrb[0].mxu0
    %4397 = vmatprep.mubr.bf16.mxu0 %v4145
    %4398 = vmatmul.mubr.bf16.gmra.mrb[0].mxu0 %v4144
    %v4399 = vpop.f32.mrb[0].mxu0
    %v4400 = vadd.f32 %v4195, %v4399
    %v4401 = vpop.f32.mrb[0].mxu0
    %v4402 = vpop.f32.mrb[0].mxu0
    %v4403 = vadd.f32 %v4195, %v4402
    %v4404 = vpop.f32.mrb[0].mxu0
    %4405 = vmatprep.mubr.bf16.mxu0 %v4147
    %4406 = vmatmul.mubr.bf16.gmra.mrb[0].mxu0 %v4146
    %v4407 = vpop.f32.mrb[0].mxu0
    %v4408 = vadd.f32 %v4195, %v4407
    %v4409 = vpop.f32.mrb[0].mxu0
    %v4410 = vpop.f32.mrb[0].mxu0
    %v4411 = vadd.f32 %v4195, %v4410
    %v4412 = vpop.f32.mrb[0].mxu0
    %4413 = vmatprep.mubr.bf16.mxu0 %v4149
    %4414 = vmatmul.mubr.bf16.gmra.mrb[0].mxu0 %v4148
    %v4415 = vpop.f32.mrb[0].mxu0
    %v4416 = vadd.f32 %v4195, %v4415
    %v4417 = vpop.f32.mrb[0].mxu0
    %v4418 = vpop.f32.mrb[0].mxu0
    %v4419 = vadd.f32 %v4195, %v4418
    %v4420 = vpop.f32.mrb[0].mxu0
    %4421 = vmatprep.mubr.bf16.mxu0 %v4151
    %4422 = vmatmul.mubr.bf16.gmra.mrb[0].mxu0 %v4150
    %v4423 = vpop.f32.mrb[0].mxu0
    %v4424 = vadd.f32 %v4195, %v4423
    %v4425 = vpop.f32.mrb[0].mxu0
    %v4426 = vpop.f32.mrb[0].mxu0
    %v4427 = vadd.f32 %v4195, %v4426
    %v4428 = vpop.f32.mrb[0].mxu0
    %4429 = vmatprep.mubr.bf16.mxu0 %v4153
    %4430 = vmatmul.mubr.bf16.gmra.mrb[0].mxu0 %v4152
    %v4431 = vpop.f32.mrb[0].mxu0
    %v4432 = vadd.f32 %v4195, %v4431
    %v4433 = vpop.f32.mrb[0].mxu0
    %v4434 = vpop.f32.mrb[0].mxu0
    %v4435 = vadd.f32 %v4195, %v4434
    %v4436 = vpop.f32.mrb[0].mxu0
    %4437 = vmatprep.mubr.bf16.mxu0 %v4155
    %4438 = vmatmul.mubr.bf16.gmra.mrb[0].mxu0 %v4154
    %v4439 = vpop.f32.mrb[0].mxu0
    %v4440 = vadd.f32 %v4195, %v4439
    %v4441 = vpop.f32.mrb[0].mxu0
    %v4442 = vpop.f32.mrb[0].mxu0
    %v4443 = vadd.f32 %v4195, %v4442
    %v4444 = vpop.f32.mrb[0].mxu0
    %4445 = vmatprep.mubr.bf16.mxu0 %v4157
    %4446 = vmatmul.mubr.bf16.gmra.mrb[0].mxu0 %v4156
    %v4447 = vpop.f32.mrb[0].mxu0
    %v4448 = vadd.f32 %v4195, %v4447
    %v4449 = vpop.f32.mrb[0].mxu0
    %v4450 = vpop.f32.mrb[0].mxu0
    %v4451 = vadd.f32 %v4195, %v4450
    %v4452 = vpop.f32.mrb[0].mxu0
    %4453 = vdwg.mxu0
    %4454 = vst [vmem:[#allocation17] sm:$0xff] %v4328
    %4455 = vst [vmem:[#allocation17 + $0x8] sm:$0xff] %v4331
    %4456 = vst [vmem:[#allocation17 + $0x10] sm:$0xff] %v4336
    %4457 = vst [vmem:[#allocation17 + $0x18] sm:$0xff] %v4339
    %4458 = vst [vmem:[#allocation17 + $0x20] sm:$0xff] %v4344
    %4459 = vst [vmem:[#allocation17 + $0x28] sm:$0xff] %v4347
    %4460 = vst [vmem:[#allocation17 + $0x30] sm:$0xff] %v4352
    %4461 = vst [vmem:[#allocation17 + $0x38] sm:$0xff] %v4355
    %4462 = vst [vmem:[#allocation17 + $0x40] sm:$0xff] %v4360
    %4463 = vst [vmem:[#allocation17 + $0x48] sm:$0xff] %v4363
    %4464 = vst [vmem:[#allocation17 + $0x50] sm:$0xff] %v4368
    %4465 = vst [vmem:[#allocation17 + $0x58] sm:$0xff] %v4371
    %4466 = vst [vmem:[#allocation17 + $0x60] sm:$0xff] %v4376
    %4467 = vst [vmem:[#allocation17 + $0x68] sm:$0xff] %v4379
    %4468 = vst [vmem:[#allocation17 + $0x70] sm:$0xff] %v4384
    %4469 = vst [vmem:[#allocation17 + $0x78] sm:$0xff] %v4387
    %4470 = vst [vmem:[#allocation17 + $0x80] sm:$0xff] %v4392
    %4471 = vst [vmem:[#allocation17 + $0x88] sm:$0xff] %v4395
    %4472 = vst [vmem:[#allocation17 + $0x90] sm:$0xff] %v4400
    %4473 = vst [vmem:[#allocation17 + $0x98] sm:$0xff] %v4403
    %4474 = vst [vmem:[#allocation17 + $0xa0] sm:$0xff] %v4408
    %4475 = vst [vmem:[#allocation17 + $0xa8] sm:$0xff] %v4411
    %4476 = vst [vmem:[#allocation17 + $0xb0] sm:$0xff] %v4416
    %4477 = vst [vmem:[#allocation17 + $0xb8] sm:$0xff] %v4419
    %4478 = vst [vmem:[#allocation17 + $0xc0] sm:$0xff] %v4424
    %4479 = vst [vmem:[#allocation17 + $0xc8] sm:$0xff] %v4427
    %4480 = vst [vmem:[#allocation17 + $0xd0] sm:$0xff] %v4432
    %4481 = vst [vmem:[#allocation17 + $0xd8] sm:$0xff] %v4435
    %4482 = vst [vmem:[#allocation17 + $0xe0] sm:$0xff] %v4440
    %4483 = vst [vmem:[#allocation17 + $0xe8] sm:$0xff] %v4443
    %4484 = vst [vmem:[#allocation17 + $0xf0] sm:$0xff] %v4448
    %4485 = vst [vmem:[#allocation17 + $0xf8] sm:$0xff] %v4451
    // Predicated region
    $region74: #{tpu_custom_call.1} parent=1 // pred_check
      _
    $region75: #{tpu_custom_call.1} parent=1 // pred_check_branch
      %4487 = sbr.rel (0) target = $region77
    $region76: #{tpu_custom_call.1} parent=1 // pred_region
      %s4489 = ssub.s32 4096, 4096
      %4490 = vsyncadd [#allocation4], %s4489
      %s4491 = sshll.u32 [#allocation17], 4
      %s4492 = int_to_ptr.vmem [resolvable:$true] %s4491
      %4497 = dma.vmem_to_hbm [thread:$0]  %s4492, 4096, %s9, [#allocation4], 128, 128, 8
    $region77: #{tpu_custom_call.1} parent=1 // pred_fallthru
      _
    // Predicated region
    $region78: #{tpu_custom_call.1} parent=1 // pred_check
      _
    $region79: #{tpu_custom_call.1} parent=1 // pred_check_branch
      %4499 = sbr.rel (0) target = $region81
    $region80: #{tpu_custom_call.1} parent=1 // pred_region
      %4500 = dma.done [#allocation4], 4096
    $region81: #{tpu_custom_call.1} parent=1 // pred_fallthru
      _
    %4501 = vsyncpa [#allocation3], 1
    %4502 = vsyncpa [#allocation6], 1
    %4503 = vsyncpa [#allocation9], 1
    %4504 = vsyncpa [#allocation12], 1
    %4505 = vsyncpa [#allocation15], 1
    %4506 = vsyncpa [#allocation4], 1

</llo_original>
